<compile_context>
chip_gen: v7x
topology: tpu7x:2x2x1
jax: 0.10.0
libtpu: 0.0.40
codegen_flags: <defaults>
</compile_context>

<pallas_src>
import math
import jax
import jax.numpy as jnp
from jax.experimental import pallas as pl
from jax.experimental.pallas import tpu as pltpu

_LANES = 128
_TAIL = 8  # rows per block the kernel skips for the w>=1 taps (requires window-1 <= 8)


def _round_up(x, m):
    return (x + m - 1) // m * m


def _pick_block_batch(B, P, target_rows=1024):
    """TB heuristic: TB*P ~= target_rows (amortize ~0.35us/step grid overhead and feed
    the MXU's M dimension), TB a multiple of 8, and >= 2 grid steps when the batch
    allows so the 'parallel' grid axis can shard across v7x's two TensorCores."""
    tb = max(8, (target_rows // P) // 8 * 8)
    tb = min(tb, _round_up(B, 8))
    if B > 8:
        tb = min(tb, _round_up((B + 1) // 2, 8))
    return max(tb, 8)


def make_pcnn_kernel(window, bounds):
    """bounds = (0, b1, b2, L): piecewise max-pool boundaries (compile-time ints)."""

    def kernel(q_ref, wc_ref, bias_ref, wo_ref, out_ref):
        # q_ref:    (TB*P, d)       bf16  TB sentences at pitch P (conv zero-pad baked in)
        # wc_ref:   (window, d, C)  bf16  conv weight
        # bias_ref: (1, C)          f32   conv bias
        # wo_ref:   (3, C, R_pad)   bf16  output weight, one slab per pooling piece
        # out_ref:  (TB, R_pad)     f32   lane-dense output
        C = wc_ref.shape[2]
        TB, R_pad = out_ref.shape
        M = q_ref.shape[0]            # = TB * P
        P = M // TB
        Mc = M - _TAIL                # rows that receive all `window` taps (8-aligned)

        # --- 1-D conv as window-shifted (Mc, d) @ (d, C) matmuls, f32 accumulation ---
        # All reads stay inside the block: max row index = (window-1) + Mc - 1 <= M - 1.
        # The skipped tail rows [Mc, M) are the last sentence's rows >= L (P >= L + 8),
        # which the pooling masks below never select.
        acc = jnp.dot(q_ref[pl.ds(0, Mc), :], wc_ref[0],
                      preferred_element_type=jnp.float32)
        for w in range(1, window):    # window is small & static -> unrolled
            acc = acc + jnp.dot(q_ref[pl.ds(w, Mc), :], wc_ref[w],
                                preferred_element_type=jnp.float32)
        c3 = jnp.concatenate(
            [acc, jnp.zeros((_TAIL, C), jnp.float32)], axis=0).reshape(TB, P, C)

        # --- piecewise masked max pooling + bias + tanh + per-piece projection ---
        # Boundaries are compile-time constants; the iota is (1, P, 1) so mask cost is
        # independent of TB.  Bias is added after the max (max(c) + b == max(c + b)),
        # and each pooled piece hits its own (C, R_pad) slab (no 3C lane concat).
        pos = jax.lax.broadcasted_iota(jnp.int32, (1, P, 1), 1)
        bias = bias_ref[...]                                   # (1, C) f32
        o = jnp.zeros((TB, R_pad), jnp.float32)
        for s in range(3):
            m = (pos >= bounds[s]) & (pos < bounds[s + 1])
            piece = jnp.max(jnp.where(m, c3, jnp.float32(-1e30)), axis=1)   # (TB, C)
            g = jnp.tanh(piece + bias)                                      # f32 VPU/EUP
            o = o + jnp.dot(g.astype(jnp.bfloat16), wo_ref[s],
                            preferred_element_type=jnp.float32)
        # TODO(synk): dropout (b_drop=True, training mode) is not implemented in-kernel;
        #             this matches eval / b_drop=False semantics.
        out_ref[...] = o

    return kernel


def prepare_params(params, window):
    """One-time parameter preprocessing (keep this outside the per-step jit):
    bf16 embedding tables (halves gather HBM traffic), conv weight as (window, d, C),
    output weight as a lane-dense (3, C, R_pad) slab per pooling piece."""
    dim = params["word_emb"].shape[1]
    d = dim + params["pos1_emb"].shape[1] + params["pos2_emb"].shape[1]
    C = params["conv_b"].shape[0]
    R = params["out_w"].shape[0]
    R_pad = _round_up(R, _LANES)
    wc = jnp.transpose(params["conv_w"].reshape(C, window, d),
                       (1, 2, 0)).astype(jnp.bfloat16)
    bias = params["conv_b"].reshape(1, C).astype(jnp.float32)
    wo = jnp.pad(params["out_w"].T.astype(jnp.float32), ((0, 0), (0, R_pad - R)))
    wo3 = wo.reshape(3, C, R_pad).astype(jnp.bfloat16)
    return {
        "word_emb": params["word_emb"].astype(jnp.bfloat16),
        "pos1_emb": params["pos1_emb"].astype(jnp.bfloat16),
        "pos2_emb": params["pos2_emb"].astype(jnp.bfloat16),
        "wc": wc,
        "bias": bias,
        "wo3": wo3,
    }


def pcnn_forward(word, pos1, pos2, piece_wise, prep, window, relation_total,
                 *, block_batch=None):
    """Embedding gathers + pitched layout (single HBM pass for q) + the Pallas kernel."""
    B, S = word.shape
    pad_len = window - 1
    L = S + pad_len
    assert pad_len <= _TAIL, "kernel drops an 8-row tail per block; needs window <= 9"

    dim = prep["word_emb"].shape[1]
    wpe1 = prep["pos1_emb"].shape[1]
    d = prep["wc"].shape[1]
    C = prep["wc"].shape[2]
    R_pad = prep["wo3"].shape[2]
    assert dim + wpe1 + prep["pos2_emb"].shape[1] == d

    # Per-sentence row pitch: [0,pad_len) zeros | [pad_len,pad_len+S) tokens | zeros.
    #   * P >= S + 2*pad_len : every window-shifted read stays inside the sentence pitch
    #   * P >= L + 8         : the 8 tail rows the kernel skips are never pooled
    P = _round_up(max(S + 2 * pad_len, L + _TAIL), 8)
    assert P % 8 == 0 and P >= S + 2 * pad_len and P >= L + _TAIL

    TB = block_batch if block_batch is not None else _pick_block_batch(B, P)
    assert TB % 8 == 0, "block_batch must be a multiple of 8 (sublane alignment)"
    B_pad = _round_up(B, TB)
    nb = B_pad // TB
    M = TB * P

    # Build q once, directly at its final pitched layout: bf16 gathers written into a
    # zeroed (B_pad, P, d) buffer (one fused HBM materialization of the dominant tensor).
    q = jnp.zeros((B_pad, P, d), jnp.bfloat16)
    q = q.at[:B, pad_len:pad_len + S, 0:dim].set(
        jnp.take(prep["word_emb"], word, axis=0))
    q = q.at[:B, pad_len:pad_len + S, dim:dim + wpe1].set(
        jnp.take(prep["pos1_emb"], pos1, axis=0))
    q = q.at[:B, pad_len:pad_len + S, dim + wpe1:d].set(
        jnp.take(prep["pos2_emb"], pos2, axis=0))
    q2d = q.reshape(B_pad * P, d)

    # Piecewise boundaries as compile-time constants (last piece extended by pad_len,
    # exactly as in the torch forward).
    b1 = int(piece_wise[0])
    b2 = b1 + int(piece_wise[1])
    b3 = b2 + int(piece_wise[2]) + pad_len
    assert b3 == L, "piece_wise must sum to sent_len (as required by the torch module)"
    # TODO(synk): an empty piece (piece_wise[s] == 0) yields tanh(-1e30) = -1 here, while
    #             the torch code would fail on an empty max-pool window.
    kernel = make_pcnn_kernel(window, (0, b1, b2, b3))

    flops = nb * (2 * window * (M - _TAIL) * d * C + 2 * 3 * TB * C * R_pad)
    bytes_accessed = (2 * B_pad * P * d + 2 * window * d * C + 4 * C
                      + 2 * 3 * C * R_pad + 4 * B_pad * R_pad)
    cost = pl.CostEstimate(flops=flops,
                           transcendentals=nb * 3 * TB * C,
                           bytes_accessed=bytes_accessed)

    out = pl.pallas_call(
        kernel,
        out_shape=jax.ShapeDtypeStruct((B_pad, R_pad), jnp.float32),
        grid_spec=pltpu.PrefetchScalarGridSpec(
            num_scalar_prefetch=0,
            grid=(nb,),
            in_specs=[
                pl.BlockSpec((M, d), lambda b: (b, 0)),
                pl.BlockSpec((window, d, C), lambda b: (0, 0, 0)),
                pl.BlockSpec((1, C), lambda b: (0, 0)),
                pl.BlockSpec((3, C, R_pad), lambda b: (0, 0, 0)),
            ],
            out_specs=pl.BlockSpec((TB, R_pad), lambda b: (b, 0)),
        ),
        compiler_params=pltpu.CompilerParams(
            dimension_semantics=("parallel",)),
        cost_estimate=cost,
    )(q2d, prep["wc"], prep["bias"], prep["wo3"])

    return out[:B, :relation_total]


def pcnn_reference(word, pos1, pos2, piece_wise, params, window):
    """Pure-JAX reference mirroring the PyTorch forward (b_drop=False), with the kernel's
    bf16 operand quantization applied so the comparison is apples-to-apples."""
    def q8(x):  # bf16 operand rounding; the math itself stays f32
        return x.astype(jnp.bfloat16).astype(jnp.float32)

    B, S = word.shape
    pad_len = window - 1
    L = S + pad_len
    emb_w = jnp.take(params["word_emb"], word, axis=0)
    emb_p1 = jnp.take(params["pos1_emb"], pos1, axis=0)
    emb_p2 = jnp.take(params["pos2_emb"], pos2, axis=0)
    q = q8(jnp.concatenate([emb_w, emb_p1, emb_p2], axis=2))
    d = q.shape[-1]
    q_pad = jnp.pad(q, ((0, 0), (pad_len, pad_len), (0, 0)))
    C = params["conv_b"].shape[0]
    wc = q8(jnp.transpose(params["conv_w"].reshape(C, window, d), (1, 2, 0)))
    c = jnp.zeros((B, L, C), jnp.float32) + params["conv_b"][None, None, :]
    for w in range(window):
        c = c + jnp.einsum("bld,dc->blc", q_pad[:, w:w + L, :], wc[w])
    new_pw = [int(piece_wise[0]), int(piece_wise[1]), int(piece_wise[2]) + pad_len]
    s1, s2 = new_pw[0], new_pw[0] + new_pw[1]
    p1 = jnp.max(c[:, :s1, :], axis=1)
    p2 = jnp.max(c[:, s1:s2, :], axis=1)
    p3 = jnp.max(c[:, s2:s2 + new_pw[2], :], axis=1)
    g = q8(jnp.tanh(jnp.concatenate([p1, p2, p3], axis=1)))
    return g @ q8(params["out_w"].T)


if __name__ == "__main__":
    # Small, deterministic config consistent with the module's __init__.
    batch = 64              # big enough to exercise TB auto-selection (TB=32 -> 2 steps)
    sent_len = 8
    dimension = 32          # word embedding dim
    dimensionWPE = 8        # position embedding dim
    window = 3
    dimensionC = 32         # number of conv filters
    relationTotal = 8
    wordTotal = 50
    PositionTotalE1 = 20
    PositionTotalE2 = 20
    d = dimension + 2 * dimensionWPE
    piece_wise = [3, 2, 3]  # sums to sent_len

    con = math.sqrt(6.0 / (3 * dimensionC + relationTotal))
    con1 = math.sqrt(6.0 / ((dimensionWPE + dimension) * window))

    key = jax.random.PRNGKey(0)
    k = jax.random.split(key, 9)
    params = {
        "word_emb": jax.random.normal(k[0], (wordTotal, dimension), jnp.float32) * 0.1,
        "pos1_emb": jax.random.uniform(k[1], (PositionTotalE1, dimensionWPE),
                                       jnp.float32, -con1, con1),
        "pos2_emb": jax.random.uniform(k[2], (PositionTotalE2, dimensionWPE),
                                       jnp.float32, -con1, con1),
        "conv_w": jax.random.uniform(k[3], (dimensionC, 1, window, d),
                                     jnp.float32, -con1, con1),
        "conv_b": jax.random.uniform(k[4], (dimensionC,), jnp.float32, -con, con),
        "out_w": jax.random.uniform(k[5], (relationTotal, 3 * dimensionC),
                                    jnp.float32, -con, con),
    }

    word = jax.random.randint(k[6], (batch, sent_len), 0, wordTotal, jnp.int32)
    pos1 = jax.random.randint(k[7], (batch, sent_len), 0, PositionTotalE1, jnp.int32)
    pos2 = jax.random.randint(k[8], (batch, sent_len), 0, PositionTotalE2, jnp.int32)

    # One-time parameter prep (bf16 tables, reshaped/padded weights) outside the jit.
    prep = prepare_params(params, window)

    fwd = jax.jit(lambda w, p1, p2, pr: pcnn_forward(
        w, p1, p2, piece_wise, pr, window, relationTotal))
    out = jax.block_until_ready(fwd(word, pos1, pos2, prep))

    ref = pcnn_reference(word, pos1, pos2, piece_wise, params, window)
    assert out.shape == (batch, relationTotal), out.shape
    # Both paths use bf16-rounded operands (q, conv_w, out_w, pooled g); residual
    # differences are just f32 accumulation order, so this tolerance is comfortable.
    assert jnp.allclose(out, ref, rtol=2e-2, atol=2e-2), (out, ref)

    print("KERNEL_OK")
</pallas_src>

<mosaic_0001>
module attributes {stable_mosaic.version = 11 : i64} {
  func.func @kernel(%arg0: i32, %arg1: memref<768x48xbf16, #tpu.memory_space<vmem>>, %arg2: memref<3x48x32xbf16, #tpu.memory_space<vmem>>, %arg3: memref<1x32xf32, #tpu.memory_space<vmem>>, %arg4: memref<3x32x128xbf16, #tpu.memory_space<vmem>>, %arg5: memref<32x128xf32, #tpu.memory_space<vmem>>) attributes {dimension_semantics = [#tpu.dimension_semantics<parallel>], iteration_bounds = array<i64: 2>, scalar_prefetch = 0 : i64, scratch_operands = 0 : i64, tpu.core_type = #tpu.core_type<tc>, window_params = [{transform_indices = @transform_0, window_bounds = array<i64: 768, 48>}, {pipeline_mode = #tpu.pipeline_mode<synchronous>, transform_indices = @transform_1, window_bounds = array<i64: 3, 48, 32>}, {pipeline_mode = #tpu.pipeline_mode<synchronous>, transform_indices = @transform_2, window_bounds = array<i64: 1, 32>}, {pipeline_mode = #tpu.pipeline_mode<synchronous>, transform_indices = @transform_3, window_bounds = array<i64: 3, 32, 128>}, {transform_indices = @transform_4, window_bounds = array<i64: 32, 128>}]} {
    %c0 = arith.constant 0 : index
    %c0_0 = arith.constant 0 : index
    %0 = vector.load %arg1[%c0, %c0_0] : memref<768x48xbf16, #tpu.memory_space<vmem>>, vector<760x48xbf16>
    %c0_1 = arith.constant 0 : index
    %c0_2 = arith.constant 0 : index
    %c0_3 = arith.constant 0 : index
    %1 = vector.load %arg2[%c0_1, %c0_2, %c0_3] : memref<3x48x32xbf16, #tpu.memory_space<vmem>>, vector<1x48x32xbf16>
    %2 = vector.shape_cast %1 : vector<1x48x32xbf16> to vector<48x32xbf16>
    %cst = arith.constant dense<0.000000e+00> : vector<760x32xf32>
    %3 = tpu.matmul %0, %2, %cst {dimension_numbers = #tpu.dot_dimension_numbers<[1], [0], [0], [1], [0, 0, 1, 1], [], []>} : vector<760x48xbf16>, vector<48x32xbf16>, vector<760x32xf32> -> vector<760x32xf32>
    %c1 = arith.constant 1 : index
    %c0_4 = arith.constant 0 : index
    %4 = vector.load %arg1[%c1, %c0_4] : memref<768x48xbf16, #tpu.memory_space<vmem>>, vector<760x48xbf16>
    %c1_5 = arith.constant 1 : index
    %c0_6 = arith.constant 0 : index
    %c0_7 = arith.constant 0 : index
    %5 = vector.load %arg2[%c1_5, %c0_6, %c0_7] : memref<3x48x32xbf16, #tpu.memory_space<vmem>>, vector<1x48x32xbf16>
    %6 = vector.shape_cast %5 : vector<1x48x32xbf16> to vector<48x32xbf16>
    %cst_8 = arith.constant dense<0.000000e+00> : vector<760x32xf32>
    %7 = tpu.matmul %4, %6, %cst_8 {dimension_numbers = #tpu.dot_dimension_numbers<[1], [0], [0], [1], [0, 0, 1, 1], [], []>} : vector<760x48xbf16>, vector<48x32xbf16>, vector<760x32xf32> -> vector<760x32xf32>
    %8 = arith.addf %3, %7 : vector<760x32xf32>
    %c2 = arith.constant 2 : index
    %c0_9 = arith.constant 0 : index
    %9 = vector.load %arg1[%c2, %c0_9] : memref<768x48xbf16, #tpu.memory_space<vmem>>, vector<760x48xbf16>
    %c2_10 = arith.constant 2 : index
    %c0_11 = arith.constant 0 : index
    %c0_12 = arith.constant 0 : index
    %10 = vector.load %arg2[%c2_10, %c0_11, %c0_12] : memref<3x48x32xbf16, #tpu.memory_space<vmem>>, vector<1x48x32xbf16>
    %11 = vector.shape_cast %10 : vector<1x48x32xbf16> to vector<48x32xbf16>
    %cst_13 = arith.constant dense<0.000000e+00> : vector<760x32xf32>
    %12 = tpu.matmul %9, %11, %cst_13 {dimension_numbers = #tpu.dot_dimension_numbers<[1], [0], [0], [1], [0, 0, 1, 1], [], []>} : vector<760x48xbf16>, vector<48x32xbf16>, vector<760x32xf32> -> vector<760x32xf32>
    %13 = arith.addf %8, %12 : vector<760x32xf32>
    %cst_14 = arith.constant 0.000000e+00 : f32
    %14 = vector.broadcast %cst_14 : f32 to vector<8x32xf32>
    %15 = tpu.concatenate %13, %14 in 0 : vector<760x32xf32>, vector<8x32xf32> -> vector<768x32xf32>
    %16 = vector.shape_cast %15 : vector<768x32xf32> to vector<32x24x32xf32>
    %17 = tpu.iota {dimensions = array<i32: 1>} : vector<1x24x1xi32>
    %c0_15 = arith.constant 0 : index
    %c0_16 = arith.constant 0 : index
    %18 = vector.load %arg3[%c0_15, %c0_16] : memref<1x32xf32, #tpu.memory_space<vmem>>, vector<1x32xf32>
    %cst_17 = arith.constant 0.000000e+00 : f32
    %19 = vector.broadcast %cst_17 : f32 to vector<32x128xf32>
    %c0_i32 = arith.constant 0 : i32
    %20 = vector.broadcast %c0_i32 : i32 to vector<1x24x1xi32>
    %21 = arith.cmpi sge, %17, %20 : vector<1x24x1xi32>
    %c3_i32 = arith.constant 3 : i32
    %22 = vector.broadcast %c3_i32 : i32 to vector<1x24x1xi32>
    %23 = arith.cmpi slt, %17, %22 : vector<1x24x1xi32>
    %24 = arith.andi %21, %23 : vector<1x24x1xi1>
    %cst_18 = arith.constant -1.000000e+30 : f32
    %25 = vector.shape_cast %24 : vector<1x24x1xi1> to vector<1x24x1xi1>
    %26 = vector.broadcast %25 : vector<1x24x1xi1> to vector<32x24x32xi1>
    %27 = vector.broadcast %cst_18 : f32 to vector<32x24x32xf32>
    %28 = arith.select %26, %16, %27 : vector<32x24x32xi1>, vector<32x24x32xf32>
    %cst_19 = arith.constant dense<0xFF800000> : vector<32x32xf32>
    %29 = vector.multi_reduction <maximumf>, %28, %cst_19 [1] : vector<32x24x32xf32> to vector<32x32xf32>
    %30 = vector.broadcast %18 : vector<1x32xf32> to vector<32x32xf32>
    %31 = arith.addf %29, %30 : vector<32x32xf32>
    %32 = math.tanh %31 : vector<32x32xf32>
    %33 = arith.truncf %32 : vector<32x32xf32> to vector<32x32xbf16>
    %c0_20 = arith.constant 0 : index
    %c0_21 = arith.constant 0 : index
    %c0_22 = arith.constant 0 : index
    %34 = vector.load %arg4[%c0_20, %c0_21, %c0_22] : memref<3x32x128xbf16, #tpu.memory_space<vmem>>, vector<1x32x128xbf16>
    %35 = vector.shape_cast %34 : vector<1x32x128xbf16> to vector<32x128xbf16>
    %cst_23 = arith.constant dense<0.000000e+00> : vector<32x128xf32>
    %36 = tpu.matmul %33, %35, %cst_23 {dimension_numbers = #tpu.dot_dimension_numbers<[1], [0], [0], [1], [0, 0, 1, 1], [], []>} : vector<32x32xbf16>, vector<32x128xbf16>, vector<32x128xf32> -> vector<32x128xf32>
    %37 = arith.addf %19, %36 : vector<32x128xf32>
    %c3_i32_24 = arith.constant 3 : i32
    %38 = vector.broadcast %c3_i32_24 : i32 to vector<1x24x1xi32>
    %39 = arith.cmpi sge, %17, %38 : vector<1x24x1xi32>
    %c5_i32 = arith.constant 5 : i32
    %40 = vector.broadcast %c5_i32 : i32 to vector<1x24x1xi32>
    %41 = arith.cmpi slt, %17, %40 : vector<1x24x1xi32>
    %42 = arith.andi %39, %41 : vector<1x24x1xi1>
    %cst_25 = arith.constant -1.000000e+30 : f32
    %43 = vector.shape_cast %42 : vector<1x24x1xi1> to vector<1x24x1xi1>
    %44 = vector.broadcast %43 : vector<1x24x1xi1> to vector<32x24x32xi1>
    %45 = vector.broadcast %cst_25 : f32 to vector<32x24x32xf32>
    %46 = arith.select %44, %16, %45 : vector<32x24x32xi1>, vector<32x24x32xf32>
    %cst_26 = arith.constant dense<0xFF800000> : vector<32x32xf32>
    %47 = vector.multi_reduction <maximumf>, %46, %cst_26 [1] : vector<32x24x32xf32> to vector<32x32xf32>
    %48 = vector.broadcast %18 : vector<1x32xf32> to vector<32x32xf32>
    %49 = arith.addf %47, %48 : vector<32x32xf32>
    %50 = math.tanh %49 : vector<32x32xf32>
    %51 = arith.truncf %50 : vector<32x32xf32> to vector<32x32xbf16>
    %c1_27 = arith.constant 1 : index
    %c0_28 = arith.constant 0 : index
    %c0_29 = arith.constant 0 : index
    %52 = vector.load %arg4[%c1_27, %c0_28, %c0_29] : memref<3x32x128xbf16, #tpu.memory_space<vmem>>, vector<1x32x128xbf16>
    %53 = vector.shape_cast %52 : vector<1x32x128xbf16> to vector<32x128xbf16>
    %cst_30 = arith.constant dense<0.000000e+00> : vector<32x128xf32>
    %54 = tpu.matmul %51, %53, %cst_30 {dimension_numbers = #tpu.dot_dimension_numbers<[1], [0], [0], [1], [0, 0, 1, 1], [], []>} : vector<32x32xbf16>, vector<32x128xbf16>, vector<32x128xf32> -> vector<32x128xf32>
    %55 = arith.addf %37, %54 : vector<32x128xf32>
    %c5_i32_31 = arith.constant 5 : i32
    %56 = vector.broadcast %c5_i32_31 : i32 to vector<1x24x1xi32>
    %57 = arith.cmpi sge, %17, %56 : vector<1x24x1xi32>
    %c10_i32 = arith.constant 10 : i32
    %58 = vector.broadcast %c10_i32 : i32 to vector<1x24x1xi32>
    %59 = arith.cmpi slt, %17, %58 : vector<1x24x1xi32>
    %60 = arith.andi %57, %59 : vector<1x24x1xi1>
    %cst_32 = arith.constant -1.000000e+30 : f32
    %61 = vector.shape_cast %60 : vector<1x24x1xi1> to vector<1x24x1xi1>
    %62 = vector.broadcast %61 : vector<1x24x1xi1> to vector<32x24x32xi1>
    %63 = vector.broadcast %cst_32 : f32 to vector<32x24x32xf32>
    %64 = arith.select %62, %16, %63 : vector<32x24x32xi1>, vector<32x24x32xf32>
    %cst_33 = arith.constant dense<0xFF800000> : vector<32x32xf32>
    %65 = vector.multi_reduction <maximumf>, %64, %cst_33 [1] : vector<32x24x32xf32> to vector<32x32xf32>
    %66 = vector.broadcast %18 : vector<1x32xf32> to vector<32x32xf32>
    %67 = arith.addf %65, %66 : vector<32x32xf32>
    %68 = math.tanh %67 : vector<32x32xf32>
    %69 = arith.truncf %68 : vector<32x32xf32> to vector<32x32xbf16>
    %c2_34 = arith.constant 2 : index
    %c0_35 = arith.constant 0 : index
    %c0_36 = arith.constant 0 : index
    %70 = vector.load %arg4[%c2_34, %c0_35, %c0_36] : memref<3x32x128xbf16, #tpu.memory_space<vmem>>, vector<1x32x128xbf16>
    %71 = vector.shape_cast %70 : vector<1x32x128xbf16> to vector<32x128xbf16>
    %cst_37 = arith.constant dense<0.000000e+00> : vector<32x128xf32>
    %72 = tpu.matmul %69, %71, %cst_37 {dimension_numbers = #tpu.dot_dimension_numbers<[1], [0], [0], [1], [0, 0, 1, 1], [], []>} : vector<32x32xbf16>, vector<32x128xbf16>, vector<32x128xf32> -> vector<32x128xf32>
    %73 = arith.addf %55, %72 : vector<32x128xf32>
    %c0_38 = arith.constant 0 : index
    %c0_39 = arith.constant 0 : index
    %74 = vector.load %arg5[%c0_38, %c0_39] : memref<32x128xf32, #tpu.memory_space<vmem>>, vector<32x128xf32>
    tpu.vector_store %arg5[%c0_38, %c0_39], %73 {strides = array<i32>} : memref<32x128xf32, #tpu.memory_space<vmem>>, vector<32x128xf32>,
    return
  }
  func.func @transform_0(%arg0: i32) -> (i32, i32) {
    %c0_i32 = arith.constant 0 : i32
    %c0_i32_0 = arith.constant 0 : i32
    return %arg0, %c0_i32 : i32, i32
  }
  func.func @transform_1(%arg0: i32) -> (i32, i32, i32) {
    %c0_i32 = arith.constant 0 : i32
    %c0_i32_0 = arith.constant 0 : i32
    %c0_i32_1 = arith.constant 0 : i32
    %c0_i32_2 = arith.constant 0 : i32
    return %c0_i32, %c0_i32_0, %c0_i32_1 : i32, i32, i32
  }
  func.func @transform_2(%arg0: i32) -> (i32, i32) {
    %c0_i32 = arith.constant 0 : i32
    %c0_i32_0 = arith.constant 0 : i32
    %c0_i32_1 = arith.constant 0 : i32
    return %c0_i32, %c0_i32_0 : i32, i32
  }
  func.func @transform_3(%arg0: i32) -> (i32, i32, i32) {
    %c0_i32 = arith.constant 0 : i32
    %c0_i32_0 = arith.constant 0 : i32
    %c0_i32_1 = arith.constant 0 : i32
    %c0_i32_2 = arith.constant 0 : i32
    return %c0_i32, %c0_i32_0, %c0_i32_1 : i32, i32, i32
  }
  func.func @transform_4(%arg0: i32) -> (i32, i32) {
    %c0_i32 = arith.constant 0 : i32
    %c0_i32_0 = arith.constant 0 : i32
    return %arg0, %c0_i32 : i32, i32
  }
}

</mosaic_0001>

<llo_original>
// kernel: _lambda_.1
$region0: #{_lambda_.1}
  #allocation0 [shape = 'u32[]', space=smem, size = 0x4, offset = 0x4, fixed_abs, tag = 'smem constant byte address 0x4 - core index']
  #allocation1 [shape = 'u32[144,128]{1,0:T(1,128)}', space=vmem, size = 0x12000, scoped, tag = 'internal scratch']
  %s0 = inlined_call_operand.vmem [shape: bf16[1536,48], index: 0, kind: input, shape index: {}]
  %s1 = inlined_call_operand.vmem [shape: bf16[3,48,32], index: 1, kind: input, shape index: {}]
  %s2 = inlined_call_operand.vmem [shape: f32[1,32], index: 2, kind: input, shape index: {}]
  %s3 = inlined_call_operand.vmem [shape: bf16[3,32,128], index: 3, kind: input, shape index: {}]
  %s4 = inlined_call_operand.vmem [shape: f32[64,128], index: 4, kind: output, shape index: {}]
  %s5 = sld [smem:[#allocation0]]
  $region49: #{_lambda_.1} parent=0
    _
  %s7 = ssub.s32 1, %s5
  %s8 = scalar_select 0, %s7, %s5
  loop: start=0, step=1, limit=4
  $region2: #{_lambda_.1} parent=0 // loop_pre_header
    _
  $region3: #{_lambda_.1} parent=0 // loop_header
    %s10 = sphi 0, %s14
    %p11 = scmp.ge.s32.totalorder %s10, 4
    %s20 = sphi 0, %s22
    %s23 = sphi 0, %s20
    %s24 = sphi 0, %s23
    %s40 = sphi 0, %s24
    %s44 = sphi 0, %s44
    %s46 = sphi 0, %s44
    %s47 = sphi 0, %s46
    %s61 = sphi 0, %s47
    %s65 = sphi 0, %s65
    %s67 = sphi 0, %s65
    %s68 = sphi 0, %s67
    %s82 = sphi 0, %s68
    %s86 = sphi 0, %s86
    %s88 = sphi 0, %s86
    %s89 = sphi 0, %s88
    %s103 = sphi 0, %s89
    %s109 = sphi 0, %s111
    %s112 = sphi 0, %s109
    %s113 = sphi 0, %s112
    %s129 = sphi 0, %s113
  $region4: #{_lambda_.1} parent=0 // loop_header_branch
    %13 = sbr.rel (%p11) target = $region8
  $region5: #{_lambda_.1} parent=0 // loop_body
    %s15 = ssub.s32 %s10, 1
    %s16 = ssub.s32 %s10, 2
    %s17 = sadd.s32 %s10, 1
    %s18 = ssub.s32 %s10, %s17
    %p19 = scmp.eq.s32.totalorder %s18, 0
    %s21 = sadd.s32 %s20, 1
    %s22 = scalar_select %p19, %s20, %s21
    %p25 = pneg %p19
    %p26 = scmp.eq.s32.totalorder %s10, 1
    %p27 = por %p25, %p26
    %p28 = scmp.ne.s32.totalorder %s20, %s23
    %p29 = scmp.eq.s32.totalorder %s10, 0
    %p30 = por %p28, %p29
    %p31 = scmp.ne.s32.totalorder %s20, %s23
    %p32 = scmp.eq.s32.totalorder %s15, 1
    %p33 = por %p31, %p32
    %p34 = scmp.ne.s32.totalorder %s23, %s24
    %p35 = scmp.eq.s32.totalorder %s15, 0
    %p36 = por %p34, %p35
    %p37 = scmp.ne.s32.totalorder %s23, %s24
    %p38 = scmp.eq.s32.totalorder %s16, 1
    %p39 = por %p37, %p38
    %p41 = scmp.ne.s32.totalorder %s24, %s40
    %p42 = scmp.eq.s32.totalorder %s16, 0
    %p43 = por %p41, %p42
    %s45 = sadd.s32 %s44, 1
    %p48 = scmp.eq.s32.totalorder %s10, 1
    %p49 = scmp.ne.s32.totalorder %s44, %s46
    %p50 = scmp.eq.s32.totalorder %s10, 0
    %p51 = por %p49, %p50
    %p52 = scmp.ne.s32.totalorder %s44, %s46
    %p53 = scmp.eq.s32.totalorder %s15, 1
    %p54 = por %p52, %p53
    %p55 = scmp.ne.s32.totalorder %s46, %s47
    %p56 = scmp.eq.s32.totalorder %s15, 0
    %p57 = por %p55, %p56
    %p58 = scmp.ne.s32.totalorder %s46, %s47
    %p59 = scmp.eq.s32.totalorder %s16, 1
    %p60 = por %p58, %p59
    %p62 = scmp.ne.s32.totalorder %s47, %s61
    %p63 = scmp.eq.s32.totalorder %s16, 0
    %p64 = por %p62, %p63
    %s66 = sadd.s32 %s65, 1
    %p69 = scmp.eq.s32.totalorder %s10, 1
    %p70 = scmp.ne.s32.totalorder %s65, %s67
    %p71 = scmp.eq.s32.totalorder %s10, 0
    %p72 = por %p70, %p71
    %p73 = scmp.ne.s32.totalorder %s65, %s67
    %p74 = scmp.eq.s32.totalorder %s15, 1
    %p75 = por %p73, %p74
    %p76 = scmp.ne.s32.totalorder %s67, %s68
    %p77 = scmp.eq.s32.totalorder %s15, 0
    %p78 = por %p76, %p77
    %p79 = scmp.ne.s32.totalorder %s67, %s68
    %p80 = scmp.eq.s32.totalorder %s16, 1
    %p81 = por %p79, %p80
    %p83 = scmp.ne.s32.totalorder %s68, %s82
    %p84 = scmp.eq.s32.totalorder %s16, 0
    %p85 = por %p83, %p84
    %s87 = sadd.s32 %s86, 1
    %p90 = scmp.eq.s32.totalorder %s10, 1
    %p91 = scmp.ne.s32.totalorder %s86, %s88
    %p92 = scmp.eq.s32.totalorder %s10, 0
    %p93 = por %p91, %p92
    %p94 = scmp.ne.s32.totalorder %s86, %s88
    %p95 = scmp.eq.s32.totalorder %s15, 1
    %p96 = por %p94, %p95
    %p97 = scmp.ne.s32.totalorder %s88, %s89
    %p98 = scmp.eq.s32.totalorder %s15, 0
    %p99 = por %p97, %p98
    %p100 = scmp.ne.s32.totalorder %s88, %s89
    %p101 = scmp.eq.s32.totalorder %s16, 1
    %p102 = por %p100, %p101
    %p104 = scmp.ne.s32.totalorder %s89, %s103
    %p105 = scmp.eq.s32.totalorder %s16, 0
    %p106 = por %p104, %p105
    %s107 = ssub.s32 %s10, %s17
    %p108 = scmp.eq.s32.totalorder %s107, 0
    %s110 = sadd.s32 %s109, 1
    %s111 = scalar_select %p108, %s109, %s110
    %p114 = pneg %p108
    %p115 = scmp.eq.s32.totalorder %s10, 1
    %p116 = por %p114, %p115
    %p117 = scmp.ne.s32.totalorder %s109, %s112
    %p118 = scmp.eq.s32.totalorder %s10, 0
    %p119 = por %p117, %p118
    %p120 = scmp.ne.s32.totalorder %s109, %s112
    %p121 = scmp.eq.s32.totalorder %s15, 1
    %p122 = por %p120, %p121
    %p123 = scmp.ne.s32.totalorder %s112, %s113
    %p124 = scmp.eq.s32.totalorder %s15, 0
    %p125 = por %p123, %p124
    %p126 = scmp.ne.s32.totalorder %s112, %s113
    %p127 = scmp.eq.s32.totalorder %s16, 1
    %p128 = por %p126, %p127
    %p130 = scmp.ne.s32.totalorder %s113, %s129
    %p131 = scmp.eq.s32.totalorder %s16, 0
    %p132 = por %p130, %p131
    %p133 = scmp.le.s32.totalorder 1, %s10
    %p134 = scmp.lt.s32.totalorder %s10, 3
    %p135 = pnand %p133, %p134
    %p136 = pneg %p135
    // Predicated region
    $region9: #{_lambda_.1} parent=5 // pred_check
      _
    $region10: #{_lambda_.1} parent=5 // pred_check_branch
      %138 = sbr.rel (%p135) target = $region12
    $region11: #{_lambda_.1} parent=5 // pred_region
      %s139 = ssub.s32 %s10, 1
      // Predicated region
      $region13: #{_lambda_.1} parent=11 // pred_check
        %p140 = pneg %p57
      $region14: #{_lambda_.1} parent=11 // pred_check_branch
        %142 = sbr.rel (%p140) target = $region16
      $region15: #{_lambda_.1} parent=11 // pred_region
        _
      $region16: #{_lambda_.1} parent=11 // pred_fallthru
        _
      // Predicated region
      $region17: #{_lambda_.1} parent=11 // pred_check
        %p143 = pneg %p78
      $region18: #{_lambda_.1} parent=11 // pred_check_branch
        %145 = sbr.rel (%p143) target = $region20
      $region19: #{_lambda_.1} parent=11 // pred_region
        _
      $region20: #{_lambda_.1} parent=11 // pred_fallthru
        _
      // Predicated region
      $region21: #{_lambda_.1} parent=11 // pred_check
        %p146 = pneg %p99
      $region22: #{_lambda_.1} parent=11 // pred_check_branch
        %148 = sbr.rel (%p146) target = $region24
      $region23: #{_lambda_.1} parent=11 // pred_region
        _
      $region24: #{_lambda_.1} parent=11 // pred_fallthru
        _
    $region12: #{_lambda_.1} parent=5 // pred_fallthru
      _
    %p149 = scmp.lt.s32.totalorder %s10, 2
    // Predicated region
    $region25: #{_lambda_.1} parent=5 // pred_check
      %p150 = pneg %p149
    $region26: #{_lambda_.1} parent=5 // pred_check_branch
      %152 = sbr.rel (%p150) target = $region28
    $region27: #{_lambda_.1} parent=5 // pred_region
      // Predicated region
      $region29: #{_lambda_.1} parent=27 // pred_check
        %p153 = pneg %p30
      $region30: #{_lambda_.1} parent=27 // pred_check_branch
        %155 = sbr.rel (%p153) target = $region32
      $region31: #{_lambda_.1} parent=27 // pred_region
        %s156 = smul.u32 96, %s10
        %p157 = scmp.lt.s32.totalorder %s156, 191
        %s158 = scalar_select %p157, %s156, 191
        %s159 = smul.addr %s158, 4
        %s160 = scalar_lea.vmem %s0, %s159
        %s161 = smul.u32 96, %s10
      $region32: #{_lambda_.1} parent=27 // pred_fallthru
        _
    $region28: #{_lambda_.1} parent=5 // pred_fallthru
      _
    %p162 = scmp.le.s32.totalorder 1, %s10
    %p163 = scmp.lt.s32.totalorder %s10, 3
    %p164 = pnand %p162, %p163
    %p165 = pneg %p164
    // Predicated region
    $region33: #{_lambda_.1} parent=5 // pred_check
      _
    $region34: #{_lambda_.1} parent=5 // pred_check_branch
      %167 = sbr.rel (%p164) target = $region36
    $region35: #{_lambda_.1} parent=5 // pred_region
      %s168 = ssub.s32 %s10, 1
      %s169 = smul.u32 96, %s15
      %p170 = scmp.lt.s32.totalorder %s169, 191
      %s171 = scalar_select %p170, %s169, 191
      %s172 = smul.addr %s171, 4
      %s173 = scalar_lea.vmem %s0, %s172
      %p174 = pneg %p36
      %p175 = pneg %p33
      %p176 = pneg %p57
      %p177 = pneg %p54
      %p178 = pneg %p78
      %p179 = pneg %p75
      %p180 = pneg %p99
      %p181 = pneg %p96
      %p182 = pneg %p125
      %p183 = pneg %p122
      %s184 = smul.u32 4, %s15
      %p185 = scmp.lt.s32.totalorder %s184, 7
      %s186 = scalar_select %p185, %s184, 7
      %s187 = smul.addr %s186, 8
      %s188 = scalar_lea.vmem %s4, %s187
      %s189 = smul.u32 96, %s15
      %p190 = scmp.lt.s32.totalorder %s189, 191
      %s191 = scalar_select %p190, %s189, 191
      %s192 = smul.addr %s191, 4
      %s193 = scalar_lea.vmem %s0, %s192
      %s194 = smul.u32 96, %s15
      %s195 = smul.u32 4, %s15
      %p196 = scmp.lt.s32.totalorder %s195, 7
      %s197 = scalar_select %p196, %s195, 7
      %s198 = smul.addr %s197, 8
      %s199 = scalar_lea.vmem %s4, %s198
      %s200 = smul.u32 4, %s15
      %v202 = vld [vmem:[%s193] sm:$0xf]
      %v203 = vld [vmem:[%s193 + $0x4] sm:$0xf]
      %v204 = vld [vmem:[%s193 + $0x8] sm:$0xf]
      %v205 = vld [vmem:[%s193 + $0xc] sm:$0xf]
      %v206 = vld [vmem:[%s193 + $0x10] sm:$0xf]
      %v207 = vld [vmem:[%s193 + $0x14] sm:$0xf]
      %v208 = vld [vmem:[%s193 + $0x18] sm:$0xf]
      %v209 = vld [vmem:[%s193 + $0x1c] sm:$0xf]
      %v210 = vld [vmem:[%s193 + $0x20] sm:$0xf]
      %v211 = vld [vmem:[%s193 + $0x24] sm:$0xf]
      %v212 = vld [vmem:[%s193 + $0x28] sm:$0xf]
      %v213 = vld [vmem:[%s193 + $0x2c] sm:$0xf]
      %v214 = vld [vmem:[%s193 + $0x30] sm:$0xf]
      %v215 = vld [vmem:[%s193 + $0x34] sm:$0xf]
      %v216 = vld [vmem:[%s193 + $0x38] sm:$0xf]
      %v217 = vld [vmem:[%s193 + $0x3c] sm:$0xf]
      %v218 = vld [vmem:[%s193 + $0x40] sm:$0xf]
      %v219 = vld [vmem:[%s193 + $0x44] sm:$0xf]
      %v220 = vld [vmem:[%s193 + $0x48] sm:$0xf]
      %v221 = vld [vmem:[%s193 + $0x4c] sm:$0xf]
      %v222 = vld [vmem:[%s193 + $0x50] sm:$0xf]
      %v223 = vld [vmem:[%s193 + $0x54] sm:$0xf]
      %v224 = vld [vmem:[%s193 + $0x58] sm:$0xf]
      %v225 = vld [vmem:[%s193 + $0x5c] sm:$0xf]
      %v226 = vld [vmem:[%s193 + $0x60] sm:$0xf]
      %v227 = vld [vmem:[%s193 + $0x64] sm:$0xf]
      %v228 = vld [vmem:[%s193 + $0x68] sm:$0xf]
      %v229 = vld [vmem:[%s193 + $0x6c] sm:$0xf]
      %v230 = vld [vmem:[%s193 + $0x70] sm:$0xf]
      %v231 = vld [vmem:[%s193 + $0x74] sm:$0xf]
      %v232 = vld [vmem:[%s193 + $0x78] sm:$0xf]
      %v233 = vld [vmem:[%s193 + $0x7c] sm:$0xf]
      %v234 = vld [vmem:[%s193 + $0x80] sm:$0xf]
      %v235 = vld [vmem:[%s193 + $0x84] sm:$0xf]
      %v236 = vld [vmem:[%s193 + $0x88] sm:$0xf]
      %v237 = vld [vmem:[%s193 + $0x8c] sm:$0xf]
      %v238 = vld [vmem:[%s193 + $0x90] sm:$0xf]
      %v239 = vld [vmem:[%s193 + $0x94] sm:$0xf]
      %v240 = vld [vmem:[%s193 + $0x98] sm:$0xf]
      %v241 = vld [vmem:[%s193 + $0x9c] sm:$0xf]
      %v242 = vld [vmem:[%s193 + $0xa0] sm:$0xf]
      %v243 = vld [vmem:[%s193 + $0xa4] sm:$0xf]
      %v244 = vld [vmem:[%s193 + $0xa8] sm:$0xf]
      %v245 = vld [vmem:[%s193 + $0xac] sm:$0xf]
      %v246 = vld [vmem:[%s193 + $0xb0] sm:$0xf]
      %v247 = vld [vmem:[%s193 + $0xb4] sm:$0xf]
      %v248 = vld [vmem:[%s193 + $0xb8] sm:$0xf]
      %v249 = vld [vmem:[%s193 + $0xbc] sm:$0xf]
      %v250 = vld [vmem:[%s193 + $0xc0] sm:$0xf]
      %v251 = vld [vmem:[%s193 + $0xc4] sm:$0xf]
      %v252 = vld [vmem:[%s193 + $0xc8] sm:$0xf]
      %v253 = vld [vmem:[%s193 + $0xcc] sm:$0xf]
      %v254 = vld [vmem:[%s193 + $0xd0] sm:$0xf]
      %v255 = vld [vmem:[%s193 + $0xd4] sm:$0xf]
      %v256 = vld [vmem:[%s193 + $0xd8] sm:$0xf]
      %v257 = vld [vmem:[%s193 + $0xdc] sm:$0xf]
      %v258 = vld [vmem:[%s193 + $0xe0] sm:$0xf]
      %v259 = vld [vmem:[%s193 + $0xe4] sm:$0xf]
      %v260 = vld [vmem:[%s193 + $0xe8] sm:$0xf]
      %v261 = vld [vmem:[%s193 + $0xec] sm:$0xf]
      %v262 = vld [vmem:[%s193 + $0xf0] sm:$0xf]
      %v263 = vld [vmem:[%s193 + $0xf4] sm:$0xf]
      %v264 = vld [vmem:[%s193 + $0xf8] sm:$0xf]
      %v265 = vld [vmem:[%s193 + $0xfc] sm:$0xf]
      %v266 = vld [vmem:[%s193 + $0x100] sm:$0xf]
      %v267 = vld [vmem:[%s193 + $0x104] sm:$0xf]
      %v268 = vld [vmem:[%s193 + $0x108] sm:$0xf]
      %v269 = vld [vmem:[%s193 + $0x10c] sm:$0xf]
      %v270 = vld [vmem:[%s193 + $0x110] sm:$0xf]
      %v271 = vld [vmem:[%s193 + $0x114] sm:$0xf]
      %v272 = vld [vmem:[%s193 + $0x118] sm:$0xf]
      %v273 = vld [vmem:[%s193 + $0x11c] sm:$0xf]
      %v274 = vld [vmem:[%s193 + $0x120] sm:$0xf]
      %v275 = vld [vmem:[%s193 + $0x124] sm:$0xf]
      %v276 = vld [vmem:[%s193 + $0x128] sm:$0xf]
      %v277 = vld [vmem:[%s193 + $0x12c] sm:$0xf]
      %v278 = vld [vmem:[%s193 + $0x130] sm:$0xf]
      %v279 = vld [vmem:[%s193 + $0x134] sm:$0xf]
      %v280 = vld [vmem:[%s193 + $0x138] sm:$0xf]
      %v281 = vld [vmem:[%s193 + $0x13c] sm:$0xf]
      %v282 = vld [vmem:[%s193 + $0x140] sm:$0xf]
      %v283 = vld [vmem:[%s193 + $0x144] sm:$0xf]
      %v284 = vld [vmem:[%s193 + $0x148] sm:$0xf]
      %v285 = vld [vmem:[%s193 + $0x14c] sm:$0xf]
      %v286 = vld [vmem:[%s193 + $0x150] sm:$0xf]
      %v287 = vld [vmem:[%s193 + $0x154] sm:$0xf]
      %v288 = vld [vmem:[%s193 + $0x158] sm:$0xf]
      %v289 = vld [vmem:[%s193 + $0x15c] sm:$0xf]
      %v290 = vld [vmem:[%s193 + $0x160] sm:$0xf]
      %v291 = vld [vmem:[%s193 + $0x164] sm:$0xf]
      %v292 = vld [vmem:[%s193 + $0x168] sm:$0xf]
      %v293 = vld [vmem:[%s193 + $0x16c] sm:$0xf]
      %v294 = vld [vmem:[%s193 + $0x170] sm:$0xf]
      %v295 = vld [vmem:[%s193 + $0x174] sm:$0xf]
      %v296 = vld [vmem:[%s193 + $0x178] sm:$0xf]
      %v297 = vld [vmem:[%s1] sm:$0xf]
      %v298 = vld [vmem:[%s1 + $0x4] sm:$0xf]
      %v299 = vld [vmem:[%s1 + $0x8] sm:$0xf]
      %v300 = vld [vmem:[%s1 + $0xc] sm:$0xf]
      %v301 = vld [vmem:[%s1 + $0x10] sm:$0xf]
      %v302 = vld [vmem:[%s1 + $0x14] sm:$0xf]
      %v303 = vld [vmem:[%s193 + $0x17c] sm:$0x1]
      %s304 = scalar_lea.vmem %s1, 24
      %v305 = vld [vmem:[%s304] sm:$0xf]
      %v306 = vld [vmem:[%s304 + $0x4] sm:$0xf]
      %v307 = vld [vmem:[%s304 + $0x8] sm:$0xf]
      %v308 = vld [vmem:[%s304 + $0xc] sm:$0xf]
      %v309 = vld [vmem:[%s304 + $0x10] sm:$0xf]
      %v310 = vld [vmem:[%s304 + $0x14] sm:$0xf]
      %v407 = vunpack.c.l.b16 %v202
      %v408 = vunpack.c.l.b16 %v203
      %v409 = vunpack.c.l.b16 %v204
      %v410 = vunpack.c.l.b16 %v205
      %v411 = vunpack.c.l.b16 %v206
      %v412 = vunpack.c.l.b16 %v207
      %v413 = vunpack.c.l.b16 %v208
      %v414 = vunpack.c.l.b16 %v209
      %v415 = vunpack.c.l.b16 %v210
      %v416 = vunpack.c.l.b16 %v211
      %v417 = vunpack.c.l.b16 %v212
      %v418 = vunpack.c.l.b16 %v213
      %v419 = vunpack.c.l.b16 %v214
      %v420 = vunpack.c.l.b16 %v215
      %v421 = vunpack.c.l.b16 %v216
      %v422 = vunpack.c.l.b16 %v217
      %v423 = vunpack.c.l.b16 %v218
      %v424 = vunpack.c.l.b16 %v219
      %v425 = vunpack.c.l.b16 %v220
      %v426 = vunpack.c.l.b16 %v221
      %v427 = vunpack.c.l.b16 %v222
      %v428 = vunpack.c.l.b16 %v223
      %v429 = vunpack.c.l.b16 %v224
      %v430 = vunpack.c.l.b16 %v225
      %v431 = vunpack.c.l.b16 %v226
      %v432 = vunpack.c.l.b16 %v227
      %v433 = vunpack.c.l.b16 %v228
      %v434 = vunpack.c.l.b16 %v229
      %v435 = vunpack.c.l.b16 %v230
      %v436 = vunpack.c.l.b16 %v231
      %v437 = vunpack.c.l.b16 %v232
      %v438 = vunpack.c.l.b16 %v233
      %v439 = vunpack.c.l.b16 %v234
      %v440 = vunpack.c.l.b16 %v235
      %v441 = vunpack.c.l.b16 %v236
      %v442 = vunpack.c.l.b16 %v237
      %v443 = vunpack.c.l.b16 %v238
      %v444 = vunpack.c.l.b16 %v239
      %v445 = vunpack.c.l.b16 %v240
      %v446 = vunpack.c.l.b16 %v241
      %v447 = vunpack.c.l.b16 %v242
      %v448 = vunpack.c.l.b16 %v243
      %v449 = vunpack.c.l.b16 %v244
      %v450 = vunpack.c.l.b16 %v245
      %v451 = vunpack.c.l.b16 %v246
      %v452 = vunpack.c.l.b16 %v247
      %v453 = vunpack.c.l.b16 %v248
      %v454 = vunpack.c.l.b16 %v249
      %v455 = vunpack.c.l.b16 %v250
      %v456 = vunpack.c.l.b16 %v251
      %v457 = vunpack.c.l.b16 %v252
      %v458 = vunpack.c.l.b16 %v253
      %v459 = vunpack.c.l.b16 %v254
      %v460 = vunpack.c.l.b16 %v255
      %v461 = vunpack.c.l.b16 %v256
      %v462 = vunpack.c.l.b16 %v257
      %v463 = vunpack.c.l.b16 %v258
      %v464 = vunpack.c.l.b16 %v259
      %v465 = vunpack.c.l.b16 %v260
      %v466 = vunpack.c.l.b16 %v261
      %v467 = vunpack.c.l.b16 %v262
      %v468 = vunpack.c.l.b16 %v263
      %v469 = vunpack.c.l.b16 %v264
      %v470 = vunpack.c.l.b16 %v265
      %v471 = vunpack.c.l.b16 %v266
      %v472 = vunpack.c.l.b16 %v267
      %v473 = vunpack.c.l.b16 %v268
      %v474 = vunpack.c.l.b16 %v269
      %v475 = vunpack.c.l.b16 %v270
      %v476 = vunpack.c.l.b16 %v271
      %v477 = vunpack.c.l.b16 %v272
      %v478 = vunpack.c.l.b16 %v273
      %v479 = vunpack.c.l.b16 %v274
      %v480 = vunpack.c.l.b16 %v275
      %v481 = vunpack.c.l.b16 %v276
      %v482 = vunpack.c.l.b16 %v277
      %v483 = vunpack.c.l.b16 %v278
      %v484 = vunpack.c.l.b16 %v279
      %v485 = vunpack.c.l.b16 %v280
      %v486 = vunpack.c.l.b16 %v281
      %v487 = vunpack.c.l.b16 %v282
      %v488 = vunpack.c.l.b16 %v283
      %v489 = vunpack.c.l.b16 %v284
      %v490 = vunpack.c.l.b16 %v285
      %v491 = vunpack.c.l.b16 %v286
      %v492 = vunpack.c.l.b16 %v287
      %v493 = vunpack.c.l.b16 %v288
      %v494 = vunpack.c.l.b16 %v289
      %v495 = vunpack.c.l.b16 %v290
      %v496 = vunpack.c.l.b16 %v291
      %v497 = vunpack.c.l.b16 %v292
      %v498 = vunpack.c.l.b16 %v293
      %v499 = vunpack.c.l.b16 %v294
      %v500 = vunpack.c.l.b16 %v295
      %v501 = vunpack.c.l.b16 %v296
      %v502 = vunpack.c.l.b16 %v303
      %v503 = vpack.c.b16 %v408, %v407
      %v504 = vpack.c.b16 %v410, %v409
      %v505 = vpack.c.b16 %v412, %v411
      %v506 = vpack.c.b16 %v414, %v413
      %v507 = vpack.c.b16 %v416, %v415
      %v508 = vpack.c.b16 %v418, %v417
      %v509 = vpack.c.b16 %v420, %v419
      %v510 = vpack.c.b16 %v422, %v421
      %v511 = vpack.c.b16 %v424, %v423
      %v512 = vpack.c.b16 %v426, %v425
      %v513 = vpack.c.b16 %v428, %v427
      %v514 = vpack.c.b16 %v430, %v429
      %v515 = vpack.c.b16 %v432, %v431
      %v516 = vpack.c.b16 %v434, %v433
      %v517 = vpack.c.b16 %v436, %v435
      %v518 = vpack.c.b16 %v438, %v437
      %v519 = vpack.c.b16 %v440, %v439
      %v520 = vpack.c.b16 %v442, %v441
      %v521 = vpack.c.b16 %v444, %v443
      %v522 = vpack.c.b16 %v446, %v445
      %v523 = vpack.c.b16 %v448, %v447
      %v524 = vpack.c.b16 %v450, %v449
      %v525 = vpack.c.b16 %v452, %v451
      %v526 = vpack.c.b16 %v454, %v453
      %v527 = vpack.c.b16 %v456, %v455
      %v528 = vpack.c.b16 %v458, %v457
      %v529 = vpack.c.b16 %v460, %v459
      %v530 = vpack.c.b16 %v462, %v461
      %v531 = vpack.c.b16 %v464, %v463
      %v532 = vpack.c.b16 %v466, %v465
      %v533 = vpack.c.b16 %v468, %v467
      %v534 = vpack.c.b16 %v470, %v469
      %v535 = vpack.c.b16 %v472, %v471
      %v536 = vpack.c.b16 %v474, %v473
      %v537 = vpack.c.b16 %v476, %v475
      %v538 = vpack.c.b16 %v478, %v477
      %v539 = vpack.c.b16 %v480, %v479
      %v540 = vpack.c.b16 %v482, %v481
      %v541 = vpack.c.b16 %v484, %v483
      %v542 = vpack.c.b16 %v486, %v485
      %v543 = vpack.c.b16 %v488, %v487
      %v544 = vpack.c.b16 %v490, %v489
      %v545 = vpack.c.b16 %v492, %v491
      %v546 = vpack.c.b16 %v494, %v493
      %v547 = vpack.c.b16 %v496, %v495
      %v548 = vpack.c.b16 %v498, %v497
      %v549 = vpack.c.b16 %v500, %v499
      %v550 = vpack.c.b16 %v502, %v501
      %vm551 = vsmask.f32 7424
      %v553 = vshrl.u32 %v503, 16
      %v555 = vshll.u32 %v503, 16
      %v557 = vrot.slane %v555, 1
      %v558 = vor.u32 %v553, %v557
      %v560 = vshll.u32 %v504, 16
      %v562 = vrot.slane %v560, 1
      %v563 = vsel %vm551, %v558, %v562
      %v564 = vshrl.u32 %v504, 16
      %v566 = vor.u32 %v564, %v562
      %v568 = vshll.u32 %v505, 16
      %v570 = vrot.slane %v568, 1
      %v571 = vsel %vm551, %v566, %v570
      %v572 = vshrl.u32 %v505, 16
      %v574 = vor.u32 %v572, %v570
      %v576 = vshll.u32 %v506, 16
      %v578 = vrot.slane %v576, 1
      %v579 = vsel %vm551, %v574, %v578
      %v580 = vshrl.u32 %v506, 16
      %v582 = vor.u32 %v580, %v578
      %v584 = vshll.u32 %v507, 16
      %v586 = vrot.slane %v584, 1
      %v587 = vsel %vm551, %v582, %v586
      %v588 = vshrl.u32 %v507, 16
      %v590 = vor.u32 %v588, %v586
      %v592 = vshll.u32 %v508, 16
      %v594 = vrot.slane %v592, 1
      %v595 = vsel %vm551, %v590, %v594
      %v596 = vshrl.u32 %v508, 16
      %v598 = vor.u32 %v596, %v594
      %v600 = vshll.u32 %v509, 16
      %v602 = vrot.slane %v600, 1
      %v603 = vsel %vm551, %v598, %v602
      %v604 = vshrl.u32 %v509, 16
      %v606 = vor.u32 %v604, %v602
      %v608 = vshll.u32 %v510, 16
      %v610 = vrot.slane %v608, 1
      %v611 = vsel %vm551, %v606, %v610
      %v612 = vshrl.u32 %v510, 16
      %v614 = vor.u32 %v612, %v610
      %v616 = vshll.u32 %v511, 16
      %v618 = vrot.slane %v616, 1
      %v619 = vsel %vm551, %v614, %v618
      %v620 = vshrl.u32 %v511, 16
      %v622 = vor.u32 %v620, %v618
      %v624 = vshll.u32 %v512, 16
      %v626 = vrot.slane %v624, 1
      %v627 = vsel %vm551, %v622, %v626
      %v628 = vshrl.u32 %v512, 16
      %v630 = vor.u32 %v628, %v626
      %v632 = vshll.u32 %v513, 16
      %v634 = vrot.slane %v632, 1
      %v635 = vsel %vm551, %v630, %v634
      %v636 = vshrl.u32 %v513, 16
      %v638 = vor.u32 %v636, %v634
      %v640 = vshll.u32 %v514, 16
      %v642 = vrot.slane %v640, 1
      %v643 = vsel %vm551, %v638, %v642
      %v644 = vshrl.u32 %v514, 16
      %v646 = vor.u32 %v644, %v642
      %v648 = vshll.u32 %v515, 16
      %v650 = vrot.slane %v648, 1
      %v651 = vsel %vm551, %v646, %v650
      %v652 = vshrl.u32 %v515, 16
      %v654 = vor.u32 %v652, %v650
      %v656 = vshll.u32 %v516, 16
      %v658 = vrot.slane %v656, 1
      %v659 = vsel %vm551, %v654, %v658
      %v660 = vshrl.u32 %v516, 16
      %v662 = vor.u32 %v660, %v658
      %v664 = vshll.u32 %v517, 16
      %v666 = vrot.slane %v664, 1
      %v667 = vsel %vm551, %v662, %v666
      %v668 = vshrl.u32 %v517, 16
      %v670 = vor.u32 %v668, %v666
      %v672 = vshll.u32 %v518, 16
      %v674 = vrot.slane %v672, 1
      %v675 = vsel %vm551, %v670, %v674
      %v676 = vshrl.u32 %v518, 16
      %v678 = vor.u32 %v676, %v674
      %v680 = vshll.u32 %v519, 16
      %v682 = vrot.slane %v680, 1
      %v683 = vsel %vm551, %v678, %v682
      %v684 = vshrl.u32 %v519, 16
      %v686 = vor.u32 %v684, %v682
      %v688 = vshll.u32 %v520, 16
      %v690 = vrot.slane %v688, 1
      %v691 = vsel %vm551, %v686, %v690
      %v692 = vshrl.u32 %v520, 16
      %v694 = vor.u32 %v692, %v690
      %v696 = vshll.u32 %v521, 16
      %v698 = vrot.slane %v696, 1
      %v699 = vsel %vm551, %v694, %v698
      %v700 = vshrl.u32 %v521, 16
      %v702 = vor.u32 %v700, %v698
      %v704 = vshll.u32 %v522, 16
      %v706 = vrot.slane %v704, 1
      %v707 = vsel %vm551, %v702, %v706
      %v708 = vshrl.u32 %v522, 16
      %v710 = vor.u32 %v708, %v706
      %v712 = vshll.u32 %v523, 16
      %v714 = vrot.slane %v712, 1
      %v715 = vsel %vm551, %v710, %v714
      %v716 = vshrl.u32 %v523, 16
      %v718 = vor.u32 %v716, %v714
      %v720 = vshll.u32 %v524, 16
      %v722 = vrot.slane %v720, 1
      %v723 = vsel %vm551, %v718, %v722
      %v724 = vshrl.u32 %v524, 16
      %v726 = vor.u32 %v724, %v722
      %v728 = vshll.u32 %v525, 16
      %v730 = vrot.slane %v728, 1
      %v731 = vsel %vm551, %v726, %v730
      %v732 = vshrl.u32 %v525, 16
      %v734 = vor.u32 %v732, %v730
      %v736 = vshll.u32 %v526, 16
      %v738 = vrot.slane %v736, 1
      %v739 = vsel %vm551, %v734, %v738
      %v740 = vshrl.u32 %v526, 16
      %v742 = vor.u32 %v740, %v738
      %v744 = vshll.u32 %v527, 16
      %v746 = vrot.slane %v744, 1
      %v747 = vsel %vm551, %v742, %v746
      %v748 = vshrl.u32 %v527, 16
      %v750 = vor.u32 %v748, %v746
      %v752 = vshll.u32 %v528, 16
      %v754 = vrot.slane %v752, 1
      %v755 = vsel %vm551, %v750, %v754
      %v756 = vshrl.u32 %v528, 16
      %v758 = vor.u32 %v756, %v754
      %v760 = vshll.u32 %v529, 16
      %v762 = vrot.slane %v760, 1
      %v763 = vsel %vm551, %v758, %v762
      %v764 = vshrl.u32 %v529, 16
      %v766 = vor.u32 %v764, %v762
      %v768 = vshll.u32 %v530, 16
      %v770 = vrot.slane %v768, 1
      %v771 = vsel %vm551, %v766, %v770
      %v772 = vshrl.u32 %v530, 16
      %v774 = vor.u32 %v772, %v770
      %v776 = vshll.u32 %v531, 16
      %v778 = vrot.slane %v776, 1
      %v779 = vsel %vm551, %v774, %v778
      %v780 = vshrl.u32 %v531, 16
      %v782 = vor.u32 %v780, %v778
      %v784 = vshll.u32 %v532, 16
      %v786 = vrot.slane %v784, 1
      %v787 = vsel %vm551, %v782, %v786
      %v788 = vshrl.u32 %v532, 16
      %v790 = vor.u32 %v788, %v786
      %v792 = vshll.u32 %v533, 16
      %v794 = vrot.slane %v792, 1
      %v795 = vsel %vm551, %v790, %v794
      %v796 = vshrl.u32 %v533, 16
      %v798 = vor.u32 %v796, %v794
      %v800 = vshll.u32 %v534, 16
      %v802 = vrot.slane %v800, 1
      %v803 = vsel %vm551, %v798, %v802
      %v804 = vshrl.u32 %v534, 16
      %v806 = vor.u32 %v804, %v802
      %v808 = vshll.u32 %v535, 16
      %v810 = vrot.slane %v808, 1
      %v811 = vsel %vm551, %v806, %v810
      %v812 = vshrl.u32 %v535, 16
      %v814 = vor.u32 %v812, %v810
      %v816 = vshll.u32 %v536, 16
      %v818 = vrot.slane %v816, 1
      %v819 = vsel %vm551, %v814, %v818
      %v820 = vshrl.u32 %v536, 16
      %v822 = vor.u32 %v820, %v818
      %v824 = vshll.u32 %v537, 16
      %v826 = vrot.slane %v824, 1
      %v827 = vsel %vm551, %v822, %v826
      %v828 = vshrl.u32 %v537, 16
      %v830 = vor.u32 %v828, %v826
      %v832 = vshll.u32 %v538, 16
      %v834 = vrot.slane %v832, 1
      %v835 = vsel %vm551, %v830, %v834
      %v836 = vshrl.u32 %v538, 16
      %v838 = vor.u32 %v836, %v834
      %v840 = vshll.u32 %v539, 16
      %v842 = vrot.slane %v840, 1
      %v843 = vsel %vm551, %v838, %v842
      %v844 = vshrl.u32 %v539, 16
      %v846 = vor.u32 %v844, %v842
      %v848 = vshll.u32 %v540, 16
      %v850 = vrot.slane %v848, 1
      %v851 = vsel %vm551, %v846, %v850
      %v852 = vshrl.u32 %v540, 16
      %v854 = vor.u32 %v852, %v850
      %v856 = vshll.u32 %v541, 16
      %v858 = vrot.slane %v856, 1
      %v859 = vsel %vm551, %v854, %v858
      %v860 = vshrl.u32 %v541, 16
      %v862 = vor.u32 %v860, %v858
      %v864 = vshll.u32 %v542, 16
      %v866 = vrot.slane %v864, 1
      %v867 = vsel %vm551, %v862, %v866
      %v868 = vshrl.u32 %v542, 16
      %v870 = vor.u32 %v868, %v866
      %v872 = vshll.u32 %v543, 16
      %v874 = vrot.slane %v872, 1
      %v875 = vsel %vm551, %v870, %v874
      %v876 = vshrl.u32 %v543, 16
      %v878 = vor.u32 %v876, %v874
      %v880 = vshll.u32 %v544, 16
      %v882 = vrot.slane %v880, 1
      %v883 = vsel %vm551, %v878, %v882
      %v884 = vshrl.u32 %v544, 16
      %v886 = vor.u32 %v884, %v882
      %v888 = vshll.u32 %v545, 16
      %v890 = vrot.slane %v888, 1
      %v891 = vsel %vm551, %v886, %v890
      %v892 = vshrl.u32 %v545, 16
      %v894 = vor.u32 %v892, %v890
      %v896 = vshll.u32 %v546, 16
      %v898 = vrot.slane %v896, 1
      %v899 = vsel %vm551, %v894, %v898
      %v900 = vshrl.u32 %v546, 16
      %v902 = vor.u32 %v900, %v898
      %v904 = vshll.u32 %v547, 16
      %v906 = vrot.slane %v904, 1
      %v907 = vsel %vm551, %v902, %v906
      %v908 = vshrl.u32 %v547, 16
      %v910 = vor.u32 %v908, %v906
      %v912 = vshll.u32 %v548, 16
      %v914 = vrot.slane %v912, 1
      %v915 = vsel %vm551, %v910, %v914
      %v916 = vshrl.u32 %v548, 16
      %v918 = vor.u32 %v916, %v914
      %v920 = vshll.u32 %v549, 16
      %v922 = vrot.slane %v920, 1
      %v923 = vsel %vm551, %v918, %v922
      %v924 = vshrl.u32 %v549, 16
      %v926 = vor.u32 %v924, %v922
      %v928 = vshll.u32 %v550, 16
      %v930 = vrot.slane %v928, 1
      %v931 = vsel %vm551, %v926, %v930
      %v932 = vshrl.u32 %v550, 16
      %v934 = vor.u32 %v932, %v930
      %v941 = vunpack.c.l.b16 %v305
      %v942 = vunpack.c.l.b16 %v306
      %v943 = vunpack.c.l.b16 %v307
      %v944 = vunpack.c.l.b16 %v308
      %v945 = vunpack.c.l.b16 %v309
      %v946 = vunpack.c.l.b16 %v310
      %v947 = vpack.c.b16 %v942, %v941
      %v948 = vpack.c.b16 %v944, %v943
      %v949 = vpack.c.b16 %v946, %v945
      %vm953 = vcmask 392192
      %v955 = vsel %vm953, %v563, 0
      %v958 = vsel %vm953, %v571, 0
      %v961 = vsel %vm953, %v579, 0
      %v964 = vsel %vm953, %v587, 0
      %v967 = vsel %vm953, %v595, 0
      %v970 = vsel %vm953, %v603, 0
      %v973 = vsel %vm953, %v611, 0
      %v976 = vsel %vm953, %v619, 0
      %v979 = vsel %vm953, %v627, 0
      %v982 = vsel %vm953, %v635, 0
      %v985 = vsel %vm953, %v643, 0
      %v988 = vsel %vm953, %v651, 0
      %v991 = vsel %vm953, %v659, 0
      %v994 = vsel %vm953, %v667, 0
      %v997 = vsel %vm953, %v675, 0
      %v1000 = vsel %vm953, %v683, 0
      %v1003 = vsel %vm953, %v691, 0
      %v1006 = vsel %vm953, %v699, 0
      %v1009 = vsel %vm953, %v707, 0
      %v1012 = vsel %vm953, %v715, 0
      %v1015 = vsel %vm953, %v723, 0
      %v1018 = vsel %vm953, %v731, 0
      %v1021 = vsel %vm953, %v739, 0
      %v1024 = vsel %vm953, %v747, 0
      %v1027 = vsel %vm953, %v755, 0
      %v1030 = vsel %vm953, %v763, 0
      %v1033 = vsel %vm953, %v771, 0
      %v1036 = vsel %vm953, %v779, 0
      %v1039 = vsel %vm953, %v787, 0
      %v1042 = vsel %vm953, %v795, 0
      %v1045 = vsel %vm953, %v803, 0
      %v1048 = vsel %vm953, %v811, 0
      %v1051 = vsel %vm953, %v819, 0
      %v1054 = vsel %vm953, %v827, 0
      %v1057 = vsel %vm953, %v835, 0
      %v1060 = vsel %vm953, %v843, 0
      %v1063 = vsel %vm953, %v851, 0
      %v1066 = vsel %vm953, %v859, 0
      %v1069 = vsel %vm953, %v867, 0
      %v1072 = vsel %vm953, %v875, 0
      %v1075 = vsel %vm953, %v883, 0
      %v1078 = vsel %vm953, %v891, 0
      %v1081 = vsel %vm953, %v899, 0
      %v1084 = vsel %vm953, %v907, 0
      %v1087 = vsel %vm953, %v915, 0
      %v1090 = vsel %vm953, %v923, 0
      %v1093 = vsel %vm953, %v931, 0
      %v1096 = vsel %vm953, %v934, 0
      %1098 = vmatprep.subr.bf16.mxu0 0
      %1099 = vmatpush1.bf16.msra.mxu0 %v947
      %1100 = vmatprep.subr.bf16.mxu0 0
      %1101 = vmatpush1.bf16.msra.mxu0 %v948
      %1102 = vmatprep.subr.bf16.mxu0 0
      %1103 = vmatpush1.bf16.msra.mxu0 %v949
      %1104 = vmatprep.subr.bf16.mxu0 0
      %1105 = vmatpush1.bf16.msra.mxu0 0
      %1106 = vmatprep.subr.bf16.mxu0 0
      %1107 = vmatpush1.bf16.msra.mxu0 0
      %1108 = vmatprep.subr.bf16.mxu0 0
      %1109 = vmatpush1.bf16.msra.mxu0 0
      %1110 = vmatprep.subr.bf16.mxu0 0
      %1111 = vmatpush1.bf16.msra.mxu0 0
      %1112 = vmatprep.subr.bf16.mxu0 0
      %1113 = vmatpush1.bf16.msra.mxu0 0
      %1114 = vmatprep.subr.bf16.mxu0 0
      %1115 = vmatpush1.bf16.msra.mxu0 0
      %1116 = vmatprep.subr.bf16.mxu0 0
      %1117 = vmatpush1.bf16.msra.mxu0 0
      %1118 = vmatprep.subr.bf16.mxu0 0
      %1119 = vmatpush1.bf16.msra.mxu0 0
      %1120 = vmatprep.subr.bf16.mxu0 0
      %1121 = vmatpush1.bf16.msra.mxu0 0
      %1122 = vmatprep.subr.bf16.mxu0 0
      %1123 = vmatpush1.bf16.msra.mxu0 0
      %1124 = vmatprep.subr.bf16.mxu0 0
      %1125 = vmatpush1.bf16.msra.mxu0 0
      %1126 = vmatprep.subr.bf16.mxu0 0
      %1127 = vmatpush1.bf16.msra.mxu0 0
      %1128 = vmatprep.subr.bf16.mxu0 0
      %1129 = vmatpush1.bf16.msra.mxu0 0
      %1130 = vmatprep.mubr.bf16.mxu0 0
      %1131 = vmatmul.mubr.bf16.gmra.mrb[0].mxu0 %v955
      %v1132 = vpop.f32.mrb[0].mxu0
      %v1133 = vadd.f32 0.0, %v1132
      %v1134 = vpop.f32.mrb[0].mxu0
      %v1135 = vpop.f32.mrb[0].mxu0
      %v1136 = vadd.f32 0.0, %v1135
      %v1137 = vpop.f32.mrb[0].mxu0
      %1138 = vmatprep.mubr.bf16.mxu0 0
      %1139 = vmatmul.mubr.bf16.gmra.mrb[0].mxu0 %v958
      %v1140 = vpop.f32.mrb[0].mxu0
      %v1141 = vadd.f32 0.0, %v1140
      %v1142 = vpop.f32.mrb[0].mxu0
      %v1143 = vpop.f32.mrb[0].mxu0
      %v1144 = vadd.f32 0.0, %v1143
      %v1145 = vpop.f32.mrb[0].mxu0
      %1146 = vmatprep.mubr.bf16.mxu0 0
      %1147 = vmatmul.mubr.bf16.gmra.mrb[0].mxu0 %v961
      %v1148 = vpop.f32.mrb[0].mxu0
      %v1149 = vadd.f32 0.0, %v1148
      %v1150 = vpop.f32.mrb[0].mxu0
      %v1151 = vpop.f32.mrb[0].mxu0
      %v1152 = vadd.f32 0.0, %v1151
      %v1153 = vpop.f32.mrb[0].mxu0
      %1154 = vmatprep.mubr.bf16.mxu0 0
      %1155 = vmatmul.mubr.bf16.gmra.mrb[0].mxu0 %v964
      %v1156 = vpop.f32.mrb[0].mxu0
      %v1157 = vadd.f32 0.0, %v1156
      %v1158 = vpop.f32.mrb[0].mxu0
      %v1159 = vpop.f32.mrb[0].mxu0
      %v1160 = vadd.f32 0.0, %v1159
      %v1161 = vpop.f32.mrb[0].mxu0
      %1162 = vmatprep.mubr.bf16.mxu0 0
      %1163 = vmatmul.mubr.bf16.gmra.mrb[0].mxu0 %v967
      %v1164 = vpop.f32.mrb[0].mxu0
      %v1165 = vadd.f32 0.0, %v1164
      %v1166 = vpop.f32.mrb[0].mxu0
      %v1167 = vpop.f32.mrb[0].mxu0
      %v1168 = vadd.f32 0.0, %v1167
      %v1169 = vpop.f32.mrb[0].mxu0
      %1170 = vmatprep.mubr.bf16.mxu0 0
      %1171 = vmatmul.mubr.bf16.gmra.mrb[0].mxu0 %v970
      %v1172 = vpop.f32.mrb[0].mxu0
      %v1173 = vadd.f32 0.0, %v1172
      %v1174 = vpop.f32.mrb[0].mxu0
      %v1175 = vpop.f32.mrb[0].mxu0
      %v1176 = vadd.f32 0.0, %v1175
      %v1177 = vpop.f32.mrb[0].mxu0
      %1178 = vmatprep.mubr.bf16.mxu0 0
      %1179 = vmatmul.mubr.bf16.gmra.mrb[0].mxu0 %v973
      %v1180 = vpop.f32.mrb[0].mxu0
      %v1181 = vadd.f32 0.0, %v1180
      %v1182 = vpop.f32.mrb[0].mxu0
      %v1183 = vpop.f32.mrb[0].mxu0
      %v1184 = vadd.f32 0.0, %v1183
      %v1185 = vpop.f32.mrb[0].mxu0
      %1186 = vmatprep.mubr.bf16.mxu0 0
      %1187 = vmatmul.mubr.bf16.gmra.mrb[0].mxu0 %v976
      %v1188 = vpop.f32.mrb[0].mxu0
      %v1189 = vadd.f32 0.0, %v1188
      %v1190 = vpop.f32.mrb[0].mxu0
      %v1191 = vpop.f32.mrb[0].mxu0
      %v1192 = vadd.f32 0.0, %v1191
      %v1193 = vpop.f32.mrb[0].mxu0
      %1194 = vmatprep.mubr.bf16.mxu0 0
      %1195 = vmatmul.mubr.bf16.gmra.mrb[0].mxu0 %v979
      %v1196 = vpop.f32.mrb[0].mxu0
      %v1197 = vadd.f32 0.0, %v1196
      %v1198 = vpop.f32.mrb[0].mxu0
      %v1199 = vpop.f32.mrb[0].mxu0
      %v1200 = vadd.f32 0.0, %v1199
      %v1201 = vpop.f32.mrb[0].mxu0
      %1202 = vmatprep.mubr.bf16.mxu0 0
      %1203 = vmatmul.mubr.bf16.gmra.mrb[0].mxu0 %v982
      %v1204 = vpop.f32.mrb[0].mxu0
      %v1205 = vadd.f32 0.0, %v1204
      %v1206 = vpop.f32.mrb[0].mxu0
      %v1207 = vpop.f32.mrb[0].mxu0
      %v1208 = vadd.f32 0.0, %v1207
      %v1209 = vpop.f32.mrb[0].mxu0
      %1210 = vmatprep.mubr.bf16.mxu0 0
      %1211 = vmatmul.mubr.bf16.gmra.mrb[0].mxu0 %v985
      %v1212 = vpop.f32.mrb[0].mxu0
      %v1213 = vadd.f32 0.0, %v1212
      %v1214 = vpop.f32.mrb[0].mxu0
      %v1215 = vpop.f32.mrb[0].mxu0
      %v1216 = vadd.f32 0.0, %v1215
      %v1217 = vpop.f32.mrb[0].mxu0
      %1218 = vmatprep.mubr.bf16.mxu0 0
      %1219 = vmatmul.mubr.bf16.gmra.mrb[0].mxu0 %v988
      %v1220 = vpop.f32.mrb[0].mxu0
      %v1221 = vadd.f32 0.0, %v1220
      %v1222 = vpop.f32.mrb[0].mxu0
      %v1223 = vpop.f32.mrb[0].mxu0
      %v1224 = vadd.f32 0.0, %v1223
      %v1225 = vpop.f32.mrb[0].mxu0
      %1226 = vmatprep.mubr.bf16.mxu0 0
      %1227 = vmatmul.mubr.bf16.gmra.mrb[0].mxu0 %v991
      %v1228 = vpop.f32.mrb[0].mxu0
      %v1229 = vadd.f32 0.0, %v1228
      %v1230 = vpop.f32.mrb[0].mxu0
      %v1231 = vpop.f32.mrb[0].mxu0
      %v1232 = vadd.f32 0.0, %v1231
      %v1233 = vpop.f32.mrb[0].mxu0
      %1234 = vmatprep.mubr.bf16.mxu0 0
      %1235 = vmatmul.mubr.bf16.gmra.mrb[0].mxu0 %v994
      %v1236 = vpop.f32.mrb[0].mxu0
      %v1237 = vadd.f32 0.0, %v1236
      %v1238 = vpop.f32.mrb[0].mxu0
      %v1239 = vpop.f32.mrb[0].mxu0
      %v1240 = vadd.f32 0.0, %v1239
      %v1241 = vpop.f32.mrb[0].mxu0
      %1242 = vmatprep.mubr.bf16.mxu0 0
      %1243 = vmatmul.mubr.bf16.gmra.mrb[0].mxu0 %v997
      %v1244 = vpop.f32.mrb[0].mxu0
      %v1245 = vadd.f32 0.0, %v1244
      %v1246 = vpop.f32.mrb[0].mxu0
      %v1247 = vpop.f32.mrb[0].mxu0
      %v1248 = vadd.f32 0.0, %v1247
      %v1249 = vpop.f32.mrb[0].mxu0
      %1250 = vmatprep.mubr.bf16.mxu0 0
      %1251 = vmatmul.mubr.bf16.gmra.mrb[0].mxu0 %v1000
      %v1252 = vpop.f32.mrb[0].mxu0
      %v1253 = vadd.f32 0.0, %v1252
      %v1254 = vpop.f32.mrb[0].mxu0
      %v1255 = vpop.f32.mrb[0].mxu0
      %v1256 = vadd.f32 0.0, %v1255
      %v1257 = vpop.f32.mrb[0].mxu0
      %1258 = vmatprep.mubr.bf16.mxu0 0
      %1259 = vmatmul.mubr.bf16.gmra.mrb[0].mxu0 %v1003
      %v1260 = vpop.f32.mrb[0].mxu0
      %v1261 = vadd.f32 0.0, %v1260
      %v1262 = vpop.f32.mrb[0].mxu0
      %v1263 = vpop.f32.mrb[0].mxu0
      %v1264 = vadd.f32 0.0, %v1263
      %v1265 = vpop.f32.mrb[0].mxu0
      %1266 = vmatprep.mubr.bf16.mxu0 0
      %1267 = vmatmul.mubr.bf16.gmra.mrb[0].mxu0 %v1006
      %v1268 = vpop.f32.mrb[0].mxu0
      %v1269 = vadd.f32 0.0, %v1268
      %v1270 = vpop.f32.mrb[0].mxu0
      %v1271 = vpop.f32.mrb[0].mxu0
      %v1272 = vadd.f32 0.0, %v1271
      %v1273 = vpop.f32.mrb[0].mxu0
      %1274 = vmatprep.mubr.bf16.mxu0 0
      %1275 = vmatmul.mubr.bf16.gmra.mrb[0].mxu0 %v1009
      %v1276 = vpop.f32.mrb[0].mxu0
      %v1277 = vadd.f32 0.0, %v1276
      %v1278 = vpop.f32.mrb[0].mxu0
      %v1279 = vpop.f32.mrb[0].mxu0
      %v1280 = vadd.f32 0.0, %v1279
      %v1281 = vpop.f32.mrb[0].mxu0
      %1282 = vmatprep.mubr.bf16.mxu0 0
      %1283 = vmatmul.mubr.bf16.gmra.mrb[0].mxu0 %v1012
      %v1284 = vpop.f32.mrb[0].mxu0
      %v1285 = vadd.f32 0.0, %v1284
      %v1286 = vpop.f32.mrb[0].mxu0
      %v1287 = vpop.f32.mrb[0].mxu0
      %v1288 = vadd.f32 0.0, %v1287
      %v1289 = vpop.f32.mrb[0].mxu0
      %1290 = vmatprep.mubr.bf16.mxu0 0
      %1291 = vmatmul.mubr.bf16.gmra.mrb[0].mxu0 %v1015
      %v1292 = vpop.f32.mrb[0].mxu0
      %v1293 = vadd.f32 0.0, %v1292
      %v1294 = vpop.f32.mrb[0].mxu0
      %v1295 = vpop.f32.mrb[0].mxu0
      %v1296 = vadd.f32 0.0, %v1295
      %v1297 = vpop.f32.mrb[0].mxu0
      %1298 = vmatprep.mubr.bf16.mxu0 0
      %1299 = vmatmul.mubr.bf16.gmra.mrb[0].mxu0 %v1018
      %v1300 = vpop.f32.mrb[0].mxu0
      %v1301 = vadd.f32 0.0, %v1300
      %v1302 = vpop.f32.mrb[0].mxu0
      %v1303 = vpop.f32.mrb[0].mxu0
      %v1304 = vadd.f32 0.0, %v1303
      %v1305 = vpop.f32.mrb[0].mxu0
      %1306 = vmatprep.mubr.bf16.mxu0 0
      %1307 = vmatmul.mubr.bf16.gmra.mrb[0].mxu0 %v1021
      %v1308 = vpop.f32.mrb[0].mxu0
      %v1309 = vadd.f32 0.0, %v1308
      %v1310 = vpop.f32.mrb[0].mxu0
      %v1311 = vpop.f32.mrb[0].mxu0
      %v1312 = vadd.f32 0.0, %v1311
      %v1313 = vpop.f32.mrb[0].mxu0
      %1314 = vmatprep.mubr.bf16.mxu0 0
      %1315 = vmatmul.mubr.bf16.gmra.mrb[0].mxu0 %v1024
      %v1316 = vpop.f32.mrb[0].mxu0
      %v1317 = vadd.f32 0.0, %v1316
      %v1318 = vpop.f32.mrb[0].mxu0
      %v1319 = vpop.f32.mrb[0].mxu0
      %v1320 = vadd.f32 0.0, %v1319
      %v1321 = vpop.f32.mrb[0].mxu0
      %1322 = vmatprep.mubr.bf16.mxu0 0
      %1323 = vmatmul.mubr.bf16.gmra.mrb[0].mxu0 %v1027
      %v1324 = vpop.f32.mrb[0].mxu0
      %v1325 = vadd.f32 0.0, %v1324
      %v1326 = vpop.f32.mrb[0].mxu0
      %v1327 = vpop.f32.mrb[0].mxu0
      %v1328 = vadd.f32 0.0, %v1327
      %v1329 = vpop.f32.mrb[0].mxu0
      %1330 = vmatprep.mubr.bf16.mxu0 0
      %1331 = vmatmul.mubr.bf16.gmra.mrb[0].mxu0 %v1030
      %v1332 = vpop.f32.mrb[0].mxu0
      %v1333 = vadd.f32 0.0, %v1332
      %v1334 = vpop.f32.mrb[0].mxu0
      %v1335 = vpop.f32.mrb[0].mxu0
      %v1336 = vadd.f32 0.0, %v1335
      %v1337 = vpop.f32.mrb[0].mxu0
      %1338 = vmatprep.mubr.bf16.mxu0 0
      %1339 = vmatmul.mubr.bf16.gmra.mrb[0].mxu0 %v1033
      %v1340 = vpop.f32.mrb[0].mxu0
      %v1341 = vadd.f32 0.0, %v1340
      %v1342 = vpop.f32.mrb[0].mxu0
      %v1343 = vpop.f32.mrb[0].mxu0
      %v1344 = vadd.f32 0.0, %v1343
      %v1345 = vpop.f32.mrb[0].mxu0
      %1346 = vmatprep.mubr.bf16.mxu0 0
      %1347 = vmatmul.mubr.bf16.gmra.mrb[0].mxu0 %v1036
      %v1348 = vpop.f32.mrb[0].mxu0
      %v1349 = vadd.f32 0.0, %v1348
      %v1350 = vpop.f32.mrb[0].mxu0
      %v1351 = vpop.f32.mrb[0].mxu0
      %v1352 = vadd.f32 0.0, %v1351
      %v1353 = vpop.f32.mrb[0].mxu0
      %1354 = vmatprep.mubr.bf16.mxu0 0
      %1355 = vmatmul.mubr.bf16.gmra.mrb[0].mxu0 %v1039
      %v1356 = vpop.f32.mrb[0].mxu0
      %v1357 = vadd.f32 0.0, %v1356
      %v1358 = vpop.f32.mrb[0].mxu0
      %v1359 = vpop.f32.mrb[0].mxu0
      %v1360 = vadd.f32 0.0, %v1359
      %v1361 = vpop.f32.mrb[0].mxu0
      %1362 = vmatprep.mubr.bf16.mxu0 0
      %1363 = vmatmul.mubr.bf16.gmra.mrb[0].mxu0 %v1042
      %v1364 = vpop.f32.mrb[0].mxu0
      %v1365 = vadd.f32 0.0, %v1364
      %v1366 = vpop.f32.mrb[0].mxu0
      %v1367 = vpop.f32.mrb[0].mxu0
      %v1368 = vadd.f32 0.0, %v1367
      %v1369 = vpop.f32.mrb[0].mxu0
      %1370 = vmatprep.mubr.bf16.mxu0 0
      %1371 = vmatmul.mubr.bf16.gmra.mrb[0].mxu0 %v1045
      %v1372 = vpop.f32.mrb[0].mxu0
      %v1373 = vadd.f32 0.0, %v1372
      %v1374 = vpop.f32.mrb[0].mxu0
      %v1375 = vpop.f32.mrb[0].mxu0
      %v1376 = vadd.f32 0.0, %v1375
      %v1377 = vpop.f32.mrb[0].mxu0
      %1378 = vmatprep.mubr.bf16.mxu0 0
      %1379 = vmatmul.mubr.bf16.gmra.mrb[0].mxu0 %v1048
      %v1380 = vpop.f32.mrb[0].mxu0
      %v1381 = vadd.f32 0.0, %v1380
      %v1382 = vpop.f32.mrb[0].mxu0
      %v1383 = vpop.f32.mrb[0].mxu0
      %v1384 = vadd.f32 0.0, %v1383
      %v1385 = vpop.f32.mrb[0].mxu0
      %1386 = vmatprep.mubr.bf16.mxu0 0
      %1387 = vmatmul.mubr.bf16.gmra.mrb[0].mxu0 %v1051
      %v1388 = vpop.f32.mrb[0].mxu0
      %v1389 = vadd.f32 0.0, %v1388
      %v1390 = vpop.f32.mrb[0].mxu0
      %v1391 = vpop.f32.mrb[0].mxu0
      %v1392 = vadd.f32 0.0, %v1391
      %v1393 = vpop.f32.mrb[0].mxu0
      %1394 = vmatprep.mubr.bf16.mxu0 0
      %1395 = vmatmul.mubr.bf16.gmra.mrb[0].mxu0 %v1054
      %v1396 = vpop.f32.mrb[0].mxu0
      %v1397 = vadd.f32 0.0, %v1396
      %v1398 = vpop.f32.mrb[0].mxu0
      %v1399 = vpop.f32.mrb[0].mxu0
      %v1400 = vadd.f32 0.0, %v1399
      %v1401 = vpop.f32.mrb[0].mxu0
      %1402 = vmatprep.mubr.bf16.mxu0 0
      %1403 = vmatmul.mubr.bf16.gmra.mrb[0].mxu0 %v1057
      %v1404 = vpop.f32.mrb[0].mxu0
      %v1405 = vadd.f32 0.0, %v1404
      %v1406 = vpop.f32.mrb[0].mxu0
      %v1407 = vpop.f32.mrb[0].mxu0
      %v1408 = vadd.f32 0.0, %v1407
      %v1409 = vpop.f32.mrb[0].mxu0
      %1410 = vmatprep.mubr.bf16.mxu0 0
      %1411 = vmatmul.mubr.bf16.gmra.mrb[0].mxu0 %v1060
      %v1412 = vpop.f32.mrb[0].mxu0
      %v1413 = vadd.f32 0.0, %v1412
      %v1414 = vpop.f32.mrb[0].mxu0
      %v1415 = vpop.f32.mrb[0].mxu0
      %v1416 = vadd.f32 0.0, %v1415
      %v1417 = vpop.f32.mrb[0].mxu0
      %1418 = vmatprep.mubr.bf16.mxu0 0
      %1419 = vmatmul.mubr.bf16.gmra.mrb[0].mxu0 %v1063
      %v1420 = vpop.f32.mrb[0].mxu0
      %v1421 = vadd.f32 0.0, %v1420
      %v1422 = vpop.f32.mrb[0].mxu0
      %v1423 = vpop.f32.mrb[0].mxu0
      %v1424 = vadd.f32 0.0, %v1423
      %v1425 = vpop.f32.mrb[0].mxu0
      %1426 = vmatprep.mubr.bf16.mxu0 0
      %1427 = vmatmul.mubr.bf16.gmra.mrb[0].mxu0 %v1066
      %v1428 = vpop.f32.mrb[0].mxu0
      %v1429 = vadd.f32 0.0, %v1428
      %v1430 = vpop.f32.mrb[0].mxu0
      %v1431 = vpop.f32.mrb[0].mxu0
      %v1432 = vadd.f32 0.0, %v1431
      %v1433 = vpop.f32.mrb[0].mxu0
      %1434 = vmatprep.mubr.bf16.mxu0 0
      %1435 = vmatmul.mubr.bf16.gmra.mrb[0].mxu0 %v1069
      %v1436 = vpop.f32.mrb[0].mxu0
      %v1437 = vadd.f32 0.0, %v1436
      %v1438 = vpop.f32.mrb[0].mxu0
      %v1439 = vpop.f32.mrb[0].mxu0
      %v1440 = vadd.f32 0.0, %v1439
      %v1441 = vpop.f32.mrb[0].mxu0
      %1442 = vmatprep.mubr.bf16.mxu0 0
      %1443 = vmatmul.mubr.bf16.gmra.mrb[0].mxu0 %v1072
      %v1444 = vpop.f32.mrb[0].mxu0
      %v1445 = vadd.f32 0.0, %v1444
      %v1446 = vpop.f32.mrb[0].mxu0
      %v1447 = vpop.f32.mrb[0].mxu0
      %v1448 = vadd.f32 0.0, %v1447
      %v1449 = vpop.f32.mrb[0].mxu0
      %1450 = vmatprep.mubr.bf16.mxu0 0
      %1451 = vmatmul.mubr.bf16.gmra.mrb[0].mxu0 %v1075
      %v1452 = vpop.f32.mrb[0].mxu0
      %v1453 = vadd.f32 0.0, %v1452
      %v1454 = vpop.f32.mrb[0].mxu0
      %v1455 = vpop.f32.mrb[0].mxu0
      %v1456 = vadd.f32 0.0, %v1455
      %v1457 = vpop.f32.mrb[0].mxu0
      %1458 = vmatprep.mubr.bf16.mxu0 0
      %1459 = vmatmul.mubr.bf16.gmra.mrb[0].mxu0 %v1078
      %v1460 = vpop.f32.mrb[0].mxu0
      %v1461 = vadd.f32 0.0, %v1460
      %v1462 = vpop.f32.mrb[0].mxu0
      %v1463 = vpop.f32.mrb[0].mxu0
      %v1464 = vadd.f32 0.0, %v1463
      %v1465 = vpop.f32.mrb[0].mxu0
      %1466 = vmatprep.mubr.bf16.mxu0 0
      %1467 = vmatmul.mubr.bf16.gmra.mrb[0].mxu0 %v1081
      %v1468 = vpop.f32.mrb[0].mxu0
      %v1469 = vadd.f32 0.0, %v1468
      %v1470 = vpop.f32.mrb[0].mxu0
      %v1471 = vpop.f32.mrb[0].mxu0
      %v1472 = vadd.f32 0.0, %v1471
      %v1473 = vpop.f32.mrb[0].mxu0
      %1474 = vmatprep.mubr.bf16.mxu0 0
      %1475 = vmatmul.mubr.bf16.gmra.mrb[0].mxu0 %v1084
      %v1476 = vpop.f32.mrb[0].mxu0
      %v1477 = vadd.f32 0.0, %v1476
      %v1478 = vpop.f32.mrb[0].mxu0
      %v1479 = vpop.f32.mrb[0].mxu0
      %v1480 = vadd.f32 0.0, %v1479
      %v1481 = vpop.f32.mrb[0].mxu0
      %1482 = vmatprep.mubr.bf16.mxu0 0
      %1483 = vmatmul.mubr.bf16.gmra.mrb[0].mxu0 %v1087
      %v1484 = vpop.f32.mrb[0].mxu0
      %v1485 = vadd.f32 0.0, %v1484
      %v1486 = vpop.f32.mrb[0].mxu0
      %v1487 = vpop.f32.mrb[0].mxu0
      %v1488 = vadd.f32 0.0, %v1487
      %v1489 = vpop.f32.mrb[0].mxu0
      %1490 = vmatprep.mubr.bf16.mxu0 0
      %1491 = vmatmul.mubr.bf16.gmra.mrb[0].mxu0 %v1090
      %v1492 = vpop.f32.mrb[0].mxu0
      %v1493 = vadd.f32 0.0, %v1492
      %v1494 = vpop.f32.mrb[0].mxu0
      %v1495 = vpop.f32.mrb[0].mxu0
      %v1496 = vadd.f32 0.0, %v1495
      %v1497 = vpop.f32.mrb[0].mxu0
      %1498 = vmatprep.mubr.bf16.mxu0 0
      %1499 = vmatmul.mubr.bf16.gmra.mrb[0].mxu0 %v1093
      %v1500 = vpop.f32.mrb[0].mxu0
      %v1501 = vadd.f32 0.0, %v1500
      %v1502 = vpop.f32.mrb[0].mxu0
      %v1503 = vpop.f32.mrb[0].mxu0
      %v1504 = vadd.f32 0.0, %v1503
      %v1505 = vpop.f32.mrb[0].mxu0
      %1506 = vmatprep.mubr.bf16.mxu0 0
      %1507 = vmatmul.mubr.bf16.gmra.mrb[0].mxu0 %v1096
      %v1508 = vpop.f32.mrb[0].mxu0
      %v1509 = vadd.f32 0.0, %v1508
      %v1510 = vpop.f32.mrb[0].mxu0
      %v1511 = vpop.f32.mrb[0].mxu0
      %v1512 = vpop.f32.mrb[0].mxu0
      %1513 = vdwg.mxu0
      %v1514 = vpack.c.b16 %v501, %v501
      %v1521 = vunpack.c.l.b16 %v297
      %v1522 = vunpack.c.l.b16 %v298
      %v1523 = vunpack.c.l.b16 %v299
      %v1524 = vunpack.c.l.b16 %v300
      %v1525 = vunpack.c.l.b16 %v301
      %v1526 = vunpack.c.l.b16 %v302
      %v1527 = vpack.c.b16 %v1522, %v1521
      %v1528 = vpack.c.b16 %v1524, %v1523
      %v1529 = vpack.c.b16 %v1526, %v1525
      %v1533 = vsel %vm953, %v503, 0
      %v1535 = vsel %vm953, %v504, 0
      %v1537 = vsel %vm953, %v505, 0
      %v1539 = vsel %vm953, %v506, 0
      %v1541 = vsel %vm953, %v507, 0
      %v1543 = vsel %vm953, %v508, 0
      %v1545 = vsel %vm953, %v509, 0
      %v1547 = vsel %vm953, %v510, 0
      %v1549 = vsel %vm953, %v511, 0
      %v1551 = vsel %vm953, %v512, 0
      %v1553 = vsel %vm953, %v513, 0
      %v1555 = vsel %vm953, %v514, 0
      %v1557 = vsel %vm953, %v515, 0
      %v1559 = vsel %vm953, %v516, 0
      %v1561 = vsel %vm953, %v517, 0
      %v1563 = vsel %vm953, %v518, 0
      %v1565 = vsel %vm953, %v519, 0
      %v1567 = vsel %vm953, %v520, 0
      %v1569 = vsel %vm953, %v521, 0
      %v1571 = vsel %vm953, %v522, 0
      %v1573 = vsel %vm953, %v523, 0
      %v1575 = vsel %vm953, %v524, 0
      %v1577 = vsel %vm953, %v525, 0
      %v1579 = vsel %vm953, %v526, 0
      %v1581 = vsel %vm953, %v527, 0
      %v1583 = vsel %vm953, %v528, 0
      %v1585 = vsel %vm953, %v529, 0
      %v1587 = vsel %vm953, %v530, 0
      %v1589 = vsel %vm953, %v531, 0
      %v1591 = vsel %vm953, %v532, 0
      %v1593 = vsel %vm953, %v533, 0
      %v1595 = vsel %vm953, %v534, 0
      %v1597 = vsel %vm953, %v535, 0
      %v1599 = vsel %vm953, %v536, 0
      %v1601 = vsel %vm953, %v537, 0
      %v1603 = vsel %vm953, %v538, 0
      %v1605 = vsel %vm953, %v539, 0
      %v1607 = vsel %vm953, %v540, 0
      %v1609 = vsel %vm953, %v541, 0
      %v1611 = vsel %vm953, %v542, 0
      %v1613 = vsel %vm953, %v543, 0
      %v1615 = vsel %vm953, %v544, 0
      %v1617 = vsel %vm953, %v545, 0
      %v1619 = vsel %vm953, %v546, 0
      %v1621 = vsel %vm953, %v547, 0
      %v1623 = vsel %vm953, %v548, 0
      %v1625 = vsel %vm953, %v549, 0
      %v1628 = vsel %vm953, %v1514, 0
      %1630 = vmatprep.subr.bf16.mxu0 0
      %1631 = vmatpush1.bf16.msra.mxu0 %v1527
      %1632 = vmatprep.subr.bf16.mxu0 0
      %1633 = vmatpush1.bf16.msra.mxu0 %v1528
      %1634 = vmatprep.subr.bf16.mxu0 0
      %1635 = vmatpush1.bf16.msra.mxu0 %v1529
      %1636 = vmatprep.subr.bf16.mxu0 0
      %1637 = vmatpush1.bf16.msra.mxu0 0
      %1638 = vmatprep.subr.bf16.mxu0 0
      %1639 = vmatpush1.bf16.msra.mxu0 0
      %1640 = vmatprep.subr.bf16.mxu0 0
      %1641 = vmatpush1.bf16.msra.mxu0 0
      %1642 = vmatprep.subr.bf16.mxu0 0
      %1643 = vmatpush1.bf16.msra.mxu0 0
      %1644 = vmatprep.subr.bf16.mxu0 0
      %1645 = vmatpush1.bf16.msra.mxu0 0
      %1646 = vmatprep.subr.bf16.mxu0 0
      %1647 = vmatpush1.bf16.msra.mxu0 0
      %1648 = vmatprep.subr.bf16.mxu0 0
      %1649 = vmatpush1.bf16.msra.mxu0 0
      %1650 = vmatprep.subr.bf16.mxu0 0
      %1651 = vmatpush1.bf16.msra.mxu0 0
      %1652 = vmatprep.subr.bf16.mxu0 0
      %1653 = vmatpush1.bf16.msra.mxu0 0
      %1654 = vmatprep.subr.bf16.mxu0 0
      %1655 = vmatpush1.bf16.msra.mxu0 0
      %1656 = vmatprep.subr.bf16.mxu0 0
      %1657 = vmatpush1.bf16.msra.mxu0 0
      %1658 = vmatprep.subr.bf16.mxu0 0
      %1659 = vmatpush1.bf16.msra.mxu0 0
      %1660 = vmatprep.subr.bf16.mxu0 0
      %1661 = vmatpush1.bf16.msra.mxu0 0
      %1662 = vmatprep.mubr.bf16.mxu0 0
      %1663 = vmatmul.mubr.bf16.gmra.mrb[0].mxu0 %v1533
      %v1664 = vpop.f32.mrb[0].mxu0
      %v1665 = vadd.f32 %v1133, %v1664
      %v1666 = vpop.f32.mrb[0].mxu0
      %v1667 = vpop.f32.mrb[0].mxu0
      %v1668 = vadd.f32 %v1136, %v1667
      %v1669 = vpop.f32.mrb[0].mxu0
      %1670 = vmatprep.mubr.bf16.mxu0 0
      %1671 = vmatmul.mubr.bf16.gmra.mrb[0].mxu0 %v1535
      %v1672 = vpop.f32.mrb[0].mxu0
      %v1673 = vadd.f32 %v1141, %v1672
      %v1674 = vpop.f32.mrb[0].mxu0
      %v1675 = vpop.f32.mrb[0].mxu0
      %v1676 = vadd.f32 %v1144, %v1675
      %v1677 = vpop.f32.mrb[0].mxu0
      %1678 = vmatprep.mubr.bf16.mxu0 0
      %1679 = vmatmul.mubr.bf16.gmra.mrb[0].mxu0 %v1537
      %v1680 = vpop.f32.mrb[0].mxu0
      %v1681 = vadd.f32 %v1149, %v1680
      %v1682 = vpop.f32.mrb[0].mxu0
      %v1683 = vpop.f32.mrb[0].mxu0
      %v1684 = vadd.f32 %v1152, %v1683
      %v1685 = vpop.f32.mrb[0].mxu0
      %1686 = vmatprep.mubr.bf16.mxu0 0
      %1687 = vmatmul.mubr.bf16.gmra.mrb[0].mxu0 %v1539
      %v1688 = vpop.f32.mrb[0].mxu0
      %v1689 = vadd.f32 %v1157, %v1688
      %v1690 = vpop.f32.mrb[0].mxu0
      %v1691 = vpop.f32.mrb[0].mxu0
      %v1692 = vadd.f32 %v1160, %v1691
      %v1693 = vpop.f32.mrb[0].mxu0
      %1694 = vmatprep.mubr.bf16.mxu0 0
      %1695 = vmatmul.mubr.bf16.gmra.mrb[0].mxu0 %v1541
      %v1696 = vpop.f32.mrb[0].mxu0
      %v1697 = vadd.f32 %v1165, %v1696
      %v1698 = vpop.f32.mrb[0].mxu0
      %v1699 = vpop.f32.mrb[0].mxu0
      %v1700 = vadd.f32 %v1168, %v1699
      %v1701 = vpop.f32.mrb[0].mxu0
      %1702 = vmatprep.mubr.bf16.mxu0 0
      %1703 = vmatmul.mubr.bf16.gmra.mrb[0].mxu0 %v1543
      %v1704 = vpop.f32.mrb[0].mxu0
      %v1705 = vadd.f32 %v1173, %v1704
      %v1706 = vpop.f32.mrb[0].mxu0
      %v1707 = vpop.f32.mrb[0].mxu0
      %v1708 = vadd.f32 %v1176, %v1707
      %v1709 = vpop.f32.mrb[0].mxu0
      %1710 = vmatprep.mubr.bf16.mxu0 0
      %1711 = vmatmul.mubr.bf16.gmra.mrb[0].mxu0 %v1545
      %v1712 = vpop.f32.mrb[0].mxu0
      %v1713 = vadd.f32 %v1181, %v1712
      %v1714 = vpop.f32.mrb[0].mxu0
      %v1715 = vpop.f32.mrb[0].mxu0
      %v1716 = vadd.f32 %v1184, %v1715
      %v1717 = vpop.f32.mrb[0].mxu0
      %1718 = vmatprep.mubr.bf16.mxu0 0
      %1719 = vmatmul.mubr.bf16.gmra.mrb[0].mxu0 %v1547
      %v1720 = vpop.f32.mrb[0].mxu0
      %v1721 = vadd.f32 %v1189, %v1720
      %v1722 = vpop.f32.mrb[0].mxu0
      %v1723 = vpop.f32.mrb[0].mxu0
      %v1724 = vadd.f32 %v1192, %v1723
      %v1725 = vpop.f32.mrb[0].mxu0
      %1726 = vmatprep.mubr.bf16.mxu0 0
      %1727 = vmatmul.mubr.bf16.gmra.mrb[0].mxu0 %v1549
      %v1728 = vpop.f32.mrb[0].mxu0
      %v1729 = vadd.f32 %v1197, %v1728
      %v1730 = vpop.f32.mrb[0].mxu0
      %v1731 = vpop.f32.mrb[0].mxu0
      %v1732 = vadd.f32 %v1200, %v1731
      %v1733 = vpop.f32.mrb[0].mxu0
      %1734 = vmatprep.mubr.bf16.mxu0 0
      %1735 = vmatmul.mubr.bf16.gmra.mrb[0].mxu0 %v1551
      %v1736 = vpop.f32.mrb[0].mxu0
      %v1737 = vadd.f32 %v1205, %v1736
      %v1738 = vpop.f32.mrb[0].mxu0
      %v1739 = vpop.f32.mrb[0].mxu0
      %v1740 = vadd.f32 %v1208, %v1739
      %v1741 = vpop.f32.mrb[0].mxu0
      %1742 = vmatprep.mubr.bf16.mxu0 0
      %1743 = vmatmul.mubr.bf16.gmra.mrb[0].mxu0 %v1553
      %v1744 = vpop.f32.mrb[0].mxu0
      %v1745 = vadd.f32 %v1213, %v1744
      %v1746 = vpop.f32.mrb[0].mxu0
      %v1747 = vpop.f32.mrb[0].mxu0
      %v1748 = vadd.f32 %v1216, %v1747
      %v1749 = vpop.f32.mrb[0].mxu0
      %1750 = vmatprep.mubr.bf16.mxu0 0
      %1751 = vmatmul.mubr.bf16.gmra.mrb[0].mxu0 %v1555
      %v1752 = vpop.f32.mrb[0].mxu0
      %v1753 = vadd.f32 %v1221, %v1752
      %v1754 = vpop.f32.mrb[0].mxu0
      %v1755 = vpop.f32.mrb[0].mxu0
      %v1756 = vadd.f32 %v1224, %v1755
      %v1757 = vpop.f32.mrb[0].mxu0
      %1758 = vmatprep.mubr.bf16.mxu0 0
      %1759 = vmatmul.mubr.bf16.gmra.mrb[0].mxu0 %v1557
      %v1760 = vpop.f32.mrb[0].mxu0
      %v1761 = vadd.f32 %v1229, %v1760
      %v1762 = vpop.f32.mrb[0].mxu0
      %v1763 = vpop.f32.mrb[0].mxu0
      %v1764 = vadd.f32 %v1232, %v1763
      %v1765 = vpop.f32.mrb[0].mxu0
      %1766 = vmatprep.mubr.bf16.mxu0 0
      %1767 = vmatmul.mubr.bf16.gmra.mrb[0].mxu0 %v1559
      %v1768 = vpop.f32.mrb[0].mxu0
      %v1769 = vadd.f32 %v1237, %v1768
      %v1770 = vpop.f32.mrb[0].mxu0
      %v1771 = vpop.f32.mrb[0].mxu0
      %v1772 = vadd.f32 %v1240, %v1771
      %v1773 = vpop.f32.mrb[0].mxu0
      %1774 = vmatprep.mubr.bf16.mxu0 0
      %1775 = vmatmul.mubr.bf16.gmra.mrb[0].mxu0 %v1561
      %v1776 = vpop.f32.mrb[0].mxu0
      %v1777 = vadd.f32 %v1245, %v1776
      %v1778 = vpop.f32.mrb[0].mxu0
      %v1779 = vpop.f32.mrb[0].mxu0
      %v1780 = vadd.f32 %v1248, %v1779
      %v1781 = vpop.f32.mrb[0].mxu0
      %1782 = vmatprep.mubr.bf16.mxu0 0
      %1783 = vmatmul.mubr.bf16.gmra.mrb[0].mxu0 %v1563
      %v1784 = vpop.f32.mrb[0].mxu0
      %v1785 = vadd.f32 %v1253, %v1784
      %v1786 = vpop.f32.mrb[0].mxu0
      %v1787 = vpop.f32.mrb[0].mxu0
      %v1788 = vadd.f32 %v1256, %v1787
      %v1789 = vpop.f32.mrb[0].mxu0
      %1790 = vmatprep.mubr.bf16.mxu0 0
      %1791 = vmatmul.mubr.bf16.gmra.mrb[0].mxu0 %v1565
      %v1792 = vpop.f32.mrb[0].mxu0
      %v1793 = vadd.f32 %v1261, %v1792
      %v1794 = vpop.f32.mrb[0].mxu0
      %v1795 = vpop.f32.mrb[0].mxu0
      %v1796 = vadd.f32 %v1264, %v1795
      %v1797 = vpop.f32.mrb[0].mxu0
      %1798 = vmatprep.mubr.bf16.mxu0 0
      %1799 = vmatmul.mubr.bf16.gmra.mrb[0].mxu0 %v1567
      %v1800 = vpop.f32.mrb[0].mxu0
      %v1801 = vadd.f32 %v1269, %v1800
      %v1802 = vpop.f32.mrb[0].mxu0
      %v1803 = vpop.f32.mrb[0].mxu0
      %v1804 = vadd.f32 %v1272, %v1803
      %v1805 = vpop.f32.mrb[0].mxu0
      %1806 = vmatprep.mubr.bf16.mxu0 0
      %1807 = vmatmul.mubr.bf16.gmra.mrb[0].mxu0 %v1569
      %v1808 = vpop.f32.mrb[0].mxu0
      %v1809 = vadd.f32 %v1277, %v1808
      %v1810 = vpop.f32.mrb[0].mxu0
      %v1811 = vpop.f32.mrb[0].mxu0
      %v1812 = vadd.f32 %v1280, %v1811
      %v1813 = vpop.f32.mrb[0].mxu0
      %1814 = vmatprep.mubr.bf16.mxu0 0
      %1815 = vmatmul.mubr.bf16.gmra.mrb[0].mxu0 %v1571
      %v1816 = vpop.f32.mrb[0].mxu0
      %v1817 = vadd.f32 %v1285, %v1816
      %v1818 = vpop.f32.mrb[0].mxu0
      %v1819 = vpop.f32.mrb[0].mxu0
      %v1820 = vadd.f32 %v1288, %v1819
      %v1821 = vpop.f32.mrb[0].mxu0
      %1822 = vmatprep.mubr.bf16.mxu0 0
      %1823 = vmatmul.mubr.bf16.gmra.mrb[0].mxu0 %v1573
      %v1824 = vpop.f32.mrb[0].mxu0
      %v1825 = vadd.f32 %v1293, %v1824
      %v1826 = vpop.f32.mrb[0].mxu0
      %v1827 = vpop.f32.mrb[0].mxu0
      %v1828 = vadd.f32 %v1296, %v1827
      %v1829 = vpop.f32.mrb[0].mxu0
      %1830 = vmatprep.mubr.bf16.mxu0 0
      %1831 = vmatmul.mubr.bf16.gmra.mrb[0].mxu0 %v1575
      %v1832 = vpop.f32.mrb[0].mxu0
      %v1833 = vadd.f32 %v1301, %v1832
      %v1834 = vpop.f32.mrb[0].mxu0
      %v1835 = vpop.f32.mrb[0].mxu0
      %v1836 = vadd.f32 %v1304, %v1835
      %v1837 = vpop.f32.mrb[0].mxu0
      %1838 = vmatprep.mubr.bf16.mxu0 0
      %1839 = vmatmul.mubr.bf16.gmra.mrb[0].mxu0 %v1577
      %v1840 = vpop.f32.mrb[0].mxu0
      %v1841 = vadd.f32 %v1309, %v1840
      %v1842 = vpop.f32.mrb[0].mxu0
      %v1843 = vpop.f32.mrb[0].mxu0
      %v1844 = vadd.f32 %v1312, %v1843
      %v1845 = vpop.f32.mrb[0].mxu0
      %1846 = vmatprep.mubr.bf16.mxu0 0
      %1847 = vmatmul.mubr.bf16.gmra.mrb[0].mxu0 %v1579
      %v1848 = vpop.f32.mrb[0].mxu0
      %v1849 = vadd.f32 %v1317, %v1848
      %v1850 = vpop.f32.mrb[0].mxu0
      %v1851 = vpop.f32.mrb[0].mxu0
      %v1852 = vadd.f32 %v1320, %v1851
      %v1853 = vpop.f32.mrb[0].mxu0
      %1854 = vmatprep.mubr.bf16.mxu0 0
      %1855 = vmatmul.mubr.bf16.gmra.mrb[0].mxu0 %v1581
      %v1856 = vpop.f32.mrb[0].mxu0
      %v1857 = vadd.f32 %v1325, %v1856
      %v1858 = vpop.f32.mrb[0].mxu0
      %v1859 = vpop.f32.mrb[0].mxu0
      %v1860 = vadd.f32 %v1328, %v1859
      %v1861 = vpop.f32.mrb[0].mxu0
      %1862 = vmatprep.mubr.bf16.mxu0 0
      %1863 = vmatmul.mubr.bf16.gmra.mrb[0].mxu0 %v1583
      %v1864 = vpop.f32.mrb[0].mxu0
      %v1865 = vadd.f32 %v1333, %v1864
      %v1866 = vpop.f32.mrb[0].mxu0
      %v1867 = vpop.f32.mrb[0].mxu0
      %v1868 = vadd.f32 %v1336, %v1867
      %v1869 = vpop.f32.mrb[0].mxu0
      %1870 = vmatprep.mubr.bf16.mxu0 0
      %1871 = vmatmul.mubr.bf16.gmra.mrb[0].mxu0 %v1585
      %v1872 = vpop.f32.mrb[0].mxu0
      %v1873 = vadd.f32 %v1341, %v1872
      %v1874 = vpop.f32.mrb[0].mxu0
      %v1875 = vpop.f32.mrb[0].mxu0
      %v1876 = vadd.f32 %v1344, %v1875
      %v1877 = vpop.f32.mrb[0].mxu0
      %1878 = vmatprep.mubr.bf16.mxu0 0
      %1879 = vmatmul.mubr.bf16.gmra.mrb[0].mxu0 %v1587
      %v1880 = vpop.f32.mrb[0].mxu0
      %v1881 = vadd.f32 %v1349, %v1880
      %v1882 = vpop.f32.mrb[0].mxu0
      %v1883 = vpop.f32.mrb[0].mxu0
      %v1884 = vadd.f32 %v1352, %v1883
      %v1885 = vpop.f32.mrb[0].mxu0
      %1886 = vmatprep.mubr.bf16.mxu0 0
      %1887 = vmatmul.mubr.bf16.gmra.mrb[0].mxu0 %v1589
      %v1888 = vpop.f32.mrb[0].mxu0
      %v1889 = vadd.f32 %v1357, %v1888
      %v1890 = vpop.f32.mrb[0].mxu0
      %v1891 = vpop.f32.mrb[0].mxu0
      %v1892 = vadd.f32 %v1360, %v1891
      %v1893 = vpop.f32.mrb[0].mxu0
      %1894 = vmatprep.mubr.bf16.mxu0 0
      %1895 = vmatmul.mubr.bf16.gmra.mrb[0].mxu0 %v1591
      %v1896 = vpop.f32.mrb[0].mxu0
      %v1897 = vadd.f32 %v1365, %v1896
      %v1898 = vpop.f32.mrb[0].mxu0
      %v1899 = vpop.f32.mrb[0].mxu0
      %v1900 = vadd.f32 %v1368, %v1899
      %v1901 = vpop.f32.mrb[0].mxu0
      %1902 = vmatprep.mubr.bf16.mxu0 0
      %1903 = vmatmul.mubr.bf16.gmra.mrb[0].mxu0 %v1593
      %v1904 = vpop.f32.mrb[0].mxu0
      %v1905 = vadd.f32 %v1373, %v1904
      %v1906 = vpop.f32.mrb[0].mxu0
      %v1907 = vpop.f32.mrb[0].mxu0
      %v1908 = vadd.f32 %v1376, %v1907
      %v1909 = vpop.f32.mrb[0].mxu0
      %1910 = vmatprep.mubr.bf16.mxu0 0
      %1911 = vmatmul.mubr.bf16.gmra.mrb[0].mxu0 %v1595
      %v1912 = vpop.f32.mrb[0].mxu0
      %v1913 = vadd.f32 %v1381, %v1912
      %v1914 = vpop.f32.mrb[0].mxu0
      %v1915 = vpop.f32.mrb[0].mxu0
      %v1916 = vadd.f32 %v1384, %v1915
      %v1917 = vpop.f32.mrb[0].mxu0
      %1918 = vmatprep.mubr.bf16.mxu0 0
      %1919 = vmatmul.mubr.bf16.gmra.mrb[0].mxu0 %v1597
      %v1920 = vpop.f32.mrb[0].mxu0
      %v1921 = vadd.f32 %v1389, %v1920
      %v1922 = vpop.f32.mrb[0].mxu0
      %v1923 = vpop.f32.mrb[0].mxu0
      %v1924 = vadd.f32 %v1392, %v1923
      %v1925 = vpop.f32.mrb[0].mxu0
      %1926 = vmatprep.mubr.bf16.mxu0 0
      %1927 = vmatmul.mubr.bf16.gmra.mrb[0].mxu0 %v1599
      %v1928 = vpop.f32.mrb[0].mxu0
      %v1929 = vadd.f32 %v1397, %v1928
      %v1930 = vpop.f32.mrb[0].mxu0
      %v1931 = vpop.f32.mrb[0].mxu0
      %v1932 = vadd.f32 %v1400, %v1931
      %v1933 = vpop.f32.mrb[0].mxu0
      %1934 = vmatprep.mubr.bf16.mxu0 0
      %1935 = vmatmul.mubr.bf16.gmra.mrb[0].mxu0 %v1601
      %v1936 = vpop.f32.mrb[0].mxu0
      %v1937 = vadd.f32 %v1405, %v1936
      %v1938 = vpop.f32.mrb[0].mxu0
      %v1939 = vpop.f32.mrb[0].mxu0
      %v1940 = vadd.f32 %v1408, %v1939
      %v1941 = vpop.f32.mrb[0].mxu0
      %1942 = vmatprep.mubr.bf16.mxu0 0
      %1943 = vmatmul.mubr.bf16.gmra.mrb[0].mxu0 %v1603
      %v1944 = vpop.f32.mrb[0].mxu0
      %v1945 = vadd.f32 %v1413, %v1944
      %v1946 = vpop.f32.mrb[0].mxu0
      %v1947 = vpop.f32.mrb[0].mxu0
      %v1948 = vadd.f32 %v1416, %v1947
      %v1949 = vpop.f32.mrb[0].mxu0
      %1950 = vmatprep.mubr.bf16.mxu0 0
      %1951 = vmatmul.mubr.bf16.gmra.mrb[0].mxu0 %v1605
      %v1952 = vpop.f32.mrb[0].mxu0
      %v1953 = vadd.f32 %v1421, %v1952
      %v1954 = vpop.f32.mrb[0].mxu0
      %v1955 = vpop.f32.mrb[0].mxu0
      %v1956 = vadd.f32 %v1424, %v1955
      %v1957 = vpop.f32.mrb[0].mxu0
      %1958 = vmatprep.mubr.bf16.mxu0 0
      %1959 = vmatmul.mubr.bf16.gmra.mrb[0].mxu0 %v1607
      %v1960 = vpop.f32.mrb[0].mxu0
      %v1961 = vadd.f32 %v1429, %v1960
      %v1962 = vpop.f32.mrb[0].mxu0
      %v1963 = vpop.f32.mrb[0].mxu0
      %v1964 = vadd.f32 %v1432, %v1963
      %v1965 = vpop.f32.mrb[0].mxu0
      %1966 = vmatprep.mubr.bf16.mxu0 0
      %1967 = vmatmul.mubr.bf16.gmra.mrb[0].mxu0 %v1609
      %v1968 = vpop.f32.mrb[0].mxu0
      %v1969 = vadd.f32 %v1437, %v1968
      %v1970 = vpop.f32.mrb[0].mxu0
      %v1971 = vpop.f32.mrb[0].mxu0
      %v1972 = vadd.f32 %v1440, %v1971
      %v1973 = vpop.f32.mrb[0].mxu0
      %1974 = vmatprep.mubr.bf16.mxu0 0
      %1975 = vmatmul.mubr.bf16.gmra.mrb[0].mxu0 %v1611
      %v1976 = vpop.f32.mrb[0].mxu0
      %v1977 = vadd.f32 %v1445, %v1976
      %v1978 = vpop.f32.mrb[0].mxu0
      %v1979 = vpop.f32.mrb[0].mxu0
      %v1980 = vadd.f32 %v1448, %v1979
      %v1981 = vpop.f32.mrb[0].mxu0
      %1982 = vmatprep.mubr.bf16.mxu0 0
      %1983 = vmatmul.mubr.bf16.gmra.mrb[0].mxu0 %v1613
      %v1984 = vpop.f32.mrb[0].mxu0
      %v1985 = vadd.f32 %v1453, %v1984
      %v1986 = vpop.f32.mrb[0].mxu0
      %v1987 = vpop.f32.mrb[0].mxu0
      %v1988 = vadd.f32 %v1456, %v1987
      %v1989 = vpop.f32.mrb[0].mxu0
      %1990 = vmatprep.mubr.bf16.mxu0 0
      %1991 = vmatmul.mubr.bf16.gmra.mrb[0].mxu0 %v1615
      %v1992 = vpop.f32.mrb[0].mxu0
      %v1993 = vadd.f32 %v1461, %v1992
      %v1994 = vpop.f32.mrb[0].mxu0
      %v1995 = vpop.f32.mrb[0].mxu0
      %v1996 = vadd.f32 %v1464, %v1995
      %v1997 = vpop.f32.mrb[0].mxu0
      %1998 = vmatprep.mubr.bf16.mxu0 0
      %1999 = vmatmul.mubr.bf16.gmra.mrb[0].mxu0 %v1617
      %v2000 = vpop.f32.mrb[0].mxu0
      %v2001 = vadd.f32 %v1469, %v2000
      %v2002 = vpop.f32.mrb[0].mxu0
      %v2003 = vpop.f32.mrb[0].mxu0
      %v2004 = vadd.f32 %v1472, %v2003
      %v2005 = vpop.f32.mrb[0].mxu0
      %2006 = vmatprep.mubr.bf16.mxu0 0
      %2007 = vmatmul.mubr.bf16.gmra.mrb[0].mxu0 %v1619
      %v2008 = vpop.f32.mrb[0].mxu0
      %v2009 = vadd.f32 %v1477, %v2008
      %v2010 = vpop.f32.mrb[0].mxu0
      %v2011 = vpop.f32.mrb[0].mxu0
      %v2012 = vadd.f32 %v1480, %v2011
      %v2013 = vpop.f32.mrb[0].mxu0
      %2014 = vmatprep.mubr.bf16.mxu0 0
      %2015 = vmatmul.mubr.bf16.gmra.mrb[0].mxu0 %v1621
      %v2016 = vpop.f32.mrb[0].mxu0
      %v2017 = vadd.f32 %v1485, %v2016
      %v2018 = vpop.f32.mrb[0].mxu0
      %v2019 = vpop.f32.mrb[0].mxu0
      %v2020 = vadd.f32 %v1488, %v2019
      %v2021 = vpop.f32.mrb[0].mxu0
      %2022 = vmatprep.mubr.bf16.mxu0 0
      %2023 = vmatmul.mubr.bf16.gmra.mrb[0].mxu0 %v1623
      %v2024 = vpop.f32.mrb[0].mxu0
      %v2025 = vadd.f32 %v1493, %v2024
      %v2026 = vpop.f32.mrb[0].mxu0
      %v2027 = vpop.f32.mrb[0].mxu0
      %v2028 = vadd.f32 %v1496, %v2027
      %v2029 = vpop.f32.mrb[0].mxu0
      %2030 = vmatprep.mubr.bf16.mxu0 0
      %2031 = vmatmul.mubr.bf16.gmra.mrb[0].mxu0 %v1625
      %v2032 = vpop.f32.mrb[0].mxu0
      %v2033 = vadd.f32 %v1501, %v2032
      %v2034 = vpop.f32.mrb[0].mxu0
      %v2035 = vpop.f32.mrb[0].mxu0
      %v2036 = vadd.f32 %v1504, %v2035
      %v2037 = vpop.f32.mrb[0].mxu0
      %2038 = vmatprep.mubr.bf16.mxu0 0
      %2039 = vmatmul.mubr.bf16.gmra.mrb[0].mxu0 %v1628
      %v2040 = vpop.f32.mrb[0].mxu0
      %v2041 = vadd.f32 %v1509, %v2040
      %v2042 = vpop.f32.mrb[0].mxu0
      %v2043 = vpop.f32.mrb[0].mxu0
      %v2044 = vpop.f32.mrb[0].mxu0
      %2045 = vdwg.mxu0
      %v2046 = vld [vmem:[%s193] sm:$0xe]
      %s2047 = scalar_lea.vmem %s1, 48
      %v2048 = vld [vmem:[%s2047] sm:$0xf]
      %v2049 = vld [vmem:[%s2047 + $0x4] sm:$0xf]
      %v2050 = vld [vmem:[%s2047 + $0x8] sm:$0xf]
      %v2051 = vld [vmem:[%s2047 + $0xc] sm:$0xf]
      %v2052 = vld [vmem:[%s2047 + $0x10] sm:$0xf]
      %v2053 = vld [vmem:[%s2047 + $0x14] sm:$0xf]
      %v2055 = vunpack.c.l.b16 %v2046
      %v2056 = vpack.c.b16 %v408, %v2055
      %vm2057 = vcmask 1046528
      %v2058 = vrot.slane %v2056, 1
      %v2059 = vrot.slane %v504, 1
      %v2060 = vsel %vm2057, %v2058, %v2059
      %v2061 = vrot.slane %v505, 1
      %v2062 = vsel %vm2057, %v2059, %v2061
      %v2063 = vrot.slane %v506, 1
      %v2064 = vsel %vm2057, %v2061, %v2063
      %v2065 = vrot.slane %v507, 1
      %v2066 = vsel %vm2057, %v2063, %v2065
      %v2067 = vrot.slane %v508, 1
      %v2068 = vsel %vm2057, %v2065, %v2067
      %v2069 = vrot.slane %v509, 1
      %v2070 = vsel %vm2057, %v2067, %v2069
      %v2071 = vrot.slane %v510, 1
      %v2072 = vsel %vm2057, %v2069, %v2071
      %v2073 = vrot.slane %v511, 1
      %v2074 = vsel %vm2057, %v2071, %v2073
      %v2075 = vrot.slane %v512, 1
      %v2076 = vsel %vm2057, %v2073, %v2075
      %v2077 = vrot.slane %v513, 1
      %v2078 = vsel %vm2057, %v2075, %v2077
      %v2079 = vrot.slane %v514, 1
      %v2080 = vsel %vm2057, %v2077, %v2079
      %v2081 = vrot.slane %v515, 1
      %v2082 = vsel %vm2057, %v2079, %v2081
      %v2083 = vrot.slane %v516, 1
      %v2084 = vsel %vm2057, %v2081, %v2083
      %v2085 = vrot.slane %v517, 1
      %v2086 = vsel %vm2057, %v2083, %v2085
      %v2087 = vrot.slane %v518, 1
      %v2088 = vsel %vm2057, %v2085, %v2087
      %v2089 = vrot.slane %v519, 1
      %v2090 = vsel %vm2057, %v2087, %v2089
      %v2091 = vrot.slane %v520, 1
      %v2092 = vsel %vm2057, %v2089, %v2091
      %v2093 = vrot.slane %v521, 1
      %v2094 = vsel %vm2057, %v2091, %v2093
      %v2095 = vrot.slane %v522, 1
      %v2096 = vsel %vm2057, %v2093, %v2095
      %v2097 = vrot.slane %v523, 1
      %v2098 = vsel %vm2057, %v2095, %v2097
      %v2099 = vrot.slane %v524, 1
      %v2100 = vsel %vm2057, %v2097, %v2099
      %v2101 = vrot.slane %v525, 1
      %v2102 = vsel %vm2057, %v2099, %v2101
      %v2103 = vrot.slane %v526, 1
      %v2104 = vsel %vm2057, %v2101, %v2103
      %v2105 = vrot.slane %v527, 1
      %v2106 = vsel %vm2057, %v2103, %v2105
      %v2107 = vrot.slane %v528, 1
      %v2108 = vsel %vm2057, %v2105, %v2107
      %v2109 = vrot.slane %v529, 1
      %v2110 = vsel %vm2057, %v2107, %v2109
      %v2111 = vrot.slane %v530, 1
      %v2112 = vsel %vm2057, %v2109, %v2111
      %v2113 = vrot.slane %v531, 1
      %v2114 = vsel %vm2057, %v2111, %v2113
      %v2115 = vrot.slane %v532, 1
      %v2116 = vsel %vm2057, %v2113, %v2115
      %v2117 = vrot.slane %v533, 1
      %v2118 = vsel %vm2057, %v2115, %v2117
      %v2119 = vrot.slane %v534, 1
      %v2120 = vsel %vm2057, %v2117, %v2119
      %v2121 = vrot.slane %v535, 1
      %v2122 = vsel %vm2057, %v2119, %v2121
      %v2123 = vrot.slane %v536, 1
      %v2124 = vsel %vm2057, %v2121, %v2123
      %v2125 = vrot.slane %v537, 1
      %v2126 = vsel %vm2057, %v2123, %v2125
      %v2127 = vrot.slane %v538, 1
      %v2128 = vsel %vm2057, %v2125, %v2127
      %v2129 = vrot.slane %v539, 1
      %v2130 = vsel %vm2057, %v2127, %v2129
      %v2131 = vrot.slane %v540, 1
      %v2132 = vsel %vm2057, %v2129, %v2131
      %v2133 = vrot.slane %v541, 1
      %v2134 = vsel %vm2057, %v2131, %v2133
      %v2135 = vrot.slane %v542, 1
      %v2136 = vsel %vm2057, %v2133, %v2135
      %v2137 = vrot.slane %v543, 1
      %v2138 = vsel %vm2057, %v2135, %v2137
      %v2139 = vrot.slane %v544, 1
      %v2140 = vsel %vm2057, %v2137, %v2139
      %v2141 = vrot.slane %v545, 1
      %v2142 = vsel %vm2057, %v2139, %v2141
      %v2143 = vrot.slane %v546, 1
      %v2144 = vsel %vm2057, %v2141, %v2143
      %v2145 = vrot.slane %v547, 1
      %v2146 = vsel %vm2057, %v2143, %v2145
      %v2147 = vrot.slane %v548, 1
      %v2148 = vsel %vm2057, %v2145, %v2147
      %v2149 = vrot.slane %v549, 1
      %v2150 = vsel %vm2057, %v2147, %v2149
      %v2151 = vrot.slane %v550, 1
      %v2152 = vsel %vm2057, %v2149, %v2151
      %v2159 = vunpack.c.l.b16 %v2048
      %v2160 = vunpack.c.l.b16 %v2049
      %v2161 = vunpack.c.l.b16 %v2050
      %v2162 = vunpack.c.l.b16 %v2051
      %v2163 = vunpack.c.l.b16 %v2052
      %v2164 = vunpack.c.l.b16 %v2053
      %v2165 = vpack.c.b16 %v2160, %v2159
      %v2166 = vpack.c.b16 %v2162, %v2161
      %v2167 = vpack.c.b16 %v2164, %v2163
      %v2172 = vsel %vm953, %v2060, 0
      %v2175 = vsel %vm953, %v2062, 0
      %v2178 = vsel %vm953, %v2064, 0
      %v2181 = vsel %vm953, %v2066, 0
      %v2184 = vsel %vm953, %v2068, 0
      %v2187 = vsel %vm953, %v2070, 0
      %v2190 = vsel %vm953, %v2072, 0
      %v2193 = vsel %vm953, %v2074, 0
      %v2196 = vsel %vm953, %v2076, 0
      %v2199 = vsel %vm953, %v2078, 0
      %v2202 = vsel %vm953, %v2080, 0
      %v2205 = vsel %vm953, %v2082, 0
      %v2208 = vsel %vm953, %v2084, 0
      %v2211 = vsel %vm953, %v2086, 0
      %v2214 = vsel %vm953, %v2088, 0
      %v2217 = vsel %vm953, %v2090, 0
      %v2220 = vsel %vm953, %v2092, 0
      %v2223 = vsel %vm953, %v2094, 0
      %v2226 = vsel %vm953, %v2096, 0
      %v2229 = vsel %vm953, %v2098, 0
      %v2232 = vsel %vm953, %v2100, 0
      %v2235 = vsel %vm953, %v2102, 0
      %v2238 = vsel %vm953, %v2104, 0
      %v2241 = vsel %vm953, %v2106, 0
      %v2244 = vsel %vm953, %v2108, 0
      %v2247 = vsel %vm953, %v2110, 0
      %v2250 = vsel %vm953, %v2112, 0
      %v2253 = vsel %vm953, %v2114, 0
      %v2256 = vsel %vm953, %v2116, 0
      %v2259 = vsel %vm953, %v2118, 0
      %v2262 = vsel %vm953, %v2120, 0
      %v2265 = vsel %vm953, %v2122, 0
      %v2268 = vsel %vm953, %v2124, 0
      %v2271 = vsel %vm953, %v2126, 0
      %v2274 = vsel %vm953, %v2128, 0
      %v2277 = vsel %vm953, %v2130, 0
      %v2280 = vsel %vm953, %v2132, 0
      %v2283 = vsel %vm953, %v2134, 0
      %v2286 = vsel %vm953, %v2136, 0
      %v2289 = vsel %vm953, %v2138, 0
      %v2292 = vsel %vm953, %v2140, 0
      %v2295 = vsel %vm953, %v2142, 0
      %v2298 = vsel %vm953, %v2144, 0
      %v2301 = vsel %vm953, %v2146, 0
      %v2304 = vsel %vm953, %v2148, 0
      %v2307 = vsel %vm953, %v2150, 0
      %v2310 = vsel %vm953, %v2152, 0
      %v2313 = vsel %vm953, %v2151, 0
      %2315 = vmatprep.subr.bf16.mxu0 0
      %2316 = vmatpush1.bf16.msra.mxu0 %v2165
      %2317 = vmatprep.subr.bf16.mxu0 0
      %2318 = vmatpush1.bf16.msra.mxu0 %v2166
      %2319 = vmatprep.subr.bf16.mxu0 0
      %2320 = vmatpush1.bf16.msra.mxu0 %v2167
      %2321 = vmatprep.subr.bf16.mxu0 0
      %2322 = vmatpush1.bf16.msra.mxu0 0
      %2323 = vmatprep.subr.bf16.mxu0 0
      %2324 = vmatpush1.bf16.msra.mxu0 0
      %2325 = vmatprep.subr.bf16.mxu0 0
      %2326 = vmatpush1.bf16.msra.mxu0 0
      %2327 = vmatprep.subr.bf16.mxu0 0
      %2328 = vmatpush1.bf16.msra.mxu0 0
      %2329 = vmatprep.subr.bf16.mxu0 0
      %2330 = vmatpush1.bf16.msra.mxu0 0
      %2331 = vmatprep.subr.bf16.mxu0 0
      %2332 = vmatpush1.bf16.msra.mxu0 0
      %2333 = vmatprep.subr.bf16.mxu0 0
      %2334 = vmatpush1.bf16.msra.mxu0 0
      %2335 = vmatprep.subr.bf16.mxu0 0
      %2336 = vmatpush1.bf16.msra.mxu0 0
      %2337 = vmatprep.subr.bf16.mxu0 0
      %2338 = vmatpush1.bf16.msra.mxu0 0
      %2339 = vmatprep.subr.bf16.mxu0 0
      %2340 = vmatpush1.bf16.msra.mxu0 0
      %2341 = vmatprep.subr.bf16.mxu0 0
      %2342 = vmatpush1.bf16.msra.mxu0 0
      %2343 = vmatprep.subr.bf16.mxu0 0
      %2344 = vmatpush1.bf16.msra.mxu0 0
      %2345 = vmatprep.subr.bf16.mxu0 0
      %2346 = vmatpush1.bf16.msra.mxu0 0
      %2347 = vmatprep.mubr.bf16.mxu0 0
      %2348 = vmatmul.mubr.bf16.gmra.mrb[0].mxu0 %v2172
      %v2349 = vpop.f32.mrb[0].mxu0
      %v2350 = vadd.f32 0.0, %v2349
      %v2351 = vpop.f32.mrb[0].mxu0
      %v2352 = vpop.f32.mrb[0].mxu0
      %v2353 = vadd.f32 0.0, %v2352
      %v2354 = vpop.f32.mrb[0].mxu0
      %2355 = vmatprep.mubr.bf16.mxu0 0
      %2356 = vmatmul.mubr.bf16.gmra.mrb[0].mxu0 %v2175
      %v2357 = vpop.f32.mrb[0].mxu0
      %v2358 = vadd.f32 0.0, %v2357
      %v2359 = vpop.f32.mrb[0].mxu0
      %v2360 = vpop.f32.mrb[0].mxu0
      %v2361 = vadd.f32 0.0, %v2360
      %v2362 = vpop.f32.mrb[0].mxu0
      %2363 = vmatprep.mubr.bf16.mxu0 0
      %2364 = vmatmul.mubr.bf16.gmra.mrb[0].mxu0 %v2178
      %v2365 = vpop.f32.mrb[0].mxu0
      %v2366 = vadd.f32 0.0, %v2365
      %v2367 = vpop.f32.mrb[0].mxu0
      %v2368 = vpop.f32.mrb[0].mxu0
      %v2369 = vadd.f32 0.0, %v2368
      %v2370 = vpop.f32.mrb[0].mxu0
      %2371 = vmatprep.mubr.bf16.mxu0 0
      %2372 = vmatmul.mubr.bf16.gmra.mrb[0].mxu0 %v2181
      %v2373 = vpop.f32.mrb[0].mxu0
      %v2374 = vadd.f32 0.0, %v2373
      %v2375 = vpop.f32.mrb[0].mxu0
      %v2376 = vpop.f32.mrb[0].mxu0
      %v2377 = vadd.f32 0.0, %v2376
      %v2378 = vpop.f32.mrb[0].mxu0
      %2379 = vmatprep.mubr.bf16.mxu0 0
      %2380 = vmatmul.mubr.bf16.gmra.mrb[0].mxu0 %v2184
      %v2381 = vpop.f32.mrb[0].mxu0
      %v2382 = vadd.f32 0.0, %v2381
      %v2383 = vpop.f32.mrb[0].mxu0
      %v2384 = vpop.f32.mrb[0].mxu0
      %v2385 = vadd.f32 0.0, %v2384
      %v2386 = vpop.f32.mrb[0].mxu0
      %2387 = vmatprep.mubr.bf16.mxu0 0
      %2388 = vmatmul.mubr.bf16.gmra.mrb[0].mxu0 %v2187
      %v2389 = vpop.f32.mrb[0].mxu0
      %v2390 = vadd.f32 0.0, %v2389
      %v2391 = vpop.f32.mrb[0].mxu0
      %v2392 = vpop.f32.mrb[0].mxu0
      %v2393 = vadd.f32 0.0, %v2392
      %v2394 = vpop.f32.mrb[0].mxu0
      %2395 = vmatprep.mubr.bf16.mxu0 0
      %2396 = vmatmul.mubr.bf16.gmra.mrb[0].mxu0 %v2190
      %v2397 = vpop.f32.mrb[0].mxu0
      %v2398 = vadd.f32 0.0, %v2397
      %v2399 = vpop.f32.mrb[0].mxu0
      %v2400 = vpop.f32.mrb[0].mxu0
      %v2401 = vadd.f32 0.0, %v2400
      %v2402 = vpop.f32.mrb[0].mxu0
      %2403 = vmatprep.mubr.bf16.mxu0 0
      %2404 = vmatmul.mubr.bf16.gmra.mrb[0].mxu0 %v2193
      %v2405 = vpop.f32.mrb[0].mxu0
      %v2406 = vadd.f32 0.0, %v2405
      %v2407 = vpop.f32.mrb[0].mxu0
      %v2408 = vpop.f32.mrb[0].mxu0
      %v2409 = vadd.f32 0.0, %v2408
      %v2410 = vpop.f32.mrb[0].mxu0
      %2411 = vmatprep.mubr.bf16.mxu0 0
      %2412 = vmatmul.mubr.bf16.gmra.mrb[0].mxu0 %v2196
      %v2413 = vpop.f32.mrb[0].mxu0
      %v2414 = vadd.f32 0.0, %v2413
      %v2415 = vpop.f32.mrb[0].mxu0
      %v2416 = vpop.f32.mrb[0].mxu0
      %v2417 = vadd.f32 0.0, %v2416
      %v2418 = vpop.f32.mrb[0].mxu0
      %2419 = vmatprep.mubr.bf16.mxu0 0
      %2420 = vmatmul.mubr.bf16.gmra.mrb[0].mxu0 %v2199
      %v2421 = vpop.f32.mrb[0].mxu0
      %v2422 = vadd.f32 0.0, %v2421
      %v2423 = vpop.f32.mrb[0].mxu0
      %v2424 = vpop.f32.mrb[0].mxu0
      %v2425 = vadd.f32 0.0, %v2424
      %v2426 = vpop.f32.mrb[0].mxu0
      %2427 = vmatprep.mubr.bf16.mxu0 0
      %2428 = vmatmul.mubr.bf16.gmra.mrb[0].mxu0 %v2202
      %v2429 = vpop.f32.mrb[0].mxu0
      %v2430 = vadd.f32 0.0, %v2429
      %v2431 = vpop.f32.mrb[0].mxu0
      %v2432 = vpop.f32.mrb[0].mxu0
      %v2433 = vadd.f32 0.0, %v2432
      %v2434 = vpop.f32.mrb[0].mxu0
      %2435 = vmatprep.mubr.bf16.mxu0 0
      %2436 = vmatmul.mubr.bf16.gmra.mrb[0].mxu0 %v2205
      %v2437 = vpop.f32.mrb[0].mxu0
      %v2438 = vadd.f32 0.0, %v2437
      %v2439 = vpop.f32.mrb[0].mxu0
      %v2440 = vpop.f32.mrb[0].mxu0
      %v2441 = vadd.f32 0.0, %v2440
      %v2442 = vpop.f32.mrb[0].mxu0
      %2443 = vmatprep.mubr.bf16.mxu0 0
      %2444 = vmatmul.mubr.bf16.gmra.mrb[0].mxu0 %v2208
      %v2445 = vpop.f32.mrb[0].mxu0
      %v2446 = vadd.f32 0.0, %v2445
      %v2447 = vpop.f32.mrb[0].mxu0
      %v2448 = vpop.f32.mrb[0].mxu0
      %v2449 = vadd.f32 0.0, %v2448
      %v2450 = vpop.f32.mrb[0].mxu0
      %2451 = vmatprep.mubr.bf16.mxu0 0
      %2452 = vmatmul.mubr.bf16.gmra.mrb[0].mxu0 %v2211
      %v2453 = vpop.f32.mrb[0].mxu0
      %v2454 = vadd.f32 0.0, %v2453
      %v2455 = vpop.f32.mrb[0].mxu0
      %v2456 = vpop.f32.mrb[0].mxu0
      %v2457 = vadd.f32 0.0, %v2456
      %v2458 = vpop.f32.mrb[0].mxu0
      %2459 = vmatprep.mubr.bf16.mxu0 0
      %2460 = vmatmul.mubr.bf16.gmra.mrb[0].mxu0 %v2214
      %v2461 = vpop.f32.mrb[0].mxu0
      %v2462 = vadd.f32 0.0, %v2461
      %v2463 = vpop.f32.mrb[0].mxu0
      %v2464 = vpop.f32.mrb[0].mxu0
      %v2465 = vadd.f32 0.0, %v2464
      %v2466 = vpop.f32.mrb[0].mxu0
      %2467 = vmatprep.mubr.bf16.mxu0 0
      %2468 = vmatmul.mubr.bf16.gmra.mrb[0].mxu0 %v2217
      %v2469 = vpop.f32.mrb[0].mxu0
      %v2470 = vadd.f32 0.0, %v2469
      %v2471 = vpop.f32.mrb[0].mxu0
      %v2472 = vpop.f32.mrb[0].mxu0
      %v2473 = vadd.f32 0.0, %v2472
      %v2474 = vpop.f32.mrb[0].mxu0
      %2475 = vmatprep.mubr.bf16.mxu0 0
      %2476 = vmatmul.mubr.bf16.gmra.mrb[0].mxu0 %v2220
      %v2477 = vpop.f32.mrb[0].mxu0
      %v2478 = vadd.f32 0.0, %v2477
      %v2479 = vpop.f32.mrb[0].mxu0
      %v2480 = vpop.f32.mrb[0].mxu0
      %v2481 = vadd.f32 0.0, %v2480
      %v2482 = vpop.f32.mrb[0].mxu0
      %2483 = vmatprep.mubr.bf16.mxu0 0
      %2484 = vmatmul.mubr.bf16.gmra.mrb[0].mxu0 %v2223
      %v2485 = vpop.f32.mrb[0].mxu0
      %v2486 = vadd.f32 0.0, %v2485
      %v2487 = vpop.f32.mrb[0].mxu0
      %v2488 = vpop.f32.mrb[0].mxu0
      %v2489 = vadd.f32 0.0, %v2488
      %v2490 = vpop.f32.mrb[0].mxu0
      %2491 = vmatprep.mubr.bf16.mxu0 0
      %2492 = vmatmul.mubr.bf16.gmra.mrb[0].mxu0 %v2226
      %v2493 = vpop.f32.mrb[0].mxu0
      %v2494 = vadd.f32 0.0, %v2493
      %v2495 = vpop.f32.mrb[0].mxu0
      %v2496 = vpop.f32.mrb[0].mxu0
      %v2497 = vadd.f32 0.0, %v2496
      %v2498 = vpop.f32.mrb[0].mxu0
      %2499 = vmatprep.mubr.bf16.mxu0 0
      %2500 = vmatmul.mubr.bf16.gmra.mrb[0].mxu0 %v2229
      %v2501 = vpop.f32.mrb[0].mxu0
      %v2502 = vadd.f32 0.0, %v2501
      %v2503 = vpop.f32.mrb[0].mxu0
      %v2504 = vpop.f32.mrb[0].mxu0
      %v2505 = vadd.f32 0.0, %v2504
      %v2506 = vpop.f32.mrb[0].mxu0
      %2507 = vmatprep.mubr.bf16.mxu0 0
      %2508 = vmatmul.mubr.bf16.gmra.mrb[0].mxu0 %v2232
      %v2509 = vpop.f32.mrb[0].mxu0
      %v2510 = vadd.f32 0.0, %v2509
      %v2511 = vpop.f32.mrb[0].mxu0
      %v2512 = vpop.f32.mrb[0].mxu0
      %v2513 = vadd.f32 0.0, %v2512
      %v2514 = vpop.f32.mrb[0].mxu0
      %2515 = vmatprep.mubr.bf16.mxu0 0
      %2516 = vmatmul.mubr.bf16.gmra.mrb[0].mxu0 %v2235
      %v2517 = vpop.f32.mrb[0].mxu0
      %v2518 = vadd.f32 0.0, %v2517
      %v2519 = vpop.f32.mrb[0].mxu0
      %v2520 = vpop.f32.mrb[0].mxu0
      %v2521 = vadd.f32 0.0, %v2520
      %v2522 = vpop.f32.mrb[0].mxu0
      %2523 = vmatprep.mubr.bf16.mxu0 0
      %2524 = vmatmul.mubr.bf16.gmra.mrb[0].mxu0 %v2238
      %v2525 = vpop.f32.mrb[0].mxu0
      %v2526 = vadd.f32 0.0, %v2525
      %v2527 = vpop.f32.mrb[0].mxu0
      %v2528 = vpop.f32.mrb[0].mxu0
      %v2529 = vadd.f32 0.0, %v2528
      %v2530 = vpop.f32.mrb[0].mxu0
      %2531 = vmatprep.mubr.bf16.mxu0 0
      %2532 = vmatmul.mubr.bf16.gmra.mrb[0].mxu0 %v2241
      %v2533 = vpop.f32.mrb[0].mxu0
      %v2534 = vadd.f32 0.0, %v2533
      %v2535 = vpop.f32.mrb[0].mxu0
      %v2536 = vpop.f32.mrb[0].mxu0
      %v2537 = vadd.f32 0.0, %v2536
      %v2538 = vpop.f32.mrb[0].mxu0
      %2539 = vmatprep.mubr.bf16.mxu0 0
      %2540 = vmatmul.mubr.bf16.gmra.mrb[0].mxu0 %v2244
      %v2541 = vpop.f32.mrb[0].mxu0
      %v2542 = vadd.f32 0.0, %v2541
      %v2543 = vpop.f32.mrb[0].mxu0
      %v2544 = vpop.f32.mrb[0].mxu0
      %v2545 = vadd.f32 0.0, %v2544
      %v2546 = vpop.f32.mrb[0].mxu0
      %2547 = vmatprep.mubr.bf16.mxu0 0
      %2548 = vmatmul.mubr.bf16.gmra.mrb[0].mxu0 %v2247
      %v2549 = vpop.f32.mrb[0].mxu0
      %v2550 = vadd.f32 0.0, %v2549
      %v2551 = vpop.f32.mrb[0].mxu0
      %v2552 = vpop.f32.mrb[0].mxu0
      %v2553 = vadd.f32 0.0, %v2552
      %v2554 = vpop.f32.mrb[0].mxu0
      %2555 = vmatprep.mubr.bf16.mxu0 0
      %2556 = vmatmul.mubr.bf16.gmra.mrb[0].mxu0 %v2250
      %v2557 = vpop.f32.mrb[0].mxu0
      %v2558 = vadd.f32 0.0, %v2557
      %v2559 = vpop.f32.mrb[0].mxu0
      %v2560 = vpop.f32.mrb[0].mxu0
      %v2561 = vadd.f32 0.0, %v2560
      %v2562 = vpop.f32.mrb[0].mxu0
      %2563 = vmatprep.mubr.bf16.mxu0 0
      %2564 = vmatmul.mubr.bf16.gmra.mrb[0].mxu0 %v2253
      %v2565 = vpop.f32.mrb[0].mxu0
      %v2566 = vadd.f32 0.0, %v2565
      %v2567 = vpop.f32.mrb[0].mxu0
      %v2568 = vpop.f32.mrb[0].mxu0
      %v2569 = vadd.f32 0.0, %v2568
      %v2570 = vpop.f32.mrb[0].mxu0
      %2571 = vmatprep.mubr.bf16.mxu0 0
      %2572 = vmatmul.mubr.bf16.gmra.mrb[0].mxu0 %v2256
      %v2573 = vpop.f32.mrb[0].mxu0
      %v2574 = vadd.f32 0.0, %v2573
      %v2575 = vpop.f32.mrb[0].mxu0
      %v2576 = vpop.f32.mrb[0].mxu0
      %v2577 = vadd.f32 0.0, %v2576
      %v2578 = vpop.f32.mrb[0].mxu0
      %2579 = vmatprep.mubr.bf16.mxu0 0
      %2580 = vmatmul.mubr.bf16.gmra.mrb[0].mxu0 %v2259
      %v2581 = vpop.f32.mrb[0].mxu0
      %v2582 = vadd.f32 0.0, %v2581
      %v2583 = vpop.f32.mrb[0].mxu0
      %v2584 = vpop.f32.mrb[0].mxu0
      %v2585 = vadd.f32 0.0, %v2584
      %v2586 = vpop.f32.mrb[0].mxu0
      %2587 = vmatprep.mubr.bf16.mxu0 0
      %2588 = vmatmul.mubr.bf16.gmra.mrb[0].mxu0 %v2262
      %v2589 = vpop.f32.mrb[0].mxu0
      %v2590 = vadd.f32 0.0, %v2589
      %v2591 = vpop.f32.mrb[0].mxu0
      %v2592 = vpop.f32.mrb[0].mxu0
      %v2593 = vadd.f32 0.0, %v2592
      %v2594 = vpop.f32.mrb[0].mxu0
      %2595 = vmatprep.mubr.bf16.mxu0 0
      %2596 = vmatmul.mubr.bf16.gmra.mrb[0].mxu0 %v2265
      %v2597 = vpop.f32.mrb[0].mxu0
      %v2598 = vadd.f32 0.0, %v2597
      %v2599 = vpop.f32.mrb[0].mxu0
      %v2600 = vpop.f32.mrb[0].mxu0
      %v2601 = vadd.f32 0.0, %v2600
      %v2602 = vpop.f32.mrb[0].mxu0
      %2603 = vmatprep.mubr.bf16.mxu0 0
      %2604 = vmatmul.mubr.bf16.gmra.mrb[0].mxu0 %v2268
      %v2605 = vpop.f32.mrb[0].mxu0
      %v2606 = vadd.f32 0.0, %v2605
      %v2607 = vpop.f32.mrb[0].mxu0
      %v2608 = vpop.f32.mrb[0].mxu0
      %v2609 = vadd.f32 0.0, %v2608
      %v2610 = vpop.f32.mrb[0].mxu0
      %2611 = vmatprep.mubr.bf16.mxu0 0
      %2612 = vmatmul.mubr.bf16.gmra.mrb[0].mxu0 %v2271
      %v2613 = vpop.f32.mrb[0].mxu0
      %v2614 = vadd.f32 0.0, %v2613
      %v2615 = vpop.f32.mrb[0].mxu0
      %v2616 = vpop.f32.mrb[0].mxu0
      %v2617 = vadd.f32 0.0, %v2616
      %v2618 = vpop.f32.mrb[0].mxu0
      %2619 = vmatprep.mubr.bf16.mxu0 0
      %2620 = vmatmul.mubr.bf16.gmra.mrb[0].mxu0 %v2274
      %v2621 = vpop.f32.mrb[0].mxu0
      %v2622 = vadd.f32 0.0, %v2621
      %v2623 = vpop.f32.mrb[0].mxu0
      %v2624 = vpop.f32.mrb[0].mxu0
      %v2625 = vadd.f32 0.0, %v2624
      %v2626 = vpop.f32.mrb[0].mxu0
      %2627 = vmatprep.mubr.bf16.mxu0 0
      %2628 = vmatmul.mubr.bf16.gmra.mrb[0].mxu0 %v2277
      %v2629 = vpop.f32.mrb[0].mxu0
      %v2630 = vadd.f32 0.0, %v2629
      %v2631 = vpop.f32.mrb[0].mxu0
      %v2632 = vpop.f32.mrb[0].mxu0
      %v2633 = vadd.f32 0.0, %v2632
      %v2634 = vpop.f32.mrb[0].mxu0
      %2635 = vmatprep.mubr.bf16.mxu0 0
      %2636 = vmatmul.mubr.bf16.gmra.mrb[0].mxu0 %v2280
      %v2637 = vpop.f32.mrb[0].mxu0
      %v2638 = vadd.f32 0.0, %v2637
      %v2639 = vpop.f32.mrb[0].mxu0
      %v2640 = vpop.f32.mrb[0].mxu0
      %v2641 = vadd.f32 0.0, %v2640
      %v2642 = vpop.f32.mrb[0].mxu0
      %2643 = vmatprep.mubr.bf16.mxu0 0
      %2644 = vmatmul.mubr.bf16.gmra.mrb[0].mxu0 %v2283
      %v2645 = vpop.f32.mrb[0].mxu0
      %v2646 = vadd.f32 0.0, %v2645
      %v2647 = vpop.f32.mrb[0].mxu0
      %v2648 = vpop.f32.mrb[0].mxu0
      %v2649 = vadd.f32 0.0, %v2648
      %v2650 = vpop.f32.mrb[0].mxu0
      %2651 = vmatprep.mubr.bf16.mxu0 0
      %2652 = vmatmul.mubr.bf16.gmra.mrb[0].mxu0 %v2286
      %v2653 = vpop.f32.mrb[0].mxu0
      %v2654 = vadd.f32 0.0, %v2653
      %v2655 = vpop.f32.mrb[0].mxu0
      %v2656 = vpop.f32.mrb[0].mxu0
      %v2657 = vadd.f32 0.0, %v2656
      %v2658 = vpop.f32.mrb[0].mxu0
      %2659 = vmatprep.mubr.bf16.mxu0 0
      %2660 = vmatmul.mubr.bf16.gmra.mrb[0].mxu0 %v2289
      %v2661 = vpop.f32.mrb[0].mxu0
      %v2662 = vadd.f32 0.0, %v2661
      %v2663 = vpop.f32.mrb[0].mxu0
      %v2664 = vpop.f32.mrb[0].mxu0
      %v2665 = vadd.f32 0.0, %v2664
      %v2666 = vpop.f32.mrb[0].mxu0
      %2667 = vmatprep.mubr.bf16.mxu0 0
      %2668 = vmatmul.mubr.bf16.gmra.mrb[0].mxu0 %v2292
      %v2669 = vpop.f32.mrb[0].mxu0
      %v2670 = vadd.f32 0.0, %v2669
      %v2671 = vpop.f32.mrb[0].mxu0
      %v2672 = vpop.f32.mrb[0].mxu0
      %v2673 = vadd.f32 0.0, %v2672
      %v2674 = vpop.f32.mrb[0].mxu0
      %2675 = vmatprep.mubr.bf16.mxu0 0
      %2676 = vmatmul.mubr.bf16.gmra.mrb[0].mxu0 %v2295
      %v2677 = vpop.f32.mrb[0].mxu0
      %v2678 = vadd.f32 0.0, %v2677
      %v2679 = vpop.f32.mrb[0].mxu0
      %v2680 = vpop.f32.mrb[0].mxu0
      %v2681 = vadd.f32 0.0, %v2680
      %v2682 = vpop.f32.mrb[0].mxu0
      %2683 = vmatprep.mubr.bf16.mxu0 0
      %2684 = vmatmul.mubr.bf16.gmra.mrb[0].mxu0 %v2298
      %v2685 = vpop.f32.mrb[0].mxu0
      %v2686 = vadd.f32 0.0, %v2685
      %v2687 = vpop.f32.mrb[0].mxu0
      %v2688 = vpop.f32.mrb[0].mxu0
      %v2689 = vadd.f32 0.0, %v2688
      %v2690 = vpop.f32.mrb[0].mxu0
      %2691 = vmatprep.mubr.bf16.mxu0 0
      %2692 = vmatmul.mubr.bf16.gmra.mrb[0].mxu0 %v2301
      %v2693 = vpop.f32.mrb[0].mxu0
      %v2694 = vadd.f32 0.0, %v2693
      %v2695 = vpop.f32.mrb[0].mxu0
      %v2696 = vpop.f32.mrb[0].mxu0
      %v2697 = vadd.f32 0.0, %v2696
      %v2698 = vpop.f32.mrb[0].mxu0
      %2699 = vmatprep.mubr.bf16.mxu0 0
      %2700 = vmatmul.mubr.bf16.gmra.mrb[0].mxu0 %v2304
      %v2701 = vpop.f32.mrb[0].mxu0
      %v2702 = vadd.f32 0.0, %v2701
      %v2703 = vpop.f32.mrb[0].mxu0
      %v2704 = vpop.f32.mrb[0].mxu0
      %v2705 = vadd.f32 0.0, %v2704
      %v2706 = vpop.f32.mrb[0].mxu0
      %2707 = vmatprep.mubr.bf16.mxu0 0
      %2708 = vmatmul.mubr.bf16.gmra.mrb[0].mxu0 %v2307
      %v2709 = vpop.f32.mrb[0].mxu0
      %v2710 = vadd.f32 0.0, %v2709
      %v2711 = vpop.f32.mrb[0].mxu0
      %v2712 = vpop.f32.mrb[0].mxu0
      %v2713 = vadd.f32 0.0, %v2712
      %v2714 = vpop.f32.mrb[0].mxu0
      %2715 = vmatprep.mubr.bf16.mxu0 0
      %2716 = vmatmul.mubr.bf16.gmra.mrb[0].mxu0 %v2310
      %v2717 = vpop.f32.mrb[0].mxu0
      %v2718 = vadd.f32 0.0, %v2717
      %v2719 = vpop.f32.mrb[0].mxu0
      %v2720 = vpop.f32.mrb[0].mxu0
      %v2721 = vadd.f32 0.0, %v2720
      %v2722 = vpop.f32.mrb[0].mxu0
      %2723 = vmatprep.mubr.bf16.mxu0 0
      %2724 = vmatmul.mubr.bf16.gmra.mrb[0].mxu0 %v2313
      %v2725 = vpop.f32.mrb[0].mxu0
      %v2726 = vadd.f32 0.0, %v2725
      %v2727 = vpop.f32.mrb[0].mxu0
      %v2728 = vpop.f32.mrb[0].mxu0
      %v2729 = vpop.f32.mrb[0].mxu0
      %2730 = vdwg.mxu0
      %v2731 = vadd.f32 %v1665, %v2350
      %v2732 = vadd.f32 %v1668, %v2353
      %v2733 = vadd.f32 %v1673, %v2358
      %v2734 = vadd.f32 %v1676, %v2361
      %v2735 = vadd.f32 %v1681, %v2366
      %v2736 = vadd.f32 %v1684, %v2369
      %v2737 = vadd.f32 %v1689, %v2374
      %v2738 = vadd.f32 %v1692, %v2377
      %v2739 = vadd.f32 %v1697, %v2382
      %v2740 = vadd.f32 %v1700, %v2385
      %v2741 = vadd.f32 %v1705, %v2390
      %v2742 = vadd.f32 %v1708, %v2393
      %v2743 = vadd.f32 %v1713, %v2398
      %v2744 = vadd.f32 %v1716, %v2401
      %v2745 = vadd.f32 %v1721, %v2406
      %v2746 = vadd.f32 %v1724, %v2409
      %v2747 = vadd.f32 %v1729, %v2414
      %v2748 = vadd.f32 %v1732, %v2417
      %v2749 = vadd.f32 %v1737, %v2422
      %v2750 = vadd.f32 %v1740, %v2425
      %v2751 = vadd.f32 %v1745, %v2430
      %v2752 = vadd.f32 %v1748, %v2433
      %v2753 = vadd.f32 %v1753, %v2438
      %v2754 = vadd.f32 %v1756, %v2441
      %v2755 = vadd.f32 %v1761, %v2446
      %v2756 = vadd.f32 %v1764, %v2449
      %v2757 = vadd.f32 %v1769, %v2454
      %v2758 = vadd.f32 %v1772, %v2457
      %v2759 = vadd.f32 %v1777, %v2462
      %v2760 = vadd.f32 %v1780, %v2465
      %v2761 = vadd.f32 %v1785, %v2470
      %v2762 = vadd.f32 %v1788, %v2473
      %v2763 = vadd.f32 %v1793, %v2478
      %v2764 = vadd.f32 %v1796, %v2481
      %v2765 = vadd.f32 %v1801, %v2486
      %v2766 = vadd.f32 %v1804, %v2489
      %v2767 = vadd.f32 %v1809, %v2494
      %v2768 = vadd.f32 %v1812, %v2497
      %v2769 = vadd.f32 %v1817, %v2502
      %v2770 = vadd.f32 %v1820, %v2505
      %v2771 = vadd.f32 %v1825, %v2510
      %v2772 = vadd.f32 %v1828, %v2513
      %v2773 = vadd.f32 %v1833, %v2518
      %v2774 = vadd.f32 %v1836, %v2521
      %v2775 = vadd.f32 %v1841, %v2526
      %v2776 = vadd.f32 %v1844, %v2529
      %v2777 = vadd.f32 %v1849, %v2534
      %v2778 = vadd.f32 %v1852, %v2537
      %v2779 = vadd.f32 %v1857, %v2542
      %v2780 = vadd.f32 %v1860, %v2545
      %v2781 = vadd.f32 %v1865, %v2550
      %v2782 = vadd.f32 %v1868, %v2553
      %v2783 = vadd.f32 %v1873, %v2558
      %v2784 = vadd.f32 %v1876, %v2561
      %v2785 = vadd.f32 %v1881, %v2566
      %v2786 = vadd.f32 %v1884, %v2569
      %v2787 = vadd.f32 %v1889, %v2574
      %v2788 = vadd.f32 %v1892, %v2577
      %v2789 = vadd.f32 %v1897, %v2582
      %v2790 = vadd.f32 %v1900, %v2585
      %v2791 = vadd.f32 %v1905, %v2590
      %v2792 = vadd.f32 %v1908, %v2593
      %v2793 = vadd.f32 %v1913, %v2598
      %v2794 = vadd.f32 %v1916, %v2601
      %v2795 = vadd.f32 %v1921, %v2606
      %v2796 = vadd.f32 %v1924, %v2609
      %v2797 = vadd.f32 %v1929, %v2614
      %v2798 = vadd.f32 %v1932, %v2617
      %v2799 = vadd.f32 %v1937, %v2622
      %v2800 = vadd.f32 %v1940, %v2625
      %v2801 = vadd.f32 %v1945, %v2630
      %v2802 = vadd.f32 %v1948, %v2633
      %v2803 = vadd.f32 %v1953, %v2638
      %v2804 = vadd.f32 %v1956, %v2641
      %v2805 = vadd.f32 %v1961, %v2646
      %v2806 = vadd.f32 %v1964, %v2649
      %v2807 = vadd.f32 %v1969, %v2654
      %v2808 = vadd.f32 %v1972, %v2657
      %v2809 = vadd.f32 %v1977, %v2662
      %v2810 = vadd.f32 %v1980, %v2665
      %v2811 = vadd.f32 %v1985, %v2670
      %v2812 = vadd.f32 %v1988, %v2673
      %v2813 = vadd.f32 %v1993, %v2678
      %v2814 = vadd.f32 %v1996, %v2681
      %v2815 = vadd.f32 %v2001, %v2686
      %v2816 = vadd.f32 %v2004, %v2689
      %v2817 = vadd.f32 %v2009, %v2694
      %v2818 = vadd.f32 %v2012, %v2697
      %v2819 = vadd.f32 %v2017, %v2702
      %v2820 = vadd.f32 %v2020, %v2705
      %v2821 = vadd.f32 %v2025, %v2710
      %v2822 = vadd.f32 %v2028, %v2713
      %v2823 = vadd.f32 %v2033, %v2718
      %v2824 = vadd.f32 %v2036, %v2721
      %v2825 = vadd.f32 %v2041, %v2726
      %v2826 = vlaneseq
      %v2827 = vshrl.u32 %v2826, 7
      %v2828 = vadd.s32 %v2827, 8
      %v2829 = vadd.s32 %v2827, 16
      %v2830 = vld [vmem:[%s2] sm:$0x1]
      %vm2831 = vcmp.ge.s32.totalorder %v2827, 0
      %vm2832 = vcmp.ge.s32.totalorder %v2828, 0
      %vm2833 = vcmp.ge.s32.totalorder %v2829, 0
      %vm2834 = vcmp.lt.s32.totalorder %v2827, 3
      %vm2835 = vcmp.lt.s32.totalorder %v2828, 3
      %vm2836 = vcmp.lt.s32.totalorder %v2829, 3
      %vm2837 = vmand %vm2831, %vm2834
      %vm2838 = vmand %vm2832, %vm2835
      %vm2839 = vmand %vm2833, %vm2836
      %v2840 = vsel %vm2837, 1, 0
      %v2841 = vsel %vm2838, 1, 0
      %v2842 = vsel %vm2839, 1, 0
      %vm2843 = vcmp.eq.s32.totalorder %v2840, 1
      %vm2844 = vcmp.eq.s32.totalorder %v2841, 1
      %vm2845 = vcmp.eq.s32.totalorder %v2842, 1
      %v2846 = vsel %vm2843, %v2731, -1e+30
      %v2847 = vsel %vm2844, %v2732, -1e+30
      %v2848 = vsel %vm2845, %v2733, -1e+30
      %v2849 = vsel %vm2843, %v2734, -1e+30
      %v2850 = vsel %vm2844, %v2735, -1e+30
      %v2851 = vsel %vm2845, %v2736, -1e+30
      %v2852 = vsel %vm2843, %v2737, -1e+30
      %v2853 = vsel %vm2844, %v2738, -1e+30
      %v2854 = vsel %vm2845, %v2739, -1e+30
      %v2855 = vsel %vm2843, %v2740, -1e+30
      %v2856 = vsel %vm2844, %v2741, -1e+30
      %v2857 = vsel %vm2845, %v2742, -1e+30
      %v2858 = vsel %vm2843, %v2743, -1e+30
      %v2859 = vsel %vm2844, %v2744, -1e+30
      %v2860 = vsel %vm2845, %v2745, -1e+30
      %v2861 = vsel %vm2843, %v2746, -1e+30
      %v2862 = vsel %vm2844, %v2747, -1e+30
      %v2863 = vsel %vm2845, %v2748, -1e+30
      %v2864 = vsel %vm2843, %v2749, -1e+30
      %v2865 = vsel %vm2844, %v2750, -1e+30
      %v2866 = vsel %vm2845, %v2751, -1e+30
      %v2867 = vsel %vm2843, %v2752, -1e+30
      %v2868 = vsel %vm2844, %v2753, -1e+30
      %v2869 = vsel %vm2845, %v2754, -1e+30
      %v2870 = vsel %vm2843, %v2755, -1e+30
      %v2871 = vsel %vm2844, %v2756, -1e+30
      %v2872 = vsel %vm2845, %v2757, -1e+30
      %v2873 = vsel %vm2843, %v2758, -1e+30
      %v2874 = vsel %vm2844, %v2759, -1e+30
      %v2875 = vsel %vm2845, %v2760, -1e+30
      %v2876 = vsel %vm2843, %v2761, -1e+30
      %v2877 = vsel %vm2844, %v2762, -1e+30
      %v2878 = vsel %vm2845, %v2763, -1e+30
      %v2879 = vsel %vm2843, %v2764, -1e+30
      %v2880 = vsel %vm2844, %v2765, -1e+30
      %v2881 = vsel %vm2845, %v2766, -1e+30
      %v2882 = vsel %vm2843, %v2767, -1e+30
      %v2883 = vsel %vm2844, %v2768, -1e+30
      %v2884 = vsel %vm2845, %v2769, -1e+30
      %v2885 = vsel %vm2843, %v2770, -1e+30
      %v2886 = vsel %vm2844, %v2771, -1e+30
      %v2887 = vsel %vm2845, %v2772, -1e+30
      %v2888 = vsel %vm2843, %v2773, -1e+30
      %v2889 = vsel %vm2844, %v2774, -1e+30
      %v2890 = vsel %vm2845, %v2775, -1e+30
      %v2891 = vsel %vm2843, %v2776, -1e+30
      %v2892 = vsel %vm2844, %v2777, -1e+30
      %v2893 = vsel %vm2845, %v2778, -1e+30
      %v2894 = vsel %vm2843, %v2779, -1e+30
      %v2895 = vsel %vm2844, %v2780, -1e+30
      %v2896 = vsel %vm2845, %v2781, -1e+30
      %v2897 = vsel %vm2843, %v2782, -1e+30
      %v2898 = vsel %vm2844, %v2783, -1e+30
      %v2899 = vsel %vm2845, %v2784, -1e+30
      %v2900 = vsel %vm2843, %v2785, -1e+30
      %v2901 = vsel %vm2844, %v2786, -1e+30
      %v2902 = vsel %vm2845, %v2787, -1e+30
      %v2903 = vsel %vm2843, %v2788, -1e+30
      %v2904 = vsel %vm2844, %v2789, -1e+30
      %v2905 = vsel %vm2845, %v2790, -1e+30
      %v2906 = vsel %vm2843, %v2791, -1e+30
      %v2907 = vsel %vm2844, %v2792, -1e+30
      %v2908 = vsel %vm2845, %v2793, -1e+30
      %v2909 = vsel %vm2843, %v2794, -1e+30
      %v2910 = vsel %vm2844, %v2795, -1e+30
      %v2911 = vsel %vm2845, %v2796, -1e+30
      %v2912 = vsel %vm2843, %v2797, -1e+30
      %v2913 = vsel %vm2844, %v2798, -1e+30
      %v2914 = vsel %vm2845, %v2799, -1e+30
      %v2915 = vsel %vm2843, %v2800, -1e+30
      %v2916 = vsel %vm2844, %v2801, -1e+30
      %v2917 = vsel %vm2845, %v2802, -1e+30
      %v2918 = vsel %vm2843, %v2803, -1e+30
      %v2919 = vsel %vm2844, %v2804, -1e+30
      %v2920 = vsel %vm2845, %v2805, -1e+30
      %v2921 = vsel %vm2843, %v2806, -1e+30
      %v2922 = vsel %vm2844, %v2807, -1e+30
      %v2923 = vsel %vm2845, %v2808, -1e+30
      %v2924 = vsel %vm2843, %v2809, -1e+30
      %v2925 = vsel %vm2844, %v2810, -1e+30
      %v2926 = vsel %vm2845, %v2811, -1e+30
      %v2927 = vsel %vm2843, %v2812, -1e+30
      %v2928 = vsel %vm2844, %v2813, -1e+30
      %v2929 = vsel %vm2845, %v2814, -1e+30
      %v2930 = vsel %vm2843, %v2815, -1e+30
      %v2931 = vsel %vm2844, %v2816, -1e+30
      %v2932 = vsel %vm2845, %v2817, -1e+30
      %v2933 = vsel %vm2843, %v2818, -1e+30
      %v2934 = vsel %vm2844, %v2819, -1e+30
      %v2935 = vsel %vm2845, %v2820, -1e+30
      %v2936 = vsel %vm2843, %v2821, -1e+30
      %v2937 = vsel %vm2844, %v2822, -1e+30
      %v2938 = vsel %vm2845, %v2823, -1e+30
      %v2939 = vsel %vm2843, %v2824, -1e+30
      %v2940 = vsel %vm2844, %v2825, -1e+30
      %v2941 = vsel %vm2845, 0.0, -1e+30
      %vm2942 = vcmask 261120
      %v2943 = vsel %vm2942, %v2846, -inf
      %v2944 = vsel %vm2942, %v2847, -inf
      %v2945 = vmax.f32 %v2943, %v2944
      %v2946 = vsel %vm2942, %v2848, -inf
      %v2947 = vmax.f32 %v2945, %v2946
      %v2948 = vrot.slane %v2947, 4
      %v2949 = vmax.f32 %v2947, %v2948
      %v2950 = vrot.slane %v2949, 2
      %v2951 = vmax.f32 %v2949, %v2950
      %v2952 = vrot.slane %v2951, 1
      %v2953 = vmax.f32 %v2951, %v2952
      %v2954 = vsel %vm2942, %v2849, -inf
      %v2955 = vsel %vm2942, %v2850, -inf
      %v2956 = vmax.f32 %v2954, %v2955
      %v2957 = vsel %vm2942, %v2851, -inf
      %v2958 = vmax.f32 %v2956, %v2957
      %v2959 = vrot.slane %v2958, 4
      %v2960 = vmax.f32 %v2958, %v2959
      %v2961 = vrot.slane %v2960, 2
      %v2962 = vmax.f32 %v2960, %v2961
      %v2963 = vrot.slane %v2962, 1
      %v2964 = vmax.f32 %v2962, %v2963
      %v2965 = vsel %vm2942, %v2852, -inf
      %v2966 = vsel %vm2942, %v2853, -inf
      %v2967 = vmax.f32 %v2965, %v2966
      %v2968 = vsel %vm2942, %v2854, -inf
      %v2969 = vmax.f32 %v2967, %v2968
      %v2970 = vrot.slane %v2969, 4
      %v2971 = vmax.f32 %v2969, %v2970
      %v2972 = vrot.slane %v2971, 2
      %v2973 = vmax.f32 %v2971, %v2972
      %v2974 = vrot.slane %v2973, 1
      %v2975 = vmax.f32 %v2973, %v2974
      %v2976 = vsel %vm2942, %v2855, -inf
      %v2977 = vsel %vm2942, %v2856, -inf
      %v2978 = vmax.f32 %v2976, %v2977
      %v2979 = vsel %vm2942, %v2857, -inf
      %v2980 = vmax.f32 %v2978, %v2979
      %v2981 = vrot.slane %v2980, 4
      %v2982 = vmax.f32 %v2980, %v2981
      %v2983 = vrot.slane %v2982, 2
      %v2984 = vmax.f32 %v2982, %v2983
      %v2985 = vrot.slane %v2984, 1
      %v2986 = vmax.f32 %v2984, %v2985
      %v2987 = vsel %vm2942, %v2858, -inf
      %v2988 = vsel %vm2942, %v2859, -inf
      %v2989 = vmax.f32 %v2987, %v2988
      %v2990 = vsel %vm2942, %v2860, -inf
      %v2991 = vmax.f32 %v2989, %v2990
      %v2992 = vrot.slane %v2991, 4
      %v2993 = vmax.f32 %v2991, %v2992
      %v2994 = vrot.slane %v2993, 2
      %v2995 = vmax.f32 %v2993, %v2994
      %v2996 = vrot.slane %v2995, 1
      %v2997 = vmax.f32 %v2995, %v2996
      %v2998 = vsel %vm2942, %v2861, -inf
      %v2999 = vsel %vm2942, %v2862, -inf
      %v3000 = vmax.f32 %v2998, %v2999
      %v3001 = vsel %vm2942, %v2863, -inf
      %v3002 = vmax.f32 %v3000, %v3001
      %v3003 = vrot.slane %v3002, 4
      %v3004 = vmax.f32 %v3002, %v3003
      %v3005 = vrot.slane %v3004, 2
      %v3006 = vmax.f32 %v3004, %v3005
      %v3007 = vrot.slane %v3006, 1
      %v3008 = vmax.f32 %v3006, %v3007
      %v3009 = vsel %vm2942, %v2864, -inf
      %v3010 = vsel %vm2942, %v2865, -inf
      %v3011 = vmax.f32 %v3009, %v3010
      %v3012 = vsel %vm2942, %v2866, -inf
      %v3013 = vmax.f32 %v3011, %v3012
      %v3014 = vrot.slane %v3013, 4
      %v3015 = vmax.f32 %v3013, %v3014
      %v3016 = vrot.slane %v3015, 2
      %v3017 = vmax.f32 %v3015, %v3016
      %v3018 = vrot.slane %v3017, 1
      %v3019 = vmax.f32 %v3017, %v3018
      %v3020 = vsel %vm2942, %v2867, -inf
      %v3021 = vsel %vm2942, %v2868, -inf
      %v3022 = vmax.f32 %v3020, %v3021
      %v3023 = vsel %vm2942, %v2869, -inf
      %v3024 = vmax.f32 %v3022, %v3023
      %v3025 = vrot.slane %v3024, 4
      %v3026 = vmax.f32 %v3024, %v3025
      %v3027 = vrot.slane %v3026, 2
      %v3028 = vmax.f32 %v3026, %v3027
      %v3029 = vrot.slane %v3028, 1
      %v3030 = vmax.f32 %v3028, %v3029
      %v3031 = vsel %vm2942, %v2870, -inf
      %v3032 = vsel %vm2942, %v2871, -inf
      %v3033 = vmax.f32 %v3031, %v3032
      %v3034 = vsel %vm2942, %v2872, -inf
      %v3035 = vmax.f32 %v3033, %v3034
      %v3036 = vrot.slane %v3035, 4
      %v3037 = vmax.f32 %v3035, %v3036
      %v3038 = vrot.slane %v3037, 2
      %v3039 = vmax.f32 %v3037, %v3038
      %v3040 = vrot.slane %v3039, 1
      %v3041 = vmax.f32 %v3039, %v3040
      %v3042 = vsel %vm2942, %v2873, -inf
      %v3043 = vsel %vm2942, %v2874, -inf
      %v3044 = vmax.f32 %v3042, %v3043
      %v3045 = vsel %vm2942, %v2875, -inf
      %v3046 = vmax.f32 %v3044, %v3045
      %v3047 = vrot.slane %v3046, 4
      %v3048 = vmax.f32 %v3046, %v3047
      %v3049 = vrot.slane %v3048, 2
      %v3050 = vmax.f32 %v3048, %v3049
      %v3051 = vrot.slane %v3050, 1
      %v3052 = vmax.f32 %v3050, %v3051
      %v3053 = vsel %vm2942, %v2876, -inf
      %v3054 = vsel %vm2942, %v2877, -inf
      %v3055 = vmax.f32 %v3053, %v3054
      %v3056 = vsel %vm2942, %v2878, -inf
      %v3057 = vmax.f32 %v3055, %v3056
      %v3058 = vrot.slane %v3057, 4
      %v3059 = vmax.f32 %v3057, %v3058
      %v3060 = vrot.slane %v3059, 2
      %v3061 = vmax.f32 %v3059, %v3060
      %v3062 = vrot.slane %v3061, 1
      %v3063 = vmax.f32 %v3061, %v3062
      %v3064 = vsel %vm2942, %v2879, -inf
      %v3065 = vsel %vm2942, %v2880, -inf
      %v3066 = vmax.f32 %v3064, %v3065
      %v3067 = vsel %vm2942, %v2881, -inf
      %v3068 = vmax.f32 %v3066, %v3067
      %v3069 = vrot.slane %v3068, 4
      %v3070 = vmax.f32 %v3068, %v3069
      %v3071 = vrot.slane %v3070, 2
      %v3072 = vmax.f32 %v3070, %v3071
      %v3073 = vrot.slane %v3072, 1
      %v3074 = vmax.f32 %v3072, %v3073
      %v3075 = vsel %vm2942, %v2882, -inf
      %v3076 = vsel %vm2942, %v2883, -inf
      %v3077 = vmax.f32 %v3075, %v3076
      %v3078 = vsel %vm2942, %v2884, -inf
      %v3079 = vmax.f32 %v3077, %v3078
      %v3080 = vrot.slane %v3079, 4
      %v3081 = vmax.f32 %v3079, %v3080
      %v3082 = vrot.slane %v3081, 2
      %v3083 = vmax.f32 %v3081, %v3082
      %v3084 = vrot.slane %v3083, 1
      %v3085 = vmax.f32 %v3083, %v3084
      %v3086 = vsel %vm2942, %v2885, -inf
      %v3087 = vsel %vm2942, %v2886, -inf
      %v3088 = vmax.f32 %v3086, %v3087
      %v3089 = vsel %vm2942, %v2887, -inf
      %v3090 = vmax.f32 %v3088, %v3089
      %v3091 = vrot.slane %v3090, 4
      %v3092 = vmax.f32 %v3090, %v3091
      %v3093 = vrot.slane %v3092, 2
      %v3094 = vmax.f32 %v3092, %v3093
      %v3095 = vrot.slane %v3094, 1
      %v3096 = vmax.f32 %v3094, %v3095
      %v3097 = vsel %vm2942, %v2888, -inf
      %v3098 = vsel %vm2942, %v2889, -inf
      %v3099 = vmax.f32 %v3097, %v3098
      %v3100 = vsel %vm2942, %v2890, -inf
      %v3101 = vmax.f32 %v3099, %v3100
      %v3102 = vrot.slane %v3101, 4
      %v3103 = vmax.f32 %v3101, %v3102
      %v3104 = vrot.slane %v3103, 2
      %v3105 = vmax.f32 %v3103, %v3104
      %v3106 = vrot.slane %v3105, 1
      %v3107 = vmax.f32 %v3105, %v3106
      %v3108 = vsel %vm2942, %v2891, -inf
      %v3109 = vsel %vm2942, %v2892, -inf
      %v3110 = vmax.f32 %v3108, %v3109
      %v3111 = vsel %vm2942, %v2893, -inf
      %v3112 = vmax.f32 %v3110, %v3111
      %v3113 = vrot.slane %v3112, 4
      %v3114 = vmax.f32 %v3112, %v3113
      %v3115 = vrot.slane %v3114, 2
      %v3116 = vmax.f32 %v3114, %v3115
      %v3117 = vrot.slane %v3116, 1
      %v3118 = vmax.f32 %v3116, %v3117
      %v3119 = vsel %vm2942, %v2894, -inf
      %v3120 = vsel %vm2942, %v2895, -inf
      %v3121 = vmax.f32 %v3119, %v3120
      %v3122 = vsel %vm2942, %v2896, -inf
      %v3123 = vmax.f32 %v3121, %v3122
      %v3124 = vrot.slane %v3123, 4
      %v3125 = vmax.f32 %v3123, %v3124
      %v3126 = vrot.slane %v3125, 2
      %v3127 = vmax.f32 %v3125, %v3126
      %v3128 = vrot.slane %v3127, 1
      %v3129 = vmax.f32 %v3127, %v3128
      %v3130 = vsel %vm2942, %v2897, -inf
      %v3131 = vsel %vm2942, %v2898, -inf
      %v3132 = vmax.f32 %v3130, %v3131
      %v3133 = vsel %vm2942, %v2899, -inf
      %v3134 = vmax.f32 %v3132, %v3133
      %v3135 = vrot.slane %v3134, 4
      %v3136 = vmax.f32 %v3134, %v3135
      %v3137 = vrot.slane %v3136, 2
      %v3138 = vmax.f32 %v3136, %v3137
      %v3139 = vrot.slane %v3138, 1
      %v3140 = vmax.f32 %v3138, %v3139
      %v3141 = vsel %vm2942, %v2900, -inf
      %v3142 = vsel %vm2942, %v2901, -inf
      %v3143 = vmax.f32 %v3141, %v3142
      %v3144 = vsel %vm2942, %v2902, -inf
      %v3145 = vmax.f32 %v3143, %v3144
      %v3146 = vrot.slane %v3145, 4
      %v3147 = vmax.f32 %v3145, %v3146
      %v3148 = vrot.slane %v3147, 2
      %v3149 = vmax.f32 %v3147, %v3148
      %v3150 = vrot.slane %v3149, 1
      %v3151 = vmax.f32 %v3149, %v3150
      %v3152 = vsel %vm2942, %v2903, -inf
      %v3153 = vsel %vm2942, %v2904, -inf
      %v3154 = vmax.f32 %v3152, %v3153
      %v3155 = vsel %vm2942, %v2905, -inf
      %v3156 = vmax.f32 %v3154, %v3155
      %v3157 = vrot.slane %v3156, 4
      %v3158 = vmax.f32 %v3156, %v3157
      %v3159 = vrot.slane %v3158, 2
      %v3160 = vmax.f32 %v3158, %v3159
      %v3161 = vrot.slane %v3160, 1
      %v3162 = vmax.f32 %v3160, %v3161
      %v3163 = vsel %vm2942, %v2906, -inf
      %v3164 = vsel %vm2942, %v2907, -inf
      %v3165 = vmax.f32 %v3163, %v3164
      %v3166 = vsel %vm2942, %v2908, -inf
      %v3167 = vmax.f32 %v3165, %v3166
      %v3168 = vrot.slane %v3167, 4
      %v3169 = vmax.f32 %v3167, %v3168
      %v3170 = vrot.slane %v3169, 2
      %v3171 = vmax.f32 %v3169, %v3170
      %v3172 = vrot.slane %v3171, 1
      %v3173 = vmax.f32 %v3171, %v3172
      %v3174 = vsel %vm2942, %v2909, -inf
      %v3175 = vsel %vm2942, %v2910, -inf
      %v3176 = vmax.f32 %v3174, %v3175
      %v3177 = vsel %vm2942, %v2911, -inf
      %v3178 = vmax.f32 %v3176, %v3177
      %v3179 = vrot.slane %v3178, 4
      %v3180 = vmax.f32 %v3178, %v3179
      %v3181 = vrot.slane %v3180, 2
      %v3182 = vmax.f32 %v3180, %v3181
      %v3183 = vrot.slane %v3182, 1
      %v3184 = vmax.f32 %v3182, %v3183
      %v3185 = vsel %vm2942, %v2912, -inf
      %v3186 = vsel %vm2942, %v2913, -inf
      %v3187 = vmax.f32 %v3185, %v3186
      %v3188 = vsel %vm2942, %v2914, -inf
      %v3189 = vmax.f32 %v3187, %v3188
      %v3190 = vrot.slane %v3189, 4
      %v3191 = vmax.f32 %v3189, %v3190
      %v3192 = vrot.slane %v3191, 2
      %v3193 = vmax.f32 %v3191, %v3192
      %v3194 = vrot.slane %v3193, 1
      %v3195 = vmax.f32 %v3193, %v3194
      %v3196 = vsel %vm2942, %v2915, -inf
      %v3197 = vsel %vm2942, %v2916, -inf
      %v3198 = vmax.f32 %v3196, %v3197
      %v3199 = vsel %vm2942, %v2917, -inf
      %v3200 = vmax.f32 %v3198, %v3199
      %v3201 = vrot.slane %v3200, 4
      %v3202 = vmax.f32 %v3200, %v3201
      %v3203 = vrot.slane %v3202, 2
      %v3204 = vmax.f32 %v3202, %v3203
      %v3205 = vrot.slane %v3204, 1
      %v3206 = vmax.f32 %v3204, %v3205
      %v3207 = vsel %vm2942, %v2918, -inf
      %v3208 = vsel %vm2942, %v2919, -inf
      %v3209 = vmax.f32 %v3207, %v3208
      %v3210 = vsel %vm2942, %v2920, -inf
      %v3211 = vmax.f32 %v3209, %v3210
      %v3212 = vrot.slane %v3211, 4
      %v3213 = vmax.f32 %v3211, %v3212
      %v3214 = vrot.slane %v3213, 2
      %v3215 = vmax.f32 %v3213, %v3214
      %v3216 = vrot.slane %v3215, 1
      %v3217 = vmax.f32 %v3215, %v3216
      %v3218 = vsel %vm2942, %v2921, -inf
      %v3219 = vsel %vm2942, %v2922, -inf
      %v3220 = vmax.f32 %v3218, %v3219
      %v3221 = vsel %vm2942, %v2923, -inf
      %v3222 = vmax.f32 %v3220, %v3221
      %v3223 = vrot.slane %v3222, 4
      %v3224 = vmax.f32 %v3222, %v3223
      %v3225 = vrot.slane %v3224, 2
      %v3226 = vmax.f32 %v3224, %v3225
      %v3227 = vrot.slane %v3226, 1
      %v3228 = vmax.f32 %v3226, %v3227
      %v3229 = vsel %vm2942, %v2924, -inf
      %v3230 = vsel %vm2942, %v2925, -inf
      %v3231 = vmax.f32 %v3229, %v3230
      %v3232 = vsel %vm2942, %v2926, -inf
      %v3233 = vmax.f32 %v3231, %v3232
      %v3234 = vrot.slane %v3233, 4
      %v3235 = vmax.f32 %v3233, %v3234
      %v3236 = vrot.slane %v3235, 2
      %v3237 = vmax.f32 %v3235, %v3236
      %v3238 = vrot.slane %v3237, 1
      %v3239 = vmax.f32 %v3237, %v3238
      %v3240 = vsel %vm2942, %v2927, -inf
      %v3241 = vsel %vm2942, %v2928, -inf
      %v3242 = vmax.f32 %v3240, %v3241
      %v3243 = vsel %vm2942, %v2929, -inf
      %v3244 = vmax.f32 %v3242, %v3243
      %v3245 = vrot.slane %v3244, 4
      %v3246 = vmax.f32 %v3244, %v3245
      %v3247 = vrot.slane %v3246, 2
      %v3248 = vmax.f32 %v3246, %v3247
      %v3249 = vrot.slane %v3248, 1
      %v3250 = vmax.f32 %v3248, %v3249
      %v3251 = vsel %vm2942, %v2930, -inf
      %v3252 = vsel %vm2942, %v2931, -inf
      %v3253 = vmax.f32 %v3251, %v3252
      %v3254 = vsel %vm2942, %v2932, -inf
      %v3255 = vmax.f32 %v3253, %v3254
      %v3256 = vrot.slane %v3255, 4
      %v3257 = vmax.f32 %v3255, %v3256
      %v3258 = vrot.slane %v3257, 2
      %v3259 = vmax.f32 %v3257, %v3258
      %v3260 = vrot.slane %v3259, 1
      %v3261 = vmax.f32 %v3259, %v3260
      %v3262 = vsel %vm2942, %v2933, -inf
      %v3263 = vsel %vm2942, %v2934, -inf
      %v3264 = vmax.f32 %v3262, %v3263
      %v3265 = vsel %vm2942, %v2935, -inf
      %v3266 = vmax.f32 %v3264, %v3265
      %v3267 = vrot.slane %v3266, 4
      %v3268 = vmax.f32 %v3266, %v3267
      %v3269 = vrot.slane %v3268, 2
      %v3270 = vmax.f32 %v3268, %v3269
      %v3271 = vrot.slane %v3270, 1
      %v3272 = vmax.f32 %v3270, %v3271
      %v3273 = vsel %vm2942, %v2936, -inf
      %v3274 = vsel %vm2942, %v2937, -inf
      %v3275 = vmax.f32 %v3273, %v3274
      %v3276 = vsel %vm2942, %v2938, -inf
      %v3277 = vmax.f32 %v3275, %v3276
      %v3278 = vrot.slane %v3277, 4
      %v3279 = vmax.f32 %v3277, %v3278
      %v3280 = vrot.slane %v3279, 2
      %v3281 = vmax.f32 %v3279, %v3280
      %v3282 = vrot.slane %v3281, 1
      %v3283 = vmax.f32 %v3281, %v3282
      %v3284 = vsel %vm2942, %v2939, -inf
      %v3285 = vsel %vm2942, %v2940, -inf
      %v3286 = vmax.f32 %v3284, %v3285
      %v3287 = vsel %vm2942, %v2941, -inf
      %v3288 = vmax.f32 %v3286, %v3287
      %v3289 = vrot.slane %v3288, 4
      %v3290 = vmax.f32 %v3288, %v3289
      %v3291 = vrot.slane %v3290, 2
      %v3292 = vmax.f32 %v3290, %v3291
      %v3293 = vrot.slane %v3292, 1
      %v3294 = vmax.f32 %v3292, %v3293
      %v3296 = vlaneseq
      %v3297 = vshrl.u32 %v3296, 7
      %v3298 = vsub.s32 0, %v3297
      %v3299 = vrot.slane %v2830, %v3298
      %v3301 = vadd.f32 %v2953, %v3299
      %v3302 = vadd.f32 %v2964, %v3299
      %v3303 = vadd.f32 %v2975, %v3299
      %v3304 = vadd.f32 %v2986, %v3299
      %v3305 = vadd.f32 %v2997, %v3299
      %v3306 = vadd.f32 %v3008, %v3299
      %v3307 = vadd.f32 %v3019, %v3299
      %v3308 = vadd.f32 %v3030, %v3299
      %v3309 = vadd.f32 %v3041, %v3299
      %v3310 = vadd.f32 %v3052, %v3299
      %v3311 = vadd.f32 %v3063, %v3299
      %v3312 = vadd.f32 %v3074, %v3299
      %v3313 = vadd.f32 %v3085, %v3299
      %v3314 = vadd.f32 %v3096, %v3299
      %v3315 = vadd.f32 %v3107, %v3299
      %v3316 = vadd.f32 %v3118, %v3299
      %v3317 = vadd.f32 %v3129, %v3299
      %v3318 = vadd.f32 %v3140, %v3299
      %v3319 = vadd.f32 %v3151, %v3299
      %v3320 = vadd.f32 %v3162, %v3299
      %v3321 = vadd.f32 %v3173, %v3299
      %v3322 = vadd.f32 %v3184, %v3299
      %v3323 = vadd.f32 %v3195, %v3299
      %v3324 = vadd.f32 %v3206, %v3299
      %v3325 = vadd.f32 %v3217, %v3299
      %v3326 = vadd.f32 %v3228, %v3299
      %v3327 = vadd.f32 %v3239, %v3299
      %v3328 = vadd.f32 %v3250, %v3299
      %v3329 = vadd.f32 %v3261, %v3299
      %v3330 = vadd.f32 %v3272, %v3299
      %v3331 = vadd.f32 %v3283, %v3299
      %v3332 = vadd.f32 %v3294, %v3299
      %v3333 = vtanh.pop %v3301
      %v3334 = vtanh.pop %v3302
      %v3335 = vtanh.pop %v3303
      %v3336 = vtanh.pop %v3304
      %v3337 = vtanh.pop %v3305
      %v3338 = vtanh.pop %v3306
      %v3339 = vtanh.pop %v3307
      %v3340 = vtanh.pop %v3308
      %v3341 = vtanh.pop %v3309
      %v3342 = vtanh.pop %v3310
      %v3343 = vtanh.pop %v3311
      %v3344 = vtanh.pop %v3312
      %v3345 = vtanh.pop %v3313
      %v3346 = vtanh.pop %v3314
      %v3347 = vtanh.pop %v3315
      %v3348 = vtanh.pop %v3316
      %v3349 = vtanh.pop %v3317
      %v3350 = vtanh.pop %v3318
      %v3351 = vtanh.pop %v3319
      %v3352 = vtanh.pop %v3320
      %v3353 = vtanh.pop %v3321
      %v3354 = vtanh.pop %v3322
      %v3355 = vtanh.pop %v3323
      %v3356 = vtanh.pop %v3324
      %v3357 = vtanh.pop %v3325
      %v3358 = vtanh.pop %v3326
      %v3359 = vtanh.pop %v3327
      %v3360 = vtanh.pop %v3328
      %v3361 = vtanh.pop %v3329
      %v3362 = vtanh.pop %v3330
      %v3363 = vtanh.pop %v3331
      %v3364 = vtanh.pop %v3332
      %v3365 = vpack.c.bf16 %v3333, %v3333
      %v3366 = vpack.c.bf16 %v3334, %v3334
      %v3367 = vpack.c.bf16 %v3335, %v3335
      %v3368 = vpack.c.bf16 %v3336, %v3336
      %v3369 = vpack.c.bf16 %v3337, %v3337
      %v3370 = vpack.c.bf16 %v3338, %v3338
      %v3371 = vpack.c.bf16 %v3339, %v3339
      %v3372 = vpack.c.bf16 %v3340, %v3340
      %v3373 = vpack.c.bf16 %v3341, %v3341
      %v3374 = vpack.c.bf16 %v3342, %v3342
      %v3375 = vpack.c.bf16 %v3343, %v3343
      %v3376 = vpack.c.bf16 %v3344, %v3344
      %v3377 = vpack.c.bf16 %v3345, %v3345
      %v3378 = vpack.c.bf16 %v3346, %v3346
      %v3379 = vpack.c.bf16 %v3347, %v3347
      %v3380 = vpack.c.bf16 %v3348, %v3348
      %v3381 = vpack.c.bf16 %v3349, %v3349
      %v3382 = vpack.c.bf16 %v3350, %v3350
      %v3383 = vpack.c.bf16 %v3351, %v3351
      %v3384 = vpack.c.bf16 %v3352, %v3352
      %v3385 = vpack.c.bf16 %v3353, %v3353
      %v3386 = vpack.c.bf16 %v3354, %v3354
      %v3387 = vpack.c.bf16 %v3355, %v3355
      %v3388 = vpack.c.bf16 %v3356, %v3356
      %v3389 = vpack.c.bf16 %v3357, %v3357
      %v3390 = vpack.c.bf16 %v3358, %v3358
      %v3391 = vpack.c.bf16 %v3359, %v3359
      %v3392 = vpack.c.bf16 %v3360, %v3360
      %v3393 = vpack.c.bf16 %v3361, %v3361
      %v3394 = vpack.c.bf16 %v3362, %v3362
      %v3395 = vpack.c.bf16 %v3363, %v3363
      %v3396 = vpack.c.bf16 %v3364, %v3364
      %v3397 = vld [vmem:[%s3] sm:$0xf]
      %v3398 = vld [vmem:[%s3 + $0x4] sm:$0xf]
      %v3399 = vld [vmem:[%s3 + $0x8] sm:$0xf]
      %v3400 = vld [vmem:[%s3 + $0xc] sm:$0xf]
      %vm3401 = vcmp.ge.s32.totalorder %v2827, 3
      %vm3402 = vcmp.ge.s32.totalorder %v2828, 3
      %vm3403 = vcmp.ge.s32.totalorder %v2829, 3
      %vm3404 = vcmp.lt.s32.totalorder %v2827, 5
      %vm3405 = vcmp.lt.s32.totalorder %v2828, 5
      %vm3406 = vcmp.lt.s32.totalorder %v2829, 5
      %vm3407 = vmand %vm3401, %vm3404
      %vm3408 = vmand %vm3402, %vm3405
      %vm3409 = vmand %vm3403, %vm3406
      %v3410 = vsel %vm3407, 1, 0
      %v3411 = vsel %vm3408, 1, 0
      %v3412 = vsel %vm3409, 1, 0
      %vm3413 = vcmp.eq.s32.totalorder %v3410, 1
      %vm3414 = vcmp.eq.s32.totalorder %v3411, 1
      %vm3415 = vcmp.eq.s32.totalorder %v3412, 1
      %v3416 = vsel %vm3413, %v2731, -1e+30
      %v3417 = vsel %vm3414, %v2732, -1e+30
      %v3418 = vsel %vm3415, %v2733, -1e+30
      %v3419 = vsel %vm3413, %v2734, -1e+30
      %v3420 = vsel %vm3414, %v2735, -1e+30
      %v3421 = vsel %vm3415, %v2736, -1e+30
      %v3422 = vsel %vm3413, %v2737, -1e+30
      %v3423 = vsel %vm3414, %v2738, -1e+30
      %v3424 = vsel %vm3415, %v2739, -1e+30
      %v3425 = vsel %vm3413, %v2740, -1e+30
      %v3426 = vsel %vm3414, %v2741, -1e+30
      %v3427 = vsel %vm3415, %v2742, -1e+30
      %v3428 = vsel %vm3413, %v2743, -1e+30
      %v3429 = vsel %vm3414, %v2744, -1e+30
      %v3430 = vsel %vm3415, %v2745, -1e+30
      %v3431 = vsel %vm3413, %v2746, -1e+30
      %v3432 = vsel %vm3414, %v2747, -1e+30
      %v3433 = vsel %vm3415, %v2748, -1e+30
      %v3434 = vsel %vm3413, %v2749, -1e+30
      %v3435 = vsel %vm3414, %v2750, -1e+30
      %v3436 = vsel %vm3415, %v2751, -1e+30
      %v3437 = vsel %vm3413, %v2752, -1e+30
      %v3438 = vsel %vm3414, %v2753, -1e+30
      %v3439 = vsel %vm3415, %v2754, -1e+30
      %v3440 = vsel %vm3413, %v2755, -1e+30
      %v3441 = vsel %vm3414, %v2756, -1e+30
      %v3442 = vsel %vm3415, %v2757, -1e+30
      %v3443 = vsel %vm3413, %v2758, -1e+30
      %v3444 = vsel %vm3414, %v2759, -1e+30
      %v3445 = vsel %vm3415, %v2760, -1e+30
      %v3446 = vsel %vm3413, %v2761, -1e+30
      %v3447 = vsel %vm3414, %v2762, -1e+30
      %v3448 = vsel %vm3415, %v2763, -1e+30
      %v3449 = vsel %vm3413, %v2764, -1e+30
      %v3450 = vsel %vm3414, %v2765, -1e+30
      %v3451 = vsel %vm3415, %v2766, -1e+30
      %v3452 = vsel %vm3413, %v2767, -1e+30
      %v3453 = vsel %vm3414, %v2768, -1e+30
      %v3454 = vsel %vm3415, %v2769, -1e+30
      %v3455 = vsel %vm3413, %v2770, -1e+30
      %v3456 = vsel %vm3414, %v2771, -1e+30
      %v3457 = vsel %vm3415, %v2772, -1e+30
      %v3458 = vsel %vm3413, %v2773, -1e+30
      %v3459 = vsel %vm3414, %v2774, -1e+30
      %v3460 = vsel %vm3415, %v2775, -1e+30
      %v3461 = vsel %vm3413, %v2776, -1e+30
      %v3462 = vsel %vm3414, %v2777, -1e+30
      %v3463 = vsel %vm3415, %v2778, -1e+30
      %v3464 = vsel %vm3413, %v2779, -1e+30
      %v3465 = vsel %vm3414, %v2780, -1e+30
      %v3466 = vsel %vm3415, %v2781, -1e+30
      %v3467 = vsel %vm3413, %v2782, -1e+30
      %v3468 = vsel %vm3414, %v2783, -1e+30
      %v3469 = vsel %vm3415, %v2784, -1e+30
      %v3470 = vsel %vm3413, %v2785, -1e+30
      %v3471 = vsel %vm3414, %v2786, -1e+30
      %v3472 = vsel %vm3415, %v2787, -1e+30
      %v3473 = vsel %vm3413, %v2788, -1e+30
      %v3474 = vsel %vm3414, %v2789, -1e+30
      %v3475 = vsel %vm3415, %v2790, -1e+30
      %v3476 = vsel %vm3413, %v2791, -1e+30
      %v3477 = vsel %vm3414, %v2792, -1e+30
      %v3478 = vsel %vm3415, %v2793, -1e+30
      %v3479 = vsel %vm3413, %v2794, -1e+30
      %v3480 = vsel %vm3414, %v2795, -1e+30
      %v3481 = vsel %vm3415, %v2796, -1e+30
      %v3482 = vsel %vm3413, %v2797, -1e+30
      %v3483 = vsel %vm3414, %v2798, -1e+30
      %v3484 = vsel %vm3415, %v2799, -1e+30
      %v3485 = vsel %vm3413, %v2800, -1e+30
      %v3486 = vsel %vm3414, %v2801, -1e+30
      %v3487 = vsel %vm3415, %v2802, -1e+30
      %v3488 = vsel %vm3413, %v2803, -1e+30
      %v3489 = vsel %vm3414, %v2804, -1e+30
      %v3490 = vsel %vm3415, %v2805, -1e+30
      %v3491 = vsel %vm3413, %v2806, -1e+30
      %v3492 = vsel %vm3414, %v2807, -1e+30
      %v3493 = vsel %vm3415, %v2808, -1e+30
      %v3494 = vsel %vm3413, %v2809, -1e+30
      %v3495 = vsel %vm3414, %v2810, -1e+30
      %v3496 = vsel %vm3415, %v2811, -1e+30
      %v3497 = vsel %vm3413, %v2812, -1e+30
      %v3498 = vsel %vm3414, %v2813, -1e+30
      %v3499 = vsel %vm3415, %v2814, -1e+30
      %v3500 = vsel %vm3413, %v2815, -1e+30
      %v3501 = vsel %vm3414, %v2816, -1e+30
      %v3502 = vsel %vm3415, %v2817, -1e+30
      %v3503 = vsel %vm3413, %v2818, -1e+30
      %v3504 = vsel %vm3414, %v2819, -1e+30
      %v3505 = vsel %vm3415, %v2820, -1e+30
      %v3506 = vsel %vm3413, %v2821, -1e+30
      %v3507 = vsel %vm3414, %v2822, -1e+30
      %v3508 = vsel %vm3415, %v2823, -1e+30
      %v3509 = vsel %vm3413, %v2824, -1e+30
      %v3510 = vsel %vm3414, %v2825, -1e+30
      %v3511 = vsel %vm3415, 0.0, -1e+30
      %v3512 = vsel %vm2942, %v3416, -inf
      %v3513 = vsel %vm2942, %v3417, -inf
      %v3514 = vmax.f32 %v3512, %v3513
      %v3515 = vsel %vm2942, %v3418, -inf
      %v3516 = vmax.f32 %v3514, %v3515
      %v3517 = vrot.slane %v3516, 4
      %v3518 = vmax.f32 %v3516, %v3517
      %v3519 = vrot.slane %v3518, 2
      %v3520 = vmax.f32 %v3518, %v3519
      %v3521 = vrot.slane %v3520, 1
      %v3522 = vmax.f32 %v3520, %v3521
      %v3523 = vsel %vm2942, %v3419, -inf
      %v3524 = vsel %vm2942, %v3420, -inf
      %v3525 = vmax.f32 %v3523, %v3524
      %v3526 = vsel %vm2942, %v3421, -inf
      %v3527 = vmax.f32 %v3525, %v3526
      %v3528 = vrot.slane %v3527, 4
      %v3529 = vmax.f32 %v3527, %v3528
      %v3530 = vrot.slane %v3529, 2
      %v3531 = vmax.f32 %v3529, %v3530
      %v3532 = vrot.slane %v3531, 1
      %v3533 = vmax.f32 %v3531, %v3532
      %v3534 = vsel %vm2942, %v3422, -inf
      %v3535 = vsel %vm2942, %v3423, -inf
      %v3536 = vmax.f32 %v3534, %v3535
      %v3537 = vsel %vm2942, %v3424, -inf
      %v3538 = vmax.f32 %v3536, %v3537
      %v3539 = vrot.slane %v3538, 4
      %v3540 = vmax.f32 %v3538, %v3539
      %v3541 = vrot.slane %v3540, 2
      %v3542 = vmax.f32 %v3540, %v3541
      %v3543 = vrot.slane %v3542, 1
      %v3544 = vmax.f32 %v3542, %v3543
      %v3545 = vsel %vm2942, %v3425, -inf
      %v3546 = vsel %vm2942, %v3426, -inf
      %v3547 = vmax.f32 %v3545, %v3546
      %v3548 = vsel %vm2942, %v3427, -inf
      %v3549 = vmax.f32 %v3547, %v3548
      %v3550 = vrot.slane %v3549, 4
      %v3551 = vmax.f32 %v3549, %v3550
      %v3552 = vrot.slane %v3551, 2
      %v3553 = vmax.f32 %v3551, %v3552
      %v3554 = vrot.slane %v3553, 1
      %v3555 = vmax.f32 %v3553, %v3554
      %v3556 = vsel %vm2942, %v3428, -inf
      %v3557 = vsel %vm2942, %v3429, -inf
      %v3558 = vmax.f32 %v3556, %v3557
      %v3559 = vsel %vm2942, %v3430, -inf
      %v3560 = vmax.f32 %v3558, %v3559
      %v3561 = vrot.slane %v3560, 4
      %v3562 = vmax.f32 %v3560, %v3561
      %v3563 = vrot.slane %v3562, 2
      %v3564 = vmax.f32 %v3562, %v3563
      %v3565 = vrot.slane %v3564, 1
      %v3566 = vmax.f32 %v3564, %v3565
      %v3567 = vsel %vm2942, %v3431, -inf
      %v3568 = vsel %vm2942, %v3432, -inf
      %v3569 = vmax.f32 %v3567, %v3568
      %v3570 = vsel %vm2942, %v3433, -inf
      %v3571 = vmax.f32 %v3569, %v3570
      %v3572 = vrot.slane %v3571, 4
      %v3573 = vmax.f32 %v3571, %v3572
      %v3574 = vrot.slane %v3573, 2
      %v3575 = vmax.f32 %v3573, %v3574
      %v3576 = vrot.slane %v3575, 1
      %v3577 = vmax.f32 %v3575, %v3576
      %v3578 = vsel %vm2942, %v3434, -inf
      %v3579 = vsel %vm2942, %v3435, -inf
      %v3580 = vmax.f32 %v3578, %v3579
      %v3581 = vsel %vm2942, %v3436, -inf
      %v3582 = vmax.f32 %v3580, %v3581
      %v3583 = vrot.slane %v3582, 4
      %v3584 = vmax.f32 %v3582, %v3583
      %v3585 = vrot.slane %v3584, 2
      %v3586 = vmax.f32 %v3584, %v3585
      %v3587 = vrot.slane %v3586, 1
      %v3588 = vmax.f32 %v3586, %v3587
      %v3589 = vsel %vm2942, %v3437, -inf
      %v3590 = vsel %vm2942, %v3438, -inf
      %v3591 = vmax.f32 %v3589, %v3590
      %v3592 = vsel %vm2942, %v3439, -inf
      %v3593 = vmax.f32 %v3591, %v3592
      %v3594 = vrot.slane %v3593, 4
      %v3595 = vmax.f32 %v3593, %v3594
      %v3596 = vrot.slane %v3595, 2
      %v3597 = vmax.f32 %v3595, %v3596
      %v3598 = vrot.slane %v3597, 1
      %v3599 = vmax.f32 %v3597, %v3598
      %v3600 = vsel %vm2942, %v3440, -inf
      %v3601 = vsel %vm2942, %v3441, -inf
      %v3602 = vmax.f32 %v3600, %v3601
      %v3603 = vsel %vm2942, %v3442, -inf
      %v3604 = vmax.f32 %v3602, %v3603
      %v3605 = vrot.slane %v3604, 4
      %v3606 = vmax.f32 %v3604, %v3605
      %v3607 = vrot.slane %v3606, 2
      %v3608 = vmax.f32 %v3606, %v3607
      %v3609 = vrot.slane %v3608, 1
      %v3610 = vmax.f32 %v3608, %v3609
      %v3611 = vsel %vm2942, %v3443, -inf
      %v3612 = vsel %vm2942, %v3444, -inf
      %v3613 = vmax.f32 %v3611, %v3612
      %v3614 = vsel %vm2942, %v3445, -inf
      %v3615 = vmax.f32 %v3613, %v3614
      %v3616 = vrot.slane %v3615, 4
      %v3617 = vmax.f32 %v3615, %v3616
      %v3618 = vrot.slane %v3617, 2
      %v3619 = vmax.f32 %v3617, %v3618
      %v3620 = vrot.slane %v3619, 1
      %v3621 = vmax.f32 %v3619, %v3620
      %v3622 = vsel %vm2942, %v3446, -inf
      %v3623 = vsel %vm2942, %v3447, -inf
      %v3624 = vmax.f32 %v3622, %v3623
      %v3625 = vsel %vm2942, %v3448, -inf
      %v3626 = vmax.f32 %v3624, %v3625
      %v3627 = vrot.slane %v3626, 4
      %v3628 = vmax.f32 %v3626, %v3627
      %v3629 = vrot.slane %v3628, 2
      %v3630 = vmax.f32 %v3628, %v3629
      %v3631 = vrot.slane %v3630, 1
      %v3632 = vmax.f32 %v3630, %v3631
      %v3633 = vsel %vm2942, %v3449, -inf
      %v3634 = vsel %vm2942, %v3450, -inf
      %v3635 = vmax.f32 %v3633, %v3634
      %v3636 = vsel %vm2942, %v3451, -inf
      %v3637 = vmax.f32 %v3635, %v3636
      %v3638 = vrot.slane %v3637, 4
      %v3639 = vmax.f32 %v3637, %v3638
      %v3640 = vrot.slane %v3639, 2
      %v3641 = vmax.f32 %v3639, %v3640
      %v3642 = vrot.slane %v3641, 1
      %v3643 = vmax.f32 %v3641, %v3642
      %v3644 = vsel %vm2942, %v3452, -inf
      %v3645 = vsel %vm2942, %v3453, -inf
      %v3646 = vmax.f32 %v3644, %v3645
      %v3647 = vsel %vm2942, %v3454, -inf
      %v3648 = vmax.f32 %v3646, %v3647
      %v3649 = vrot.slane %v3648, 4
      %v3650 = vmax.f32 %v3648, %v3649
      %v3651 = vrot.slane %v3650, 2
      %v3652 = vmax.f32 %v3650, %v3651
      %v3653 = vrot.slane %v3652, 1
      %v3654 = vmax.f32 %v3652, %v3653
      %v3655 = vsel %vm2942, %v3455, -inf
      %v3656 = vsel %vm2942, %v3456, -inf
      %v3657 = vmax.f32 %v3655, %v3656
      %v3658 = vsel %vm2942, %v3457, -inf
      %v3659 = vmax.f32 %v3657, %v3658
      %v3660 = vrot.slane %v3659, 4
      %v3661 = vmax.f32 %v3659, %v3660
      %v3662 = vrot.slane %v3661, 2
      %v3663 = vmax.f32 %v3661, %v3662
      %v3664 = vrot.slane %v3663, 1
      %v3665 = vmax.f32 %v3663, %v3664
      %v3666 = vsel %vm2942, %v3458, -inf
      %v3667 = vsel %vm2942, %v3459, -inf
      %v3668 = vmax.f32 %v3666, %v3667
      %v3669 = vsel %vm2942, %v3460, -inf
      %v3670 = vmax.f32 %v3668, %v3669
      %v3671 = vrot.slane %v3670, 4
      %v3672 = vmax.f32 %v3670, %v3671
      %v3673 = vrot.slane %v3672, 2
      %v3674 = vmax.f32 %v3672, %v3673
      %v3675 = vrot.slane %v3674, 1
      %v3676 = vmax.f32 %v3674, %v3675
      %v3677 = vsel %vm2942, %v3461, -inf
      %v3678 = vsel %vm2942, %v3462, -inf
      %v3679 = vmax.f32 %v3677, %v3678
      %v3680 = vsel %vm2942, %v3463, -inf
      %v3681 = vmax.f32 %v3679, %v3680
      %v3682 = vrot.slane %v3681, 4
      %v3683 = vmax.f32 %v3681, %v3682
      %v3684 = vrot.slane %v3683, 2
      %v3685 = vmax.f32 %v3683, %v3684
      %v3686 = vrot.slane %v3685, 1
      %v3687 = vmax.f32 %v3685, %v3686
      %v3688 = vsel %vm2942, %v3464, -inf
      %v3689 = vsel %vm2942, %v3465, -inf
      %v3690 = vmax.f32 %v3688, %v3689
      %v3691 = vsel %vm2942, %v3466, -inf
      %v3692 = vmax.f32 %v3690, %v3691
      %v3693 = vrot.slane %v3692, 4
      %v3694 = vmax.f32 %v3692, %v3693
      %v3695 = vrot.slane %v3694, 2
      %v3696 = vmax.f32 %v3694, %v3695
      %v3697 = vrot.slane %v3696, 1
      %v3698 = vmax.f32 %v3696, %v3697
      %v3699 = vsel %vm2942, %v3467, -inf
      %v3700 = vsel %vm2942, %v3468, -inf
      %v3701 = vmax.f32 %v3699, %v3700
      %v3702 = vsel %vm2942, %v3469, -inf
      %v3703 = vmax.f32 %v3701, %v3702
      %v3704 = vrot.slane %v3703, 4
      %v3705 = vmax.f32 %v3703, %v3704
      %v3706 = vrot.slane %v3705, 2
      %v3707 = vmax.f32 %v3705, %v3706
      %v3708 = vrot.slane %v3707, 1
      %v3709 = vmax.f32 %v3707, %v3708
      %v3710 = vsel %vm2942, %v3470, -inf
      %v3711 = vsel %vm2942, %v3471, -inf
      %v3712 = vmax.f32 %v3710, %v3711
      %v3713 = vsel %vm2942, %v3472, -inf
      %v3714 = vmax.f32 %v3712, %v3713
      %v3715 = vrot.slane %v3714, 4
      %v3716 = vmax.f32 %v3714, %v3715
      %v3717 = vrot.slane %v3716, 2
      %v3718 = vmax.f32 %v3716, %v3717
      %v3719 = vrot.slane %v3718, 1
      %v3720 = vmax.f32 %v3718, %v3719
      %v3721 = vsel %vm2942, %v3473, -inf
      %v3722 = vsel %vm2942, %v3474, -inf
      %v3723 = vmax.f32 %v3721, %v3722
      %v3724 = vsel %vm2942, %v3475, -inf
      %v3725 = vmax.f32 %v3723, %v3724
      %v3726 = vrot.slane %v3725, 4
      %v3727 = vmax.f32 %v3725, %v3726
      %v3728 = vrot.slane %v3727, 2
      %v3729 = vmax.f32 %v3727, %v3728
      %v3730 = vrot.slane %v3729, 1
      %v3731 = vmax.f32 %v3729, %v3730
      %v3732 = vsel %vm2942, %v3476, -inf
      %v3733 = vsel %vm2942, %v3477, -inf
      %v3734 = vmax.f32 %v3732, %v3733
      %v3735 = vsel %vm2942, %v3478, -inf
      %v3736 = vmax.f32 %v3734, %v3735
      %v3737 = vrot.slane %v3736, 4
      %v3738 = vmax.f32 %v3736, %v3737
      %v3739 = vrot.slane %v3738, 2
      %v3740 = vmax.f32 %v3738, %v3739
      %v3741 = vrot.slane %v3740, 1
      %v3742 = vmax.f32 %v3740, %v3741
      %v3743 = vsel %vm2942, %v3479, -inf
      %v3744 = vsel %vm2942, %v3480, -inf
      %v3745 = vmax.f32 %v3743, %v3744
      %v3746 = vsel %vm2942, %v3481, -inf
      %v3747 = vmax.f32 %v3745, %v3746
      %v3748 = vrot.slane %v3747, 4
      %v3749 = vmax.f32 %v3747, %v3748
      %v3750 = vrot.slane %v3749, 2
      %v3751 = vmax.f32 %v3749, %v3750
      %v3752 = vrot.slane %v3751, 1
      %v3753 = vmax.f32 %v3751, %v3752
      %v3754 = vsel %vm2942, %v3482, -inf
      %v3755 = vsel %vm2942, %v3483, -inf
      %v3756 = vmax.f32 %v3754, %v3755
      %v3757 = vsel %vm2942, %v3484, -inf
      %v3758 = vmax.f32 %v3756, %v3757
      %v3759 = vrot.slane %v3758, 4
      %v3760 = vmax.f32 %v3758, %v3759
      %v3761 = vrot.slane %v3760, 2
      %v3762 = vmax.f32 %v3760, %v3761
      %v3763 = vrot.slane %v3762, 1
      %v3764 = vmax.f32 %v3762, %v3763
      %v3765 = vsel %vm2942, %v3485, -inf
      %v3766 = vsel %vm2942, %v3486, -inf
      %v3767 = vmax.f32 %v3765, %v3766
      %v3768 = vsel %vm2942, %v3487, -inf
      %v3769 = vmax.f32 %v3767, %v3768
      %v3770 = vrot.slane %v3769, 4
      %v3771 = vmax.f32 %v3769, %v3770
      %v3772 = vrot.slane %v3771, 2
      %v3773 = vmax.f32 %v3771, %v3772
      %v3774 = vrot.slane %v3773, 1
      %v3775 = vmax.f32 %v3773, %v3774
      %v3776 = vsel %vm2942, %v3488, -inf
      %v3777 = vsel %vm2942, %v3489, -inf
      %v3778 = vmax.f32 %v3776, %v3777
      %v3779 = vsel %vm2942, %v3490, -inf
      %v3780 = vmax.f32 %v3778, %v3779
      %v3781 = vrot.slane %v3780, 4
      %v3782 = vmax.f32 %v3780, %v3781
      %v3783 = vrot.slane %v3782, 2
      %v3784 = vmax.f32 %v3782, %v3783
      %v3785 = vrot.slane %v3784, 1
      %v3786 = vmax.f32 %v3784, %v3785
      %v3787 = vsel %vm2942, %v3491, -inf
      %v3788 = vsel %vm2942, %v3492, -inf
      %v3789 = vmax.f32 %v3787, %v3788
      %v3790 = vsel %vm2942, %v3493, -inf
      %v3791 = vmax.f32 %v3789, %v3790
      %v3792 = vrot.slane %v3791, 4
      %v3793 = vmax.f32 %v3791, %v3792
      %v3794 = vrot.slane %v3793, 2
      %v3795 = vmax.f32 %v3793, %v3794
      %v3796 = vrot.slane %v3795, 1
      %v3797 = vmax.f32 %v3795, %v3796
      %v3798 = vsel %vm2942, %v3494, -inf
      %v3799 = vsel %vm2942, %v3495, -inf
      %v3800 = vmax.f32 %v3798, %v3799
      %v3801 = vsel %vm2942, %v3496, -inf
      %v3802 = vmax.f32 %v3800, %v3801
      %v3803 = vrot.slane %v3802, 4
      %v3804 = vmax.f32 %v3802, %v3803
      %v3805 = vrot.slane %v3804, 2
      %v3806 = vmax.f32 %v3804, %v3805
      %v3807 = vrot.slane %v3806, 1
      %v3808 = vmax.f32 %v3806, %v3807
      %v3809 = vsel %vm2942, %v3497, -inf
      %v3810 = vsel %vm2942, %v3498, -inf
      %v3811 = vmax.f32 %v3809, %v3810
      %v3812 = vsel %vm2942, %v3499, -inf
      %v3813 = vmax.f32 %v3811, %v3812
      %v3814 = vrot.slane %v3813, 4
      %v3815 = vmax.f32 %v3813, %v3814
      %v3816 = vrot.slane %v3815, 2
      %v3817 = vmax.f32 %v3815, %v3816
      %v3818 = vrot.slane %v3817, 1
      %v3819 = vmax.f32 %v3817, %v3818
      %v3820 = vsel %vm2942, %v3500, -inf
      %v3821 = vsel %vm2942, %v3501, -inf
      %v3822 = vmax.f32 %v3820, %v3821
      %v3823 = vsel %vm2942, %v3502, -inf
      %v3824 = vmax.f32 %v3822, %v3823
      %v3825 = vrot.slane %v3824, 4
      %v3826 = vmax.f32 %v3824, %v3825
      %v3827 = vrot.slane %v3826, 2
      %v3828 = vmax.f32 %v3826, %v3827
      %v3829 = vrot.slane %v3828, 1
      %v3830 = vmax.f32 %v3828, %v3829
      %v3831 = vsel %vm2942, %v3503, -inf
      %v3832 = vsel %vm2942, %v3504, -inf
      %v3833 = vmax.f32 %v3831, %v3832
      %v3834 = vsel %vm2942, %v3505, -inf
      %v3835 = vmax.f32 %v3833, %v3834
      %v3836 = vrot.slane %v3835, 4
      %v3837 = vmax.f32 %v3835, %v3836
      %v3838 = vrot.slane %v3837, 2
      %v3839 = vmax.f32 %v3837, %v3838
      %v3840 = vrot.slane %v3839, 1
      %v3841 = vmax.f32 %v3839, %v3840
      %v3842 = vsel %vm2942, %v3506, -inf
      %v3843 = vsel %vm2942, %v3507, -inf
      %v3844 = vmax.f32 %v3842, %v3843
      %v3845 = vsel %vm2942, %v3508, -inf
      %v3846 = vmax.f32 %v3844, %v3845
      %v3847 = vrot.slane %v3846, 4
      %v3848 = vmax.f32 %v3846, %v3847
      %v3849 = vrot.slane %v3848, 2
      %v3850 = vmax.f32 %v3848, %v3849
      %v3851 = vrot.slane %v3850, 1
      %v3852 = vmax.f32 %v3850, %v3851
      %v3853 = vsel %vm2942, %v3509, -inf
      %v3854 = vsel %vm2942, %v3510, -inf
      %v3855 = vmax.f32 %v3853, %v3854
      %v3856 = vsel %vm2942, %v3511, -inf
      %v3857 = vmax.f32 %v3855, %v3856
      %v3858 = vrot.slane %v3857, 4
      %v3859 = vmax.f32 %v3857, %v3858
      %v3860 = vrot.slane %v3859, 2
      %v3861 = vmax.f32 %v3859, %v3860
      %v3862 = vrot.slane %v3861, 1
      %v3863 = vmax.f32 %v3861, %v3862
      %v3864 = vadd.f32 %v3522, %v3299
      %v3865 = vadd.f32 %v3533, %v3299
      %v3866 = vadd.f32 %v3544, %v3299
      %v3867 = vadd.f32 %v3555, %v3299
      %v3868 = vadd.f32 %v3566, %v3299
      %v3869 = vadd.f32 %v3577, %v3299
      %v3870 = vadd.f32 %v3588, %v3299
      %v3871 = vadd.f32 %v3599, %v3299
      %v3872 = vadd.f32 %v3610, %v3299
      %v3873 = vadd.f32 %v3621, %v3299
      %v3874 = vadd.f32 %v3632, %v3299
      %v3875 = vadd.f32 %v3643, %v3299
      %v3876 = vadd.f32 %v3654, %v3299
      %v3877 = vadd.f32 %v3665, %v3299
      %v3878 = vadd.f32 %v3676, %v3299
      %v3879 = vadd.f32 %v3687, %v3299
      %v3880 = vadd.f32 %v3698, %v3299
      %v3881 = vadd.f32 %v3709, %v3299
      %v3882 = vadd.f32 %v3720, %v3299
      %v3883 = vadd.f32 %v3731, %v3299
      %v3884 = vadd.f32 %v3742, %v3299
      %v3885 = vadd.f32 %v3753, %v3299
      %v3886 = vadd.f32 %v3764, %v3299
      %v3887 = vadd.f32 %v3775, %v3299
      %v3888 = vadd.f32 %v3786, %v3299
      %v3889 = vadd.f32 %v3797, %v3299
      %v3890 = vadd.f32 %v3808, %v3299
      %v3891 = vadd.f32 %v3819, %v3299
      %v3892 = vadd.f32 %v3830, %v3299
      %v3893 = vadd.f32 %v3841, %v3299
      %v3894 = vadd.f32 %v3852, %v3299
      %v3895 = vadd.f32 %v3863, %v3299
      %v3896 = vtanh.pop %v3864
      %v3897 = vtanh.pop %v3865
      %v3898 = vtanh.pop %v3866
      %v3899 = vtanh.pop %v3867
      %v3900 = vtanh.pop %v3868
      %v3901 = vtanh.pop %v3869
      %v3902 = vtanh.pop %v3870
      %v3903 = vtanh.pop %v3871
      %v3904 = vtanh.pop %v3872
      %v3905 = vtanh.pop %v3873
      %v3906 = vtanh.pop %v3874
      %v3907 = vtanh.pop %v3875
      %v3908 = vtanh.pop %v3876
      %v3909 = vtanh.pop %v3877
      %v3910 = vtanh.pop %v3878
      %v3911 = vtanh.pop %v3879
      %v3912 = vtanh.pop %v3880
      %v3913 = vtanh.pop %v3881
      %v3914 = vtanh.pop %v3882
      %v3915 = vtanh.pop %v3883
      %v3916 = vtanh.pop %v3884
      %v3917 = vtanh.pop %v3885
      %v3918 = vtanh.pop %v3886
      %v3919 = vtanh.pop %v3887
      %v3920 = vtanh.pop %v3888
      %v3921 = vtanh.pop %v3889
      %v3922 = vtanh.pop %v3890
      %v3923 = vtanh.pop %v3891
      %v3924 = vtanh.pop %v3892
      %v3925 = vtanh.pop %v3893
      %v3926 = vtanh.pop %v3894
      %v3927 = vtanh.pop %v3895
      %v3928 = vpack.c.bf16 %v3896, %v3896
      %v3929 = vpack.c.bf16 %v3897, %v3897
      %v3930 = vpack.c.bf16 %v3898, %v3898
      %v3931 = vpack.c.bf16 %v3899, %v3899
      %v3932 = vpack.c.bf16 %v3900, %v3900
      %v3933 = vpack.c.bf16 %v3901, %v3901
      %v3934 = vpack.c.bf16 %v3902, %v3902
      %v3935 = vpack.c.bf16 %v3903, %v3903
      %v3936 = vpack.c.bf16 %v3904, %v3904
      %v3937 = vpack.c.bf16 %v3905, %v3905
      %v3938 = vpack.c.bf16 %v3906, %v3906
      %v3939 = vpack.c.bf16 %v3907, %v3907
      %v3940 = vpack.c.bf16 %v3908, %v3908
      %v3941 = vpack.c.bf16 %v3909, %v3909
      %v3942 = vpack.c.bf16 %v3910, %v3910
      %v3943 = vpack.c.bf16 %v3911, %v3911
      %v3944 = vpack.c.bf16 %v3912, %v3912
      %v3945 = vpack.c.bf16 %v3913, %v3913
      %v3946 = vpack.c.bf16 %v3914, %v3914
      %v3947 = vpack.c.bf16 %v3915, %v3915
      %v3948 = vpack.c.bf16 %v3916, %v3916
      %v3949 = vpack.c.bf16 %v3917, %v3917
      %v3950 = vpack.c.bf16 %v3918, %v3918
      %v3951 = vpack.c.bf16 %v3919, %v3919
      %v3952 = vpack.c.bf16 %v3920, %v3920
      %v3953 = vpack.c.bf16 %v3921, %v3921
      %v3954 = vpack.c.bf16 %v3922, %v3922
      %v3955 = vpack.c.bf16 %v3923, %v3923
      %v3956 = vpack.c.bf16 %v3924, %v3924
      %v3957 = vpack.c.bf16 %v3925, %v3925
      %v3958 = vpack.c.bf16 %v3926, %v3926
      %v3959 = vpack.c.bf16 %v3927, %v3927
      %s3960 = scalar_lea.vmem %s3, 16
      %v3961 = vld [vmem:[%s3960] sm:$0xf]
      %v3962 = vld [vmem:[%s3960 + $0x4] sm:$0xf]
      %v3963 = vld [vmem:[%s3960 + $0x8] sm:$0xf]
      %v3964 = vld [vmem:[%s3960 + $0xc] sm:$0xf]
      %v3997 = vunpack.c.l.b16 %v3928
      %v3998 = vunpack.c.l.b16 %v3929
      %v3999 = vunpack.c.l.b16 %v3930
      %v4000 = vunpack.c.l.b16 %v3931
      %v4001 = vunpack.c.l.b16 %v3932
      %v4002 = vunpack.c.l.b16 %v3933
      %v4003 = vunpack.c.l.b16 %v3934
      %v4004 = vunpack.c.l.b16 %v3935
      %v4005 = vunpack.c.l.b16 %v3936
      %v4006 = vunpack.c.l.b16 %v3937
      %v4007 = vunpack.c.l.b16 %v3938
      %v4008 = vunpack.c.l.b16 %v3939
      %v4009 = vunpack.c.l.b16 %v3940
      %v4010 = vunpack.c.l.b16 %v3941
      %v4011 = vunpack.c.l.b16 %v3942
      %v4012 = vunpack.c.l.b16 %v3943
      %v4013 = vunpack.c.l.b16 %v3944
      %v4014 = vunpack.c.l.b16 %v3945
      %v4015 = vunpack.c.l.b16 %v3946
      %v4016 = vunpack.c.l.b16 %v3947
      %v4017 = vunpack.c.l.b16 %v3948
      %v4018 = vunpack.c.l.b16 %v3949
      %v4019 = vunpack.c.l.b16 %v3950
      %v4020 = vunpack.c.l.b16 %v3951
      %v4021 = vunpack.c.l.b16 %v3952
      %v4022 = vunpack.c.l.b16 %v3953
      %v4023 = vunpack.c.l.b16 %v3954
      %v4024 = vunpack.c.l.b16 %v3955
      %v4025 = vunpack.c.l.b16 %v3956
      %v4026 = vunpack.c.l.b16 %v3957
      %v4027 = vunpack.c.l.b16 %v3958
      %v4028 = vunpack.c.l.b16 %v3959
      %v4029 = vrot.slane %v3998, 7
      %vm4030 = vcmask 1041409
      %v4031 = vsel %vm4030, %v4029, %v3997
      %v4032 = vrot.slane %v3999, 6
      %vm4033 = vcmask 1042434
      %v4034 = vsel %vm4033, %v4032, %v4031
      %v4035 = vrot.slane %v4000, 5
      %vm4036 = vcmask 1043459
      %v4037 = vsel %vm4036, %v4035, %v4034
      %v4038 = vrot.slane %v4001, 4
      %vm4039 = vcmask 1044484
      %v4040 = vsel %vm4039, %v4038, %v4037
      %v4041 = vrot.slane %v4002, 3
      %vm4042 = vcmask 1045509
      %v4043 = vsel %vm4042, %v4041, %v4040
      %v4044 = vrot.slane %v4003, 2
      %vm4045 = vcmask 1046534
      %v4046 = vsel %vm4045, %v4044, %v4043
      %v4047 = vrot.slane %v4004, 1
      %vm4048 = vcmask 1047559
      %v4049 = vsel %vm4048, %v4047, %v4046
      %v4050 = vrot.slane %v4006, 7
      %v4051 = vsel %vm4030, %v4050, %v4005
      %v4052 = vrot.slane %v4007, 6
      %v4053 = vsel %vm4033, %v4052, %v4051
      %v4054 = vrot.slane %v4008, 5
      %v4055 = vsel %vm4036, %v4054, %v4053
      %v4056 = vrot.slane %v4009, 4
      %v4057 = vsel %vm4039, %v4056, %v4055
      %v4058 = vrot.slane %v4010, 3
      %v4059 = vsel %vm4042, %v4058, %v4057
      %v4060 = vrot.slane %v4011, 2
      %v4061 = vsel %vm4045, %v4060, %v4059
      %v4062 = vrot.slane %v4012, 1
      %v4063 = vsel %vm4048, %v4062, %v4061
      %v4064 = vrot.slane %v4014, 7
      %v4065 = vsel %vm4030, %v4064, %v4013
      %v4066 = vrot.slane %v4015, 6
      %v4067 = vsel %vm4033, %v4066, %v4065
      %v4068 = vrot.slane %v4016, 5
      %v4069 = vsel %vm4036, %v4068, %v4067
      %v4070 = vrot.slane %v4017, 4
      %v4071 = vsel %vm4039, %v4070, %v4069
      %v4072 = vrot.slane %v4018, 3
      %v4073 = vsel %vm4042, %v4072, %v4071
      %v4074 = vrot.slane %v4019, 2
      %v4075 = vsel %vm4045, %v4074, %v4073
      %v4076 = vrot.slane %v4020, 1
      %v4077 = vsel %vm4048, %v4076, %v4075
      %v4078 = vrot.slane %v4022, 7
      %v4079 = vsel %vm4030, %v4078, %v4021
      %v4080 = vrot.slane %v4023, 6
      %v4081 = vsel %vm4033, %v4080, %v4079
      %v4082 = vrot.slane %v4024, 5
      %v4083 = vsel %vm4036, %v4082, %v4081
      %v4084 = vrot.slane %v4025, 4
      %v4085 = vsel %vm4039, %v4084, %v4083
      %v4086 = vrot.slane %v4026, 3
      %v4087 = vsel %vm4042, %v4086, %v4085
      %v4088 = vrot.slane %v4027, 2
      %v4089 = vsel %vm4045, %v4088, %v4087
      %v4090 = vrot.slane %v4028, 1
      %v4091 = vsel %vm4048, %v4090, %v4089
      %v4092 = vpack.c.b16 %v4063, %v4049
      %v4093 = vpack.c.b16 %v4091, %v4077
      %v4098 = vunpack.c.l.b16 %v3961
      %v4099 = vunpack.c.l.b16 %v3962
      %v4100 = vunpack.c.l.b16 %v3963
      %v4101 = vunpack.c.l.b16 %v3964
      %v4102 = vpack.c.b16 %v4099, %v4098
      %v4103 = vpack.c.b16 %v4101, %v4100
      %v4107 = vsel %vm2942, %v4092, 0
      %v4110 = vsel %vm2942, %v4093, 0
      %4112 = vmatprep.subr.bf16.mxu0 0
      %4113 = vmatpush1.bf16.msra.mxu0 %v4102
      %4114 = vmatprep.subr.bf16.mxu0 0
      %4115 = vmatpush1.bf16.msra.mxu0 %v4103
      %4116 = vmatprep.subr.bf16.mxu0 0
      %4117 = vmatpush1.bf16.msra.mxu0 0
      %4118 = vmatprep.subr.bf16.mxu0 0
      %4119 = vmatpush1.bf16.msra.mxu0 0
      %4120 = vmatprep.subr.bf16.mxu0 0
      %4121 = vmatpush1.bf16.msra.mxu0 0
      %4122 = vmatprep.subr.bf16.mxu0 0
      %4123 = vmatpush1.bf16.msra.mxu0 0
      %4124 = vmatprep.subr.bf16.mxu0 0
      %4125 = vmatpush1.bf16.msra.mxu0 0
      %4126 = vmatprep.subr.bf16.mxu0 0
      %4127 = vmatpush1.bf16.msra.mxu0 0
      %4128 = vmatprep.subr.bf16.mxu0 0
      %4129 = vmatpush1.bf16.msra.mxu0 0
      %4130 = vmatprep.subr.bf16.mxu0 0
      %4131 = vmatpush1.bf16.msra.mxu0 0
      %4132 = vmatprep.subr.bf16.mxu0 0
      %4133 = vmatpush1.bf16.msra.mxu0 0
      %4134 = vmatprep.subr.bf16.mxu0 0
      %4135 = vmatpush1.bf16.msra.mxu0 0
      %4136 = vmatprep.subr.bf16.mxu0 0
      %4137 = vmatpush1.bf16.msra.mxu0 0
      %4138 = vmatprep.subr.bf16.mxu0 0
      %4139 = vmatpush1.bf16.msra.mxu0 0
      %4140 = vmatprep.subr.bf16.mxu0 0
      %4141 = vmatpush1.bf16.msra.mxu0 0
      %4142 = vmatprep.subr.bf16.mxu0 0
      %4143 = vmatpush1.bf16.msra.mxu0 0
      %4144 = vmatprep.mubr.bf16.mxu0 0
      %4145 = vmatmul.mubr.bf16.gmra.mrb[0].mxu0 %v4107
      %v4146 = vpop.f32.mrb[0].mxu0
      %v4147 = vadd.f32 0.0, %v4146
      %v4148 = vpop.f32.mrb[0].mxu0
      %v4149 = vpop.f32.mrb[0].mxu0
      %v4150 = vadd.f32 0.0, %v4149
      %v4151 = vpop.f32.mrb[0].mxu0
      %4152 = vmatprep.mubr.bf16.mxu0 0
      %4153 = vmatmul.mubr.bf16.gmra.mrb[0].mxu0 %v4110
      %v4154 = vpop.f32.mrb[0].mxu0
      %v4155 = vadd.f32 0.0, %v4154
      %v4156 = vpop.f32.mrb[0].mxu0
      %v4157 = vpop.f32.mrb[0].mxu0
      %v4158 = vadd.f32 0.0, %v4157
      %v4159 = vpop.f32.mrb[0].mxu0
      %4160 = vdwg.mxu0
      %v4193 = vunpack.c.l.b16 %v3365
      %v4194 = vunpack.c.l.b16 %v3366
      %v4195 = vunpack.c.l.b16 %v3367
      %v4196 = vunpack.c.l.b16 %v3368
      %v4197 = vunpack.c.l.b16 %v3369
      %v4198 = vunpack.c.l.b16 %v3370
      %v4199 = vunpack.c.l.b16 %v3371
      %v4200 = vunpack.c.l.b16 %v3372
      %v4201 = vunpack.c.l.b16 %v3373
      %v4202 = vunpack.c.l.b16 %v3374
      %v4203 = vunpack.c.l.b16 %v3375
      %v4204 = vunpack.c.l.b16 %v3376
      %v4205 = vunpack.c.l.b16 %v3377
      %v4206 = vunpack.c.l.b16 %v3378
      %v4207 = vunpack.c.l.b16 %v3379
      %v4208 = vunpack.c.l.b16 %v3380
      %v4209 = vunpack.c.l.b16 %v3381
      %v4210 = vunpack.c.l.b16 %v3382
      %v4211 = vunpack.c.l.b16 %v3383
      %v4212 = vunpack.c.l.b16 %v3384
      %v4213 = vunpack.c.l.b16 %v3385
      %v4214 = vunpack.c.l.b16 %v3386
      %v4215 = vunpack.c.l.b16 %v3387
      %v4216 = vunpack.c.l.b16 %v3388
      %v4217 = vunpack.c.l.b16 %v3389
      %v4218 = vunpack.c.l.b16 %v3390
      %v4219 = vunpack.c.l.b16 %v3391
      %v4220 = vunpack.c.l.b16 %v3392
      %v4221 = vunpack.c.l.b16 %v3393
      %v4222 = vunpack.c.l.b16 %v3394
      %v4223 = vunpack.c.l.b16 %v3395
      %v4224 = vunpack.c.l.b16 %v3396
      %v4225 = vrot.slane %v4194, 7
      %v4226 = vsel %vm4030, %v4225, %v4193
      %v4227 = vrot.slane %v4195, 6
      %v4228 = vsel %vm4033, %v4227, %v4226
      %v4229 = vrot.slane %v4196, 5
      %v4230 = vsel %vm4036, %v4229, %v4228
      %v4231 = vrot.slane %v4197, 4
      %v4232 = vsel %vm4039, %v4231, %v4230
      %v4233 = vrot.slane %v4198, 3
      %v4234 = vsel %vm4042, %v4233, %v4232
      %v4235 = vrot.slane %v4199, 2
      %v4236 = vsel %vm4045, %v4235, %v4234
      %v4237 = vrot.slane %v4200, 1
      %v4238 = vsel %vm4048, %v4237, %v4236
      %v4239 = vrot.slane %v4202, 7
      %v4240 = vsel %vm4030, %v4239, %v4201
      %v4241 = vrot.slane %v4203, 6
      %v4242 = vsel %vm4033, %v4241, %v4240
      %v4243 = vrot.slane %v4204, 5
      %v4244 = vsel %vm4036, %v4243, %v4242
      %v4245 = vrot.slane %v4205, 4
      %v4246 = vsel %vm4039, %v4245, %v4244
      %v4247 = vrot.slane %v4206, 3
      %v4248 = vsel %vm4042, %v4247, %v4246
      %v4249 = vrot.slane %v4207, 2
      %v4250 = vsel %vm4045, %v4249, %v4248
      %v4251 = vrot.slane %v4208, 1
      %v4252 = vsel %vm4048, %v4251, %v4250
      %v4253 = vrot.slane %v4210, 7
      %v4254 = vsel %vm4030, %v4253, %v4209
      %v4255 = vrot.slane %v4211, 6
      %v4256 = vsel %vm4033, %v4255, %v4254
      %v4257 = vrot.slane %v4212, 5
      %v4258 = vsel %vm4036, %v4257, %v4256
      %v4259 = vrot.slane %v4213, 4
      %v4260 = vsel %vm4039, %v4259, %v4258
      %v4261 = vrot.slane %v4214, 3
      %v4262 = vsel %vm4042, %v4261, %v4260
      %v4263 = vrot.slane %v4215, 2
      %v4264 = vsel %vm4045, %v4263, %v4262
      %v4265 = vrot.slane %v4216, 1
      %v4266 = vsel %vm4048, %v4265, %v4264
      %v4267 = vrot.slane %v4218, 7
      %v4268 = vsel %vm4030, %v4267, %v4217
      %v4269 = vrot.slane %v4219, 6
      %v4270 = vsel %vm4033, %v4269, %v4268
      %v4271 = vrot.slane %v4220, 5
      %v4272 = vsel %vm4036, %v4271, %v4270
      %v4273 = vrot.slane %v4221, 4
      %v4274 = vsel %vm4039, %v4273, %v4272
      %v4275 = vrot.slane %v4222, 3
      %v4276 = vsel %vm4042, %v4275, %v4274
      %v4277 = vrot.slane %v4223, 2
      %v4278 = vsel %vm4045, %v4277, %v4276
      %v4279 = vrot.slane %v4224, 1
      %v4280 = vsel %vm4048, %v4279, %v4278
      %v4281 = vpack.c.b16 %v4252, %v4238
      %v4282 = vpack.c.b16 %v4280, %v4266
      %v4287 = vunpack.c.l.b16 %v3397
      %v4288 = vunpack.c.l.b16 %v3398
      %v4289 = vunpack.c.l.b16 %v3399
      %v4290 = vunpack.c.l.b16 %v3400
      %v4291 = vpack.c.b16 %v4288, %v4287
      %v4292 = vpack.c.b16 %v4290, %v4289
      %v4296 = vsel %vm2942, %v4281, 0
      %v4299 = vsel %vm2942, %v4282, 0
      %4301 = vmatprep.subr.bf16.mxu0 0
      %4302 = vmatpush1.bf16.msra.mxu0 %v4291
      %4303 = vmatprep.subr.bf16.mxu0 0
      %4304 = vmatpush1.bf16.msra.mxu0 %v4292
      %4305 = vmatprep.subr.bf16.mxu0 0
      %4306 = vmatpush1.bf16.msra.mxu0 0
      %4307 = vmatprep.subr.bf16.mxu0 0
      %4308 = vmatpush1.bf16.msra.mxu0 0
      %4309 = vmatprep.subr.bf16.mxu0 0
      %4310 = vmatpush1.bf16.msra.mxu0 0
      %4311 = vmatprep.subr.bf16.mxu0 0
      %4312 = vmatpush1.bf16.msra.mxu0 0
      %4313 = vmatprep.subr.bf16.mxu0 0
      %4314 = vmatpush1.bf16.msra.mxu0 0
      %4315 = vmatprep.subr.bf16.mxu0 0
      %4316 = vmatpush1.bf16.msra.mxu0 0
      %4317 = vmatprep.subr.bf16.mxu0 0
      %4318 = vmatpush1.bf16.msra.mxu0 0
      %4319 = vmatprep.subr.bf16.mxu0 0
      %4320 = vmatpush1.bf16.msra.mxu0 0
      %4321 = vmatprep.subr.bf16.mxu0 0
      %4322 = vmatpush1.bf16.msra.mxu0 0
      %4323 = vmatprep.subr.bf16.mxu0 0
      %4324 = vmatpush1.bf16.msra.mxu0 0
      %4325 = vmatprep.subr.bf16.mxu0 0
      %4326 = vmatpush1.bf16.msra.mxu0 0
      %4327 = vmatprep.subr.bf16.mxu0 0
      %4328 = vmatpush1.bf16.msra.mxu0 0
      %4329 = vmatprep.subr.bf16.mxu0 0
      %4330 = vmatpush1.bf16.msra.mxu0 0
      %4331 = vmatprep.subr.bf16.mxu0 0
      %4332 = vmatpush1.bf16.msra.mxu0 0
      %4333 = vmatprep.mubr.bf16.mxu0 0
      %4334 = vmatmul.mubr.bf16.gmra.mrb[0].mxu0 %v4296
      %v4335 = vpop.f32.mrb[0].mxu0
      %v4336 = vadd.f32 %v4147, %v4335
      %v4337 = vpop.f32.mrb[0].mxu0
      %v4338 = vpop.f32.mrb[0].mxu0
      %v4339 = vadd.f32 %v4150, %v4338
      %v4340 = vpop.f32.mrb[0].mxu0
      %4341 = vmatprep.mubr.bf16.mxu0 0
      %4342 = vmatmul.mubr.bf16.gmra.mrb[0].mxu0 %v4299
      %v4343 = vpop.f32.mrb[0].mxu0
      %v4344 = vadd.f32 %v4155, %v4343
      %v4345 = vpop.f32.mrb[0].mxu0
      %v4346 = vpop.f32.mrb[0].mxu0
      %v4347 = vadd.f32 %v4158, %v4346
      %v4348 = vpop.f32.mrb[0].mxu0
      %4349 = vdwg.mxu0
      %vm4350 = vcmp.ge.s32.totalorder %v2827, 5
      %vm4351 = vcmp.ge.s32.totalorder %v2828, 5
      %vm4352 = vcmp.ge.s32.totalorder %v2829, 5
      %vm4353 = vcmp.lt.s32.totalorder %v2827, 10
      %vm4354 = vcmp.lt.s32.totalorder %v2828, 10
      %vm4355 = vcmp.lt.s32.totalorder %v2829, 10
      %vm4356 = vmand %vm4350, %vm4353
      %vm4357 = vmand %vm4351, %vm4354
      %vm4358 = vmand %vm4352, %vm4355
      %v4359 = vsel %vm4356, 1, 0
      %v4360 = vsel %vm4357, 1, 0
      %v4361 = vsel %vm4358, 1, 0
      %vm4362 = vcmp.eq.s32.totalorder %v4359, 1
      %vm4363 = vcmp.eq.s32.totalorder %v4360, 1
      %vm4364 = vcmp.eq.s32.totalorder %v4361, 1
      %v4365 = vsel %vm4362, %v2731, -1e+30
      %v4366 = vsel %vm4363, %v2732, -1e+30
      %v4367 = vsel %vm4364, %v2733, -1e+30
      %v4368 = vsel %vm4362, %v2734, -1e+30
      %v4369 = vsel %vm4363, %v2735, -1e+30
      %v4370 = vsel %vm4364, %v2736, -1e+30
      %v4371 = vsel %vm4362, %v2737, -1e+30
      %v4372 = vsel %vm4363, %v2738, -1e+30
      %v4373 = vsel %vm4364, %v2739, -1e+30
      %v4374 = vsel %vm4362, %v2740, -1e+30
      %v4375 = vsel %vm4363, %v2741, -1e+30
      %v4376 = vsel %vm4364, %v2742, -1e+30
      %v4377 = vsel %vm4362, %v2743, -1e+30
      %v4378 = vsel %vm4363, %v2744, -1e+30
      %v4379 = vsel %vm4364, %v2745, -1e+30
      %v4380 = vsel %vm4362, %v2746, -1e+30
      %v4381 = vsel %vm4363, %v2747, -1e+30
      %v4382 = vsel %vm4364, %v2748, -1e+30
      %v4383 = vsel %vm4362, %v2749, -1e+30
      %v4384 = vsel %vm4363, %v2750, -1e+30
      %v4385 = vsel %vm4364, %v2751, -1e+30
      %v4386 = vsel %vm4362, %v2752, -1e+30
      %v4387 = vsel %vm4363, %v2753, -1e+30
      %v4388 = vsel %vm4364, %v2754, -1e+30
      %v4389 = vsel %vm4362, %v2755, -1e+30
      %v4390 = vsel %vm4363, %v2756, -1e+30
      %v4391 = vsel %vm4364, %v2757, -1e+30
      %v4392 = vsel %vm4362, %v2758, -1e+30
      %v4393 = vsel %vm4363, %v2759, -1e+30
      %v4394 = vsel %vm4364, %v2760, -1e+30
      %v4395 = vsel %vm4362, %v2761, -1e+30
      %v4396 = vsel %vm4363, %v2762, -1e+30
      %v4397 = vsel %vm4364, %v2763, -1e+30
      %v4398 = vsel %vm4362, %v2764, -1e+30
      %v4399 = vsel %vm4363, %v2765, -1e+30
      %v4400 = vsel %vm4364, %v2766, -1e+30
      %v4401 = vsel %vm4362, %v2767, -1e+30
      %v4402 = vsel %vm4363, %v2768, -1e+30
      %v4403 = vsel %vm4364, %v2769, -1e+30
      %v4404 = vsel %vm4362, %v2770, -1e+30
      %v4405 = vsel %vm4363, %v2771, -1e+30
      %v4406 = vsel %vm4364, %v2772, -1e+30
      %v4407 = vsel %vm4362, %v2773, -1e+30
      %v4408 = vsel %vm4363, %v2774, -1e+30
      %v4409 = vsel %vm4364, %v2775, -1e+30
      %v4410 = vsel %vm4362, %v2776, -1e+30
      %v4411 = vsel %vm4363, %v2777, -1e+30
      %v4412 = vsel %vm4364, %v2778, -1e+30
      %v4413 = vsel %vm4362, %v2779, -1e+30
      %v4414 = vsel %vm4363, %v2780, -1e+30
      %v4415 = vsel %vm4364, %v2781, -1e+30
      %v4416 = vsel %vm4362, %v2782, -1e+30
      %v4417 = vsel %vm4363, %v2783, -1e+30
      %v4418 = vsel %vm4364, %v2784, -1e+30
      %v4419 = vsel %vm4362, %v2785, -1e+30
      %v4420 = vsel %vm4363, %v2786, -1e+30
      %v4421 = vsel %vm4364, %v2787, -1e+30
      %v4422 = vsel %vm4362, %v2788, -1e+30
      %v4423 = vsel %vm4363, %v2789, -1e+30
      %v4424 = vsel %vm4364, %v2790, -1e+30
      %v4425 = vsel %vm4362, %v2791, -1e+30
      %v4426 = vsel %vm4363, %v2792, -1e+30
      %v4427 = vsel %vm4364, %v2793, -1e+30
      %v4428 = vsel %vm4362, %v2794, -1e+30
      %v4429 = vsel %vm4363, %v2795, -1e+30
      %v4430 = vsel %vm4364, %v2796, -1e+30
      %v4431 = vsel %vm4362, %v2797, -1e+30
      %v4432 = vsel %vm4363, %v2798, -1e+30
      %v4433 = vsel %vm4364, %v2799, -1e+30
      %v4434 = vsel %vm4362, %v2800, -1e+30
      %v4435 = vsel %vm4363, %v2801, -1e+30
      %v4436 = vsel %vm4364, %v2802, -1e+30
      %v4437 = vsel %vm4362, %v2803, -1e+30
      %v4438 = vsel %vm4363, %v2804, -1e+30
      %v4439 = vsel %vm4364, %v2805, -1e+30
      %v4440 = vsel %vm4362, %v2806, -1e+30
      %v4441 = vsel %vm4363, %v2807, -1e+30
      %v4442 = vsel %vm4364, %v2808, -1e+30
      %v4443 = vsel %vm4362, %v2809, -1e+30
      %v4444 = vsel %vm4363, %v2810, -1e+30
      %v4445 = vsel %vm4364, %v2811, -1e+30
      %v4446 = vsel %vm4362, %v2812, -1e+30
      %v4447 = vsel %vm4363, %v2813, -1e+30
      %v4448 = vsel %vm4364, %v2814, -1e+30
      %v4449 = vsel %vm4362, %v2815, -1e+30
      %v4450 = vsel %vm4363, %v2816, -1e+30
      %v4451 = vsel %vm4364, %v2817, -1e+30
      %v4452 = vsel %vm4362, %v2818, -1e+30
      %v4453 = vsel %vm4363, %v2819, -1e+30
      %v4454 = vsel %vm4364, %v2820, -1e+30
      %v4455 = vsel %vm4362, %v2821, -1e+30
      %v4456 = vsel %vm4363, %v2822, -1e+30
      %v4457 = vsel %vm4364, %v2823, -1e+30
      %v4458 = vsel %vm4362, %v2824, -1e+30
      %v4459 = vsel %vm4363, %v2825, -1e+30
      %v4460 = vsel %vm4364, 0.0, -1e+30
      %v4461 = vsel %vm2942, %v4365, -inf
      %v4462 = vsel %vm2942, %v4366, -inf
      %v4463 = vmax.f32 %v4461, %v4462
      %v4464 = vsel %vm2942, %v4367, -inf
      %v4465 = vmax.f32 %v4463, %v4464
      %v4466 = vrot.slane %v4465, 4
      %v4467 = vmax.f32 %v4465, %v4466
      %v4468 = vrot.slane %v4467, 2
      %v4469 = vmax.f32 %v4467, %v4468
      %v4470 = vrot.slane %v4469, 1
      %v4471 = vmax.f32 %v4469, %v4470
      %v4472 = vsel %vm2942, %v4368, -inf
      %v4473 = vsel %vm2942, %v4369, -inf
      %v4474 = vmax.f32 %v4472, %v4473
      %v4475 = vsel %vm2942, %v4370, -inf
      %v4476 = vmax.f32 %v4474, %v4475
      %v4477 = vrot.slane %v4476, 4
      %v4478 = vmax.f32 %v4476, %v4477
      %v4479 = vrot.slane %v4478, 2
      %v4480 = vmax.f32 %v4478, %v4479
      %v4481 = vrot.slane %v4480, 1
      %v4482 = vmax.f32 %v4480, %v4481
      %v4483 = vsel %vm2942, %v4371, -inf
      %v4484 = vsel %vm2942, %v4372, -inf
      %v4485 = vmax.f32 %v4483, %v4484
      %v4486 = vsel %vm2942, %v4373, -inf
      %v4487 = vmax.f32 %v4485, %v4486
      %v4488 = vrot.slane %v4487, 4
      %v4489 = vmax.f32 %v4487, %v4488
      %v4490 = vrot.slane %v4489, 2
      %v4491 = vmax.f32 %v4489, %v4490
      %v4492 = vrot.slane %v4491, 1
      %v4493 = vmax.f32 %v4491, %v4492
      %v4494 = vsel %vm2942, %v4374, -inf
      %v4495 = vsel %vm2942, %v4375, -inf
      %v4496 = vmax.f32 %v4494, %v4495
      %v4497 = vsel %vm2942, %v4376, -inf
      %v4498 = vmax.f32 %v4496, %v4497
      %v4499 = vrot.slane %v4498, 4
      %v4500 = vmax.f32 %v4498, %v4499
      %v4501 = vrot.slane %v4500, 2
      %v4502 = vmax.f32 %v4500, %v4501
      %v4503 = vrot.slane %v4502, 1
      %v4504 = vmax.f32 %v4502, %v4503
      %v4505 = vsel %vm2942, %v4377, -inf
      %v4506 = vsel %vm2942, %v4378, -inf
      %v4507 = vmax.f32 %v4505, %v4506
      %v4508 = vsel %vm2942, %v4379, -inf
      %v4509 = vmax.f32 %v4507, %v4508
      %v4510 = vrot.slane %v4509, 4
      %v4511 = vmax.f32 %v4509, %v4510
      %v4512 = vrot.slane %v4511, 2
      %v4513 = vmax.f32 %v4511, %v4512
      %v4514 = vrot.slane %v4513, 1
      %v4515 = vmax.f32 %v4513, %v4514
      %v4516 = vsel %vm2942, %v4380, -inf
      %v4517 = vsel %vm2942, %v4381, -inf
      %v4518 = vmax.f32 %v4516, %v4517
      %v4519 = vsel %vm2942, %v4382, -inf
      %v4520 = vmax.f32 %v4518, %v4519
      %v4521 = vrot.slane %v4520, 4
      %v4522 = vmax.f32 %v4520, %v4521
      %v4523 = vrot.slane %v4522, 2
      %v4524 = vmax.f32 %v4522, %v4523
      %v4525 = vrot.slane %v4524, 1
      %v4526 = vmax.f32 %v4524, %v4525
      %v4527 = vsel %vm2942, %v4383, -inf
      %v4528 = vsel %vm2942, %v4384, -inf
      %v4529 = vmax.f32 %v4527, %v4528
      %v4530 = vsel %vm2942, %v4385, -inf
      %v4531 = vmax.f32 %v4529, %v4530
      %v4532 = vrot.slane %v4531, 4
      %v4533 = vmax.f32 %v4531, %v4532
      %v4534 = vrot.slane %v4533, 2
      %v4535 = vmax.f32 %v4533, %v4534
      %v4536 = vrot.slane %v4535, 1
      %v4537 = vmax.f32 %v4535, %v4536
      %v4538 = vsel %vm2942, %v4386, -inf
      %v4539 = vsel %vm2942, %v4387, -inf
      %v4540 = vmax.f32 %v4538, %v4539
      %v4541 = vsel %vm2942, %v4388, -inf
      %v4542 = vmax.f32 %v4540, %v4541
      %v4543 = vrot.slane %v4542, 4
      %v4544 = vmax.f32 %v4542, %v4543
      %v4545 = vrot.slane %v4544, 2
      %v4546 = vmax.f32 %v4544, %v4545
      %v4547 = vrot.slane %v4546, 1
      %v4548 = vmax.f32 %v4546, %v4547
      %v4549 = vsel %vm2942, %v4389, -inf
      %v4550 = vsel %vm2942, %v4390, -inf
      %v4551 = vmax.f32 %v4549, %v4550
      %v4552 = vsel %vm2942, %v4391, -inf
      %v4553 = vmax.f32 %v4551, %v4552
      %v4554 = vrot.slane %v4553, 4
      %v4555 = vmax.f32 %v4553, %v4554
      %v4556 = vrot.slane %v4555, 2
      %v4557 = vmax.f32 %v4555, %v4556
      %v4558 = vrot.slane %v4557, 1
      %v4559 = vmax.f32 %v4557, %v4558
      %v4560 = vsel %vm2942, %v4392, -inf
      %v4561 = vsel %vm2942, %v4393, -inf
      %v4562 = vmax.f32 %v4560, %v4561
      %v4563 = vsel %vm2942, %v4394, -inf
      %v4564 = vmax.f32 %v4562, %v4563
      %v4565 = vrot.slane %v4564, 4
      %v4566 = vmax.f32 %v4564, %v4565
      %v4567 = vrot.slane %v4566, 2
      %v4568 = vmax.f32 %v4566, %v4567
      %v4569 = vrot.slane %v4568, 1
      %v4570 = vmax.f32 %v4568, %v4569
      %v4571 = vsel %vm2942, %v4395, -inf
      %v4572 = vsel %vm2942, %v4396, -inf
      %v4573 = vmax.f32 %v4571, %v4572
      %v4574 = vsel %vm2942, %v4397, -inf
      %v4575 = vmax.f32 %v4573, %v4574
      %v4576 = vrot.slane %v4575, 4
      %v4577 = vmax.f32 %v4575, %v4576
      %v4578 = vrot.slane %v4577, 2
      %v4579 = vmax.f32 %v4577, %v4578
      %v4580 = vrot.slane %v4579, 1
      %v4581 = vmax.f32 %v4579, %v4580
      %v4582 = vsel %vm2942, %v4398, -inf
      %v4583 = vsel %vm2942, %v4399, -inf
      %v4584 = vmax.f32 %v4582, %v4583
      %v4585 = vsel %vm2942, %v4400, -inf
      %v4586 = vmax.f32 %v4584, %v4585
      %v4587 = vrot.slane %v4586, 4
      %v4588 = vmax.f32 %v4586, %v4587
      %v4589 = vrot.slane %v4588, 2
      %v4590 = vmax.f32 %v4588, %v4589
      %v4591 = vrot.slane %v4590, 1
      %v4592 = vmax.f32 %v4590, %v4591
      %v4593 = vsel %vm2942, %v4401, -inf
      %v4594 = vsel %vm2942, %v4402, -inf
      %v4595 = vmax.f32 %v4593, %v4594
      %v4596 = vsel %vm2942, %v4403, -inf
      %v4597 = vmax.f32 %v4595, %v4596
      %v4598 = vrot.slane %v4597, 4
      %v4599 = vmax.f32 %v4597, %v4598
      %v4600 = vrot.slane %v4599, 2
      %v4601 = vmax.f32 %v4599, %v4600
      %v4602 = vrot.slane %v4601, 1
      %v4603 = vmax.f32 %v4601, %v4602
      %v4604 = vsel %vm2942, %v4404, -inf
      %v4605 = vsel %vm2942, %v4405, -inf
      %v4606 = vmax.f32 %v4604, %v4605
      %v4607 = vsel %vm2942, %v4406, -inf
      %v4608 = vmax.f32 %v4606, %v4607
      %v4609 = vrot.slane %v4608, 4
      %v4610 = vmax.f32 %v4608, %v4609
      %v4611 = vrot.slane %v4610, 2
      %v4612 = vmax.f32 %v4610, %v4611
      %v4613 = vrot.slane %v4612, 1
      %v4614 = vmax.f32 %v4612, %v4613
      %v4615 = vsel %vm2942, %v4407, -inf
      %v4616 = vsel %vm2942, %v4408, -inf
      %v4617 = vmax.f32 %v4615, %v4616
      %v4618 = vsel %vm2942, %v4409, -inf
      %v4619 = vmax.f32 %v4617, %v4618
      %v4620 = vrot.slane %v4619, 4
      %v4621 = vmax.f32 %v4619, %v4620
      %v4622 = vrot.slane %v4621, 2
      %v4623 = vmax.f32 %v4621, %v4622
      %v4624 = vrot.slane %v4623, 1
      %v4625 = vmax.f32 %v4623, %v4624
      %v4626 = vsel %vm2942, %v4410, -inf
      %v4627 = vsel %vm2942, %v4411, -inf
      %v4628 = vmax.f32 %v4626, %v4627
      %v4629 = vsel %vm2942, %v4412, -inf
      %v4630 = vmax.f32 %v4628, %v4629
      %v4631 = vrot.slane %v4630, 4
      %v4632 = vmax.f32 %v4630, %v4631
      %v4633 = vrot.slane %v4632, 2
      %v4634 = vmax.f32 %v4632, %v4633
      %v4635 = vrot.slane %v4634, 1
      %v4636 = vmax.f32 %v4634, %v4635
      %v4637 = vsel %vm2942, %v4413, -inf
      %v4638 = vsel %vm2942, %v4414, -inf
      %v4639 = vmax.f32 %v4637, %v4638
      %v4640 = vsel %vm2942, %v4415, -inf
      %v4641 = vmax.f32 %v4639, %v4640
      %v4642 = vrot.slane %v4641, 4
      %v4643 = vmax.f32 %v4641, %v4642
      %v4644 = vrot.slane %v4643, 2
      %v4645 = vmax.f32 %v4643, %v4644
      %v4646 = vrot.slane %v4645, 1
      %v4647 = vmax.f32 %v4645, %v4646
      %v4648 = vsel %vm2942, %v4416, -inf
      %v4649 = vsel %vm2942, %v4417, -inf
      %v4650 = vmax.f32 %v4648, %v4649
      %v4651 = vsel %vm2942, %v4418, -inf
      %v4652 = vmax.f32 %v4650, %v4651
      %v4653 = vrot.slane %v4652, 4
      %v4654 = vmax.f32 %v4652, %v4653
      %v4655 = vrot.slane %v4654, 2
      %v4656 = vmax.f32 %v4654, %v4655
      %v4657 = vrot.slane %v4656, 1
      %v4658 = vmax.f32 %v4656, %v4657
      %v4659 = vsel %vm2942, %v4419, -inf
      %v4660 = vsel %vm2942, %v4420, -inf
      %v4661 = vmax.f32 %v4659, %v4660
      %v4662 = vsel %vm2942, %v4421, -inf
      %v4663 = vmax.f32 %v4661, %v4662
      %v4664 = vrot.slane %v4663, 4
      %v4665 = vmax.f32 %v4663, %v4664
      %v4666 = vrot.slane %v4665, 2
      %v4667 = vmax.f32 %v4665, %v4666
      %v4668 = vrot.slane %v4667, 1
      %v4669 = vmax.f32 %v4667, %v4668
      %v4670 = vsel %vm2942, %v4422, -inf
      %v4671 = vsel %vm2942, %v4423, -inf
      %v4672 = vmax.f32 %v4670, %v4671
      %v4673 = vsel %vm2942, %v4424, -inf
      %v4674 = vmax.f32 %v4672, %v4673
      %v4675 = vrot.slane %v4674, 4
      %v4676 = vmax.f32 %v4674, %v4675
      %v4677 = vrot.slane %v4676, 2
      %v4678 = vmax.f32 %v4676, %v4677
      %v4679 = vrot.slane %v4678, 1
      %v4680 = vmax.f32 %v4678, %v4679
      %v4681 = vsel %vm2942, %v4425, -inf
      %v4682 = vsel %vm2942, %v4426, -inf
      %v4683 = vmax.f32 %v4681, %v4682
      %v4684 = vsel %vm2942, %v4427, -inf
      %v4685 = vmax.f32 %v4683, %v4684
      %v4686 = vrot.slane %v4685, 4
      %v4687 = vmax.f32 %v4685, %v4686
      %v4688 = vrot.slane %v4687, 2
      %v4689 = vmax.f32 %v4687, %v4688
      %v4690 = vrot.slane %v4689, 1
      %v4691 = vmax.f32 %v4689, %v4690
      %v4692 = vsel %vm2942, %v4428, -inf
      %v4693 = vsel %vm2942, %v4429, -inf
      %v4694 = vmax.f32 %v4692, %v4693
      %v4695 = vsel %vm2942, %v4430, -inf
      %v4696 = vmax.f32 %v4694, %v4695
      %v4697 = vrot.slane %v4696, 4
      %v4698 = vmax.f32 %v4696, %v4697
      %v4699 = vrot.slane %v4698, 2
      %v4700 = vmax.f32 %v4698, %v4699
      %v4701 = vrot.slane %v4700, 1
      %v4702 = vmax.f32 %v4700, %v4701
      %v4703 = vsel %vm2942, %v4431, -inf
      %v4704 = vsel %vm2942, %v4432, -inf
      %v4705 = vmax.f32 %v4703, %v4704
      %v4706 = vsel %vm2942, %v4433, -inf
      %v4707 = vmax.f32 %v4705, %v4706
      %v4708 = vrot.slane %v4707, 4
      %v4709 = vmax.f32 %v4707, %v4708
      %v4710 = vrot.slane %v4709, 2
      %v4711 = vmax.f32 %v4709, %v4710
      %v4712 = vrot.slane %v4711, 1
      %v4713 = vmax.f32 %v4711, %v4712
      %v4714 = vsel %vm2942, %v4434, -inf
      %v4715 = vsel %vm2942, %v4435, -inf
      %v4716 = vmax.f32 %v4714, %v4715
      %v4717 = vsel %vm2942, %v4436, -inf
      %v4718 = vmax.f32 %v4716, %v4717
      %v4719 = vrot.slane %v4718, 4
      %v4720 = vmax.f32 %v4718, %v4719
      %v4721 = vrot.slane %v4720, 2
      %v4722 = vmax.f32 %v4720, %v4721
      %v4723 = vrot.slane %v4722, 1
      %v4724 = vmax.f32 %v4722, %v4723
      %v4725 = vsel %vm2942, %v4437, -inf
      %v4726 = vsel %vm2942, %v4438, -inf
      %v4727 = vmax.f32 %v4725, %v4726
      %v4728 = vsel %vm2942, %v4439, -inf
      %v4729 = vmax.f32 %v4727, %v4728
      %v4730 = vrot.slane %v4729, 4
      %v4731 = vmax.f32 %v4729, %v4730
      %v4732 = vrot.slane %v4731, 2
      %v4733 = vmax.f32 %v4731, %v4732
      %v4734 = vrot.slane %v4733, 1
      %v4735 = vmax.f32 %v4733, %v4734
      %v4736 = vsel %vm2942, %v4440, -inf
      %v4737 = vsel %vm2942, %v4441, -inf
      %v4738 = vmax.f32 %v4736, %v4737
      %v4739 = vsel %vm2942, %v4442, -inf
      %v4740 = vmax.f32 %v4738, %v4739
      %v4741 = vrot.slane %v4740, 4
      %v4742 = vmax.f32 %v4740, %v4741
      %v4743 = vrot.slane %v4742, 2
      %v4744 = vmax.f32 %v4742, %v4743
      %v4745 = vrot.slane %v4744, 1
      %v4746 = vmax.f32 %v4744, %v4745
      %v4747 = vsel %vm2942, %v4443, -inf
      %v4748 = vsel %vm2942, %v4444, -inf
      %v4749 = vmax.f32 %v4747, %v4748
      %v4750 = vsel %vm2942, %v4445, -inf
      %v4751 = vmax.f32 %v4749, %v4750
      %v4752 = vrot.slane %v4751, 4
      %v4753 = vmax.f32 %v4751, %v4752
      %v4754 = vrot.slane %v4753, 2
      %v4755 = vmax.f32 %v4753, %v4754
      %v4756 = vrot.slane %v4755, 1
      %v4757 = vmax.f32 %v4755, %v4756
      %v4758 = vsel %vm2942, %v4446, -inf
      %v4759 = vsel %vm2942, %v4447, -inf
      %v4760 = vmax.f32 %v4758, %v4759
      %v4761 = vsel %vm2942, %v4448, -inf
      %v4762 = vmax.f32 %v4760, %v4761
      %v4763 = vrot.slane %v4762, 4
      %v4764 = vmax.f32 %v4762, %v4763
      %v4765 = vrot.slane %v4764, 2
      %v4766 = vmax.f32 %v4764, %v4765
      %v4767 = vrot.slane %v4766, 1
      %v4768 = vmax.f32 %v4766, %v4767
      %v4769 = vsel %vm2942, %v4449, -inf
      %v4770 = vsel %vm2942, %v4450, -inf
      %v4771 = vmax.f32 %v4769, %v4770
      %v4772 = vsel %vm2942, %v4451, -inf
      %v4773 = vmax.f32 %v4771, %v4772
      %v4774 = vrot.slane %v4773, 4
      %v4775 = vmax.f32 %v4773, %v4774
      %v4776 = vrot.slane %v4775, 2
      %v4777 = vmax.f32 %v4775, %v4776
      %v4778 = vrot.slane %v4777, 1
      %v4779 = vmax.f32 %v4777, %v4778
      %v4780 = vsel %vm2942, %v4452, -inf
      %v4781 = vsel %vm2942, %v4453, -inf
      %v4782 = vmax.f32 %v4780, %v4781
      %v4783 = vsel %vm2942, %v4454, -inf
      %v4784 = vmax.f32 %v4782, %v4783
      %v4785 = vrot.slane %v4784, 4
      %v4786 = vmax.f32 %v4784, %v4785
      %v4787 = vrot.slane %v4786, 2
      %v4788 = vmax.f32 %v4786, %v4787
      %v4789 = vrot.slane %v4788, 1
      %v4790 = vmax.f32 %v4788, %v4789
      %v4791 = vsel %vm2942, %v4455, -inf
      %v4792 = vsel %vm2942, %v4456, -inf
      %v4793 = vmax.f32 %v4791, %v4792
      %v4794 = vsel %vm2942, %v4457, -inf
      %v4795 = vmax.f32 %v4793, %v4794
      %v4796 = vrot.slane %v4795, 4
      %v4797 = vmax.f32 %v4795, %v4796
      %v4798 = vrot.slane %v4797, 2
      %v4799 = vmax.f32 %v4797, %v4798
      %v4800 = vrot.slane %v4799, 1
      %v4801 = vmax.f32 %v4799, %v4800
      %v4802 = vsel %vm2942, %v4458, -inf
      %v4803 = vsel %vm2942, %v4459, -inf
      %v4804 = vmax.f32 %v4802, %v4803
      %v4805 = vsel %vm2942, %v4460, -inf
      %v4806 = vmax.f32 %v4804, %v4805
      %v4807 = vrot.slane %v4806, 4
      %v4808 = vmax.f32 %v4806, %v4807
      %v4809 = vrot.slane %v4808, 2
      %v4810 = vmax.f32 %v4808, %v4809
      %v4811 = vrot.slane %v4810, 1
      %v4812 = vmax.f32 %v4810, %v4811
      %v4813 = vadd.f32 %v4471, %v3299
      %v4814 = vadd.f32 %v4482, %v3299
      %v4815 = vadd.f32 %v4493, %v3299
      %v4816 = vadd.f32 %v4504, %v3299
      %v4817 = vadd.f32 %v4515, %v3299
      %v4818 = vadd.f32 %v4526, %v3299
      %v4819 = vadd.f32 %v4537, %v3299
      %v4820 = vadd.f32 %v4548, %v3299
      %v4821 = vadd.f32 %v4559, %v3299
      %v4822 = vadd.f32 %v4570, %v3299
      %v4823 = vadd.f32 %v4581, %v3299
      %v4824 = vadd.f32 %v4592, %v3299
      %v4825 = vadd.f32 %v4603, %v3299
      %v4826 = vadd.f32 %v4614, %v3299
      %v4827 = vadd.f32 %v4625, %v3299
      %v4828 = vadd.f32 %v4636, %v3299
      %v4829 = vadd.f32 %v4647, %v3299
      %v4830 = vadd.f32 %v4658, %v3299
      %v4831 = vadd.f32 %v4669, %v3299
      %v4832 = vadd.f32 %v4680, %v3299
      %v4833 = vadd.f32 %v4691, %v3299
      %v4834 = vadd.f32 %v4702, %v3299
      %v4835 = vadd.f32 %v4713, %v3299
      %v4836 = vadd.f32 %v4724, %v3299
      %v4837 = vadd.f32 %v4735, %v3299
      %v4838 = vadd.f32 %v4746, %v3299
      %v4839 = vadd.f32 %v4757, %v3299
      %v4840 = vadd.f32 %v4768, %v3299
      %v4841 = vadd.f32 %v4779, %v3299
      %v4842 = vadd.f32 %v4790, %v3299
      %v4843 = vadd.f32 %v4801, %v3299
      %v4844 = vadd.f32 %v4812, %v3299
      %v4845 = vtanh.pop %v4813
      %v4846 = vtanh.pop %v4814
      %v4847 = vtanh.pop %v4815
      %v4848 = vtanh.pop %v4816
      %v4849 = vtanh.pop %v4817
      %v4850 = vtanh.pop %v4818
      %v4851 = vtanh.pop %v4819
      %v4852 = vtanh.pop %v4820
      %v4853 = vtanh.pop %v4821
      %v4854 = vtanh.pop %v4822
      %v4855 = vtanh.pop %v4823
      %v4856 = vtanh.pop %v4824
      %v4857 = vtanh.pop %v4825
      %v4858 = vtanh.pop %v4826
      %v4859 = vtanh.pop %v4827
      %v4860 = vtanh.pop %v4828
      %v4861 = vtanh.pop %v4829
      %v4862 = vtanh.pop %v4830
      %v4863 = vtanh.pop %v4831
      %v4864 = vtanh.pop %v4832
      %v4865 = vtanh.pop %v4833
      %v4866 = vtanh.pop %v4834
      %v4867 = vtanh.pop %v4835
      %v4868 = vtanh.pop %v4836
      %v4869 = vtanh.pop %v4837
      %v4870 = vtanh.pop %v4838
      %v4871 = vtanh.pop %v4839
      %v4872 = vtanh.pop %v4840
      %v4873 = vtanh.pop %v4841
      %v4874 = vtanh.pop %v4842
      %v4875 = vtanh.pop %v4843
      %v4876 = vtanh.pop %v4844
      %v4877 = vpack.c.bf16 %v4845, %v4845
      %v4878 = vpack.c.bf16 %v4846, %v4846
      %v4879 = vpack.c.bf16 %v4847, %v4847
      %v4880 = vpack.c.bf16 %v4848, %v4848
      %v4881 = vpack.c.bf16 %v4849, %v4849
      %v4882 = vpack.c.bf16 %v4850, %v4850
      %v4883 = vpack.c.bf16 %v4851, %v4851
      %v4884 = vpack.c.bf16 %v4852, %v4852
      %v4885 = vpack.c.bf16 %v4853, %v4853
      %v4886 = vpack.c.bf16 %v4854, %v4854
      %v4887 = vpack.c.bf16 %v4855, %v4855
      %v4888 = vpack.c.bf16 %v4856, %v4856
      %v4889 = vpack.c.bf16 %v4857, %v4857
      %v4890 = vpack.c.bf16 %v4858, %v4858
      %v4891 = vpack.c.bf16 %v4859, %v4859
      %v4892 = vpack.c.bf16 %v4860, %v4860
      %v4893 = vpack.c.bf16 %v4861, %v4861
      %v4894 = vpack.c.bf16 %v4862, %v4862
      %v4895 = vpack.c.bf16 %v4863, %v4863
      %v4896 = vpack.c.bf16 %v4864, %v4864
      %v4897 = vpack.c.bf16 %v4865, %v4865
      %v4898 = vpack.c.bf16 %v4866, %v4866
      %v4899 = vpack.c.bf16 %v4867, %v4867
      %v4900 = vpack.c.bf16 %v4868, %v4868
      %v4901 = vpack.c.bf16 %v4869, %v4869
      %v4902 = vpack.c.bf16 %v4870, %v4870
      %v4903 = vpack.c.bf16 %v4871, %v4871
      %v4904 = vpack.c.bf16 %v4872, %v4872
      %v4905 = vpack.c.bf16 %v4873, %v4873
      %v4906 = vpack.c.bf16 %v4874, %v4874
      %v4907 = vpack.c.bf16 %v4875, %v4875
      %v4908 = vpack.c.bf16 %v4876, %v4876
      %s4909 = scalar_lea.vmem %s3, 32
      %v4910 = vld [vmem:[%s4909] sm:$0xf]
      %v4911 = vld [vmem:[%s4909 + $0x4] sm:$0xf]
      %v4912 = vld [vmem:[%s4909 + $0x8] sm:$0xf]
      %v4913 = vld [vmem:[%s4909 + $0xc] sm:$0xf]
      %v4946 = vunpack.c.l.b16 %v4877
      %v4947 = vunpack.c.l.b16 %v4878
      %v4948 = vunpack.c.l.b16 %v4879
      %v4949 = vunpack.c.l.b16 %v4880
      %v4950 = vunpack.c.l.b16 %v4881
      %v4951 = vunpack.c.l.b16 %v4882
      %v4952 = vunpack.c.l.b16 %v4883
      %v4953 = vunpack.c.l.b16 %v4884
      %v4954 = vunpack.c.l.b16 %v4885
      %v4955 = vunpack.c.l.b16 %v4886
      %v4956 = vunpack.c.l.b16 %v4887
      %v4957 = vunpack.c.l.b16 %v4888
      %v4958 = vunpack.c.l.b16 %v4889
      %v4959 = vunpack.c.l.b16 %v4890
      %v4960 = vunpack.c.l.b16 %v4891
      %v4961 = vunpack.c.l.b16 %v4892
      %v4962 = vunpack.c.l.b16 %v4893
      %v4963 = vunpack.c.l.b16 %v4894
      %v4964 = vunpack.c.l.b16 %v4895
      %v4965 = vunpack.c.l.b16 %v4896
      %v4966 = vunpack.c.l.b16 %v4897
      %v4967 = vunpack.c.l.b16 %v4898
      %v4968 = vunpack.c.l.b16 %v4899
      %v4969 = vunpack.c.l.b16 %v4900
      %v4970 = vunpack.c.l.b16 %v4901
      %v4971 = vunpack.c.l.b16 %v4902
      %v4972 = vunpack.c.l.b16 %v4903
      %v4973 = vunpack.c.l.b16 %v4904
      %v4974 = vunpack.c.l.b16 %v4905
      %v4975 = vunpack.c.l.b16 %v4906
      %v4976 = vunpack.c.l.b16 %v4907
      %v4977 = vunpack.c.l.b16 %v4908
      %v4978 = vrot.slane %v4947, 7
      %v4979 = vsel %vm4030, %v4978, %v4946
      %v4980 = vrot.slane %v4948, 6
      %v4981 = vsel %vm4033, %v4980, %v4979
      %v4982 = vrot.slane %v4949, 5
      %v4983 = vsel %vm4036, %v4982, %v4981
      %v4984 = vrot.slane %v4950, 4
      %v4985 = vsel %vm4039, %v4984, %v4983
      %v4986 = vrot.slane %v4951, 3
      %v4987 = vsel %vm4042, %v4986, %v4985
      %v4988 = vrot.slane %v4952, 2
      %v4989 = vsel %vm4045, %v4988, %v4987
      %v4990 = vrot.slane %v4953, 1
      %v4991 = vsel %vm4048, %v4990, %v4989
      %v4992 = vrot.slane %v4955, 7
      %v4993 = vsel %vm4030, %v4992, %v4954
      %v4994 = vrot.slane %v4956, 6
      %v4995 = vsel %vm4033, %v4994, %v4993
      %v4996 = vrot.slane %v4957, 5
      %v4997 = vsel %vm4036, %v4996, %v4995
      %v4998 = vrot.slane %v4958, 4
      %v4999 = vsel %vm4039, %v4998, %v4997
      %v5000 = vrot.slane %v4959, 3
      %v5001 = vsel %vm4042, %v5000, %v4999
      %v5002 = vrot.slane %v4960, 2
      %v5003 = vsel %vm4045, %v5002, %v5001
      %v5004 = vrot.slane %v4961, 1
      %v5005 = vsel %vm4048, %v5004, %v5003
      %v5006 = vrot.slane %v4963, 7
      %v5007 = vsel %vm4030, %v5006, %v4962
      %v5008 = vrot.slane %v4964, 6
      %v5009 = vsel %vm4033, %v5008, %v5007
      %v5010 = vrot.slane %v4965, 5
      %v5011 = vsel %vm4036, %v5010, %v5009
      %v5012 = vrot.slane %v4966, 4
      %v5013 = vsel %vm4039, %v5012, %v5011
      %v5014 = vrot.slane %v4967, 3
      %v5015 = vsel %vm4042, %v5014, %v5013
      %v5016 = vrot.slane %v4968, 2
      %v5017 = vsel %vm4045, %v5016, %v5015
      %v5018 = vrot.slane %v4969, 1
      %v5019 = vsel %vm4048, %v5018, %v5017
      %v5020 = vrot.slane %v4971, 7
      %v5021 = vsel %vm4030, %v5020, %v4970
      %v5022 = vrot.slane %v4972, 6
      %v5023 = vsel %vm4033, %v5022, %v5021
      %v5024 = vrot.slane %v4973, 5
      %v5025 = vsel %vm4036, %v5024, %v5023
      %v5026 = vrot.slane %v4974, 4
      %v5027 = vsel %vm4039, %v5026, %v5025
      %v5028 = vrot.slane %v4975, 3
      %v5029 = vsel %vm4042, %v5028, %v5027
      %v5030 = vrot.slane %v4976, 2
      %v5031 = vsel %vm4045, %v5030, %v5029
      %v5032 = vrot.slane %v4977, 1
      %v5033 = vsel %vm4048, %v5032, %v5031
      %v5034 = vpack.c.b16 %v5005, %v4991
      %v5035 = vpack.c.b16 %v5033, %v5019
      %v5040 = vunpack.c.l.b16 %v4910
      %v5041 = vunpack.c.l.b16 %v4911
      %v5042 = vunpack.c.l.b16 %v4912
      %v5043 = vunpack.c.l.b16 %v4913
      %v5044 = vpack.c.b16 %v5041, %v5040
      %v5045 = vpack.c.b16 %v5043, %v5042
      %v5049 = vsel %vm2942, %v5034, 0
      %v5052 = vsel %vm2942, %v5035, 0
      %5054 = vmatprep.subr.bf16.mxu0 0
      %5055 = vmatpush1.bf16.msra.mxu0 %v5044
      %5056 = vmatprep.subr.bf16.mxu0 0
      %5057 = vmatpush1.bf16.msra.mxu0 %v5045
      %5058 = vmatprep.subr.bf16.mxu0 0
      %5059 = vmatpush1.bf16.msra.mxu0 0
      %5060 = vmatprep.subr.bf16.mxu0 0
      %5061 = vmatpush1.bf16.msra.mxu0 0
      %5062 = vmatprep.subr.bf16.mxu0 0
      %5063 = vmatpush1.bf16.msra.mxu0 0
      %5064 = vmatprep.subr.bf16.mxu0 0
      %5065 = vmatpush1.bf16.msra.mxu0 0
      %5066 = vmatprep.subr.bf16.mxu0 0
      %5067 = vmatpush1.bf16.msra.mxu0 0
      %5068 = vmatprep.subr.bf16.mxu0 0
      %5069 = vmatpush1.bf16.msra.mxu0 0
      %5070 = vmatprep.subr.bf16.mxu0 0
      %5071 = vmatpush1.bf16.msra.mxu0 0
      %5072 = vmatprep.subr.bf16.mxu0 0
      %5073 = vmatpush1.bf16.msra.mxu0 0
      %5074 = vmatprep.subr.bf16.mxu0 0
      %5075 = vmatpush1.bf16.msra.mxu0 0
      %5076 = vmatprep.subr.bf16.mxu0 0
      %5077 = vmatpush1.bf16.msra.mxu0 0
      %5078 = vmatprep.subr.bf16.mxu0 0
      %5079 = vmatpush1.bf16.msra.mxu0 0
      %5080 = vmatprep.subr.bf16.mxu0 0
      %5081 = vmatpush1.bf16.msra.mxu0 0
      %5082 = vmatprep.subr.bf16.mxu0 0
      %5083 = vmatpush1.bf16.msra.mxu0 0
      %5084 = vmatprep.subr.bf16.mxu0 0
      %5085 = vmatpush1.bf16.msra.mxu0 0
      %5086 = vmatprep.mubr.bf16.mxu0 0
      %5087 = vmatmul.mubr.bf16.gmra.mrb[0].mxu0 %v5049
      %v5088 = vpop.f32.mrb[0].mxu0
      %v5089 = vadd.f32 0.0, %v5088
      %v5090 = vpop.f32.mrb[0].mxu0
      %v5091 = vpop.f32.mrb[0].mxu0
      %v5092 = vadd.f32 0.0, %v5091
      %v5093 = vpop.f32.mrb[0].mxu0
      %5094 = vmatprep.mubr.bf16.mxu0 0
      %5095 = vmatmul.mubr.bf16.gmra.mrb[0].mxu0 %v5052
      %v5096 = vpop.f32.mrb[0].mxu0
      %v5097 = vadd.f32 0.0, %v5096
      %v5098 = vpop.f32.mrb[0].mxu0
      %v5099 = vpop.f32.mrb[0].mxu0
      %v5100 = vadd.f32 0.0, %v5099
      %v5101 = vpop.f32.mrb[0].mxu0
      %5102 = vdwg.mxu0
      %v5103 = vadd.f32 %v4336, %v5089
      %v5104 = vadd.f32 %v4339, %v5092
      %v5105 = vadd.f32 %v4344, %v5097
      %v5106 = vadd.f32 %v4347, %v5100
      %5107 = vst [vmem:[%s199] sm:$0xff] %v5103
      %5108 = vst [vmem:[%s199 + $0x8] sm:$0xff] %v5104
      %5109 = vst [vmem:[%s199 + $0x10] sm:$0xff] %v5105
      %5110 = vst [vmem:[%s199 + $0x18] sm:$0xff] %v5106
      %s5111 = smul.u32 4, %s15
      %p5112 = scmp.lt.s32.totalorder %s5111, 7
      %s5113 = scalar_select %p5112, %s5111, 7
      %s5114 = smul.addr %s5113, 8
      %s5115 = scalar_lea.vmem %s4, %s5114
      // Predicated region
      $region37: #{_lambda_.1} parent=35 // pred_check
        %p5116 = pneg %p122
      $region38: #{_lambda_.1} parent=35 // pred_check_branch
        %5118 = sbr.rel (%p5116) target = $region40
      $region39: #{_lambda_.1} parent=35 // pred_region
        %s5119 = smul.u32 4, %s15
      $region40: #{_lambda_.1} parent=35 // pred_fallthru
        _
    $region36: #{_lambda_.1} parent=5 // pred_fallthru
      _
    %p5120 = scmp.le.s32.totalorder 2, %s10
    // Predicated region
    $region41: #{_lambda_.1} parent=5 // pred_check
      %p5121 = pneg %p5120
    $region42: #{_lambda_.1} parent=5 // pred_check_branch
      %5123 = sbr.rel (%p5121) target = $region44
    $region43: #{_lambda_.1} parent=5 // pred_region
      %s5124 = ssub.s32 %s10, 2
      // Predicated region
      $region45: #{_lambda_.1} parent=43 // pred_check
        %p5125 = pneg %p128
      $region46: #{_lambda_.1} parent=43 // pred_check_branch
        %5127 = sbr.rel (%p5125) target = $region48
      $region47: #{_lambda_.1} parent=43 // pred_region
        %s5128 = smul.u32 4, %s16
        %p5129 = scmp.lt.s32.totalorder %s5128, 7
        %s5130 = scalar_select %p5129, %s5128, 7
        %s5131 = smul.addr %s5130, 8
        %s5132 = scalar_lea.vmem %s4, %s5131
      $region48: #{_lambda_.1} parent=43 // pred_fallthru
        _
    $region44: #{_lambda_.1} parent=5 // pred_fallthru
      _
  $region6: #{_lambda_.1} parent=0 // loop_footer
    %s14 = sadd.s32 1, %s10
  $region7: #{_lambda_.1} parent=0 // loop_footer_branch
    %9 = sbr.rel target = $region3
  $region8: #{_lambda_.1} parent=0 // loop_exit
    _

</llo_original>
